<compile_context>
chip_gen: v5e
topology: v5e:2x2
jax: 0.10.0
libtpu: 0.0.40
codegen_flags: <defaults>
</compile_context>

<pallas_src>
import functools

import jax
import jax.numpy as jnp
from jax import lax
from jax.experimental import pallas as pl
from jax.experimental.pallas import tpu as pltpu


def _round_up(x, m):
    return (x + m - 1) // m * m


# ------------------------------ fused kernel ---------------------------------
def _pgrnn_kernel(*refs, depth, HP, T, prec_lo_col, prec_hi_col, down, up):
    """Fused depth-layer GRU + all heads for one batch block.

    refs layout:
      [0]               x_ref (T*BN, D)      flat time-major input block
      [1 .. 4*depth]    per-layer GRU params, 4 each:
                          w_ih_cat (D_l, 3*HP)  w_hh_cat (HP, 3*HP)
                          bi_cat   (1, 3*HP)    b_hn (1, HP)
                        (gate columns at 128-aligned offsets r|z|n, biases folded:
                         r/z blocks of bi_cat = b_ih+b_hh, n block = b_in only)
      next 4            W1cat (HP,TOTP) b1cat (1,TOTP) W2bd (TOTP,TOTP) b2cat (1,TOTP)
      outputs           y_ref (T*BN, TOTP)   h_ref (depth, BN, HP)
      scratch (VMEM)    gi_sc (T*BN, 3*HP)   feat ping-pong buffers (T*BN, HP)
    """
    n_in = 1 + 4 * depth + 4
    x_ref = refs[0]
    gru_refs = [refs[1 + 4 * l: 5 + 4 * l] for l in range(depth)]
    w1c_ref, b1c_ref, w2bd_ref, b2c_ref = refs[n_in - 4: n_in]
    y_ref, h_ref = refs[n_in], refs[n_in + 1]
    gi_sc = refs[n_in + 2]
    feat_refs = list(refs[n_in + 3:])
    if len(feat_refs) == 1:              # depth == 1: no ping-pong needed
        feat_refs = feat_refs * 2

    TBN = x_ref.shape[0]
    BN = TBN // T

    def run_layer(l, xin_ref, fout_ref):
        w_ih, w_hh, bi, b_hn = (r[...] for r in gru_refs[l])

        # Hoisted input projection: ONE big matmul over all timesteps & all 3 gates,
        # one fused bias add, one gi scratch.
        gi_sc[...] = (jnp.dot(xin_ref[...], w_ih,
                              preferred_element_type=jnp.float32) + bi)

        b_hn_b = jnp.broadcast_to(b_hn, (BN, HP))      # hoisted (1,HP)->(BN,HP)
        h0 = jnp.zeros((BN, HP), jnp.float32)          # h0 == 0 (inH=None semantics)

        def step(h, rows):
            gi = gi_sc[rows, :]                                        # (BN, 3*HP)
            # ONE hidden matmul per serial step (all 3 gates fused).
            gh = jnp.dot(h, w_hh, preferred_element_type=jnp.float32)  # (BN, 3*HP)
            r = jax.nn.sigmoid(gi[:, 0:HP] + gh[:, 0:HP])
            z = jax.nn.sigmoid(gi[:, HP:2 * HP] + gh[:, HP:2 * HP])
            n = jnp.tanh(gi[:, 2 * HP:3 * HP] + r * (gh[:, 2 * HP:3 * HP] + b_hn_b))
            h = (1.0 - z) * n + z * h
            fout_ref[rows, :] = h
            return h

        if T <= 32:
            h = h0
            for t in range(T):                         # short T: full unroll
                h = step(h, pl.ds(t * BN, BN))
        else:
            def body(t, h):
                row0 = pl.multiple_of(t * BN, 8)       # BN is a multiple of 8
                return step(h, pl.ds(row0, BN))
            h = lax.fori_loop(0, T, body, h0, unroll=8)
        h_ref[l] = h

    run_layer(0, x_ref, feat_refs[0])
    for l in range(1, depth):
        run_layer(l, feat_refs[(l - 1) % 2], feat_refs[l % 2])

    # ---- fused heads: one wide first-layer matmul + one block-diagonal 2nd layer ----
    feat = feat_refs[(depth - 1) % 2][...]                             # (T*BN, HP)
    h1 = jnp.maximum(
        jnp.dot(feat, w1c_ref[...], preferred_element_type=jnp.float32) + b1c_ref[...],
        0.0)
    out = jnp.dot(h1, w2bd_ref[...], preferred_element_type=jnp.float32) + b2c_ref[...]
    # clamp only the prec columns of [weights | bias | prec | zero-pad]
    col = lax.broadcasted_iota(jnp.int32, out.shape, 1)
    out = jnp.where((col >= prec_lo_col) & (col < prec_hi_col),
                    jnp.clip(out, down, up), out)
    y_ref[...] = out                                   # single lane-dense store


def _resident_spec(shape):
    """Whole-array VMEM-resident block (index never changes -> DMA'd once)."""
    zeros = (0,) * len(shape)
    return pl.BlockSpec(shape, lambda i, _z=zeros: _z)


# ------------------------------ forward (glue) --------------------------------
def pgrnn_forward(X, params, head_sizes, node_num, prec_thresh):
    """Returns ((weights, bias, prec), H) matching PGRNN.forward(with_hidden=True)."""
    N, T, D = X.shape
    H = params["gru"][0]["w_hh"].shape[0]
    depth = len(params["gru"])
    total_w = sum(head_sizes)
    TOT = total_w + 2 * node_num

    HP = _round_up(H, 128)                 # lane-pad hidden width
    TOTP = _round_up(TOT, 128)             # lane-pad head output width

    # --- per-layer GRU params: gate-concatenated, lane-padded, biases folded ---
    gru_args = []
    for li, p in enumerate(params["gru"]):
        w_ih, w_hh, b_ih, b_hh = p["w_ih"], p["w_hh"], p["b_ih"], p["b_hh"]
        d_in_orig = w_ih.shape[0]
        d_in_pad = d_in_orig if li == 0 else HP        # layer>=1 consumes HP-wide feat
        W_ih_cat = jnp.zeros((d_in_pad, 3 * HP), jnp.float32)
        W_hh_cat = jnp.zeros((HP, 3 * HP), jnp.float32)
        for g in range(3):
            W_ih_cat = W_ih_cat.at[:d_in_orig, g * HP:g * HP + H].set(
                w_ih[:, g * H:(g + 1) * H])
            W_hh_cat = W_hh_cat.at[:H, g * HP:g * HP + H].set(
                w_hh[:, g * H:(g + 1) * H])
        bi_cat = jnp.zeros((1, 3 * HP), jnp.float32)
        bi_cat = bi_cat.at[:, 0 * HP:0 * HP + H].set(b_ih[:, 0:H] + b_hh[:, 0:H])
        bi_cat = bi_cat.at[:, 1 * HP:1 * HP + H].set(
            b_ih[:, H:2 * H] + b_hh[:, H:2 * H])
        bi_cat = bi_cat.at[:, 2 * HP:2 * HP + H].set(b_ih[:, 2 * H:3 * H])
        b_hn_pad = jnp.zeros((1, HP), jnp.float32).at[:, :H].set(b_hh[:, 2 * H:3 * H])
        gru_args += [W_ih_cat, W_hh_cat, bi_cat, b_hn_pad]

    # --- fused head params: output columns are [weight heads... | bias | prec | pad] ---
    blocks = list(params["weight_heads"]) + [params["bias_head"], params["prec_head"]]
    W1c = jnp.zeros((HP, TOTP), jnp.float32).at[:H, :TOT].set(
        jnp.concatenate([b[0] for b in blocks], axis=1))
    b1c = jnp.zeros((1, TOTP), jnp.float32).at[:, :TOT].set(
        jnp.concatenate([b[1] for b in blocks], axis=1))
    b2c = jnp.zeros((1, TOTP), jnp.float32).at[:, :TOT].set(
        jnp.concatenate([b[3] for b in blocks], axis=1))
    W2bd = jnp.zeros((TOTP, TOTP), jnp.float32)        # block-diagonal second layer
    off = 0
    for b in blocks:
        k = b[2].shape[0]
        W2bd = W2bd.at[off:off + k, off:off + k].set(b[2])
        off += k
    head_args = [W1c, b1c, W2bd, b2c]

    # --- batch padding + flat time-major blocks (all lane-dense) ---
    N_pad0 = _round_up(N, 8)
    BN = N_pad0 if N_pad0 <= 256 else 256              # TODO(synk): 2 blocks on v7x
    N_pad = _round_up(N_pad0, BN)
    G = N_pad // BN
    Xp = jnp.zeros((N_pad, T, D), jnp.float32).at[:N].set(X.astype(jnp.float32))
    x_blk = Xp.reshape(G, BN, T, D).transpose(0, 2, 1, 3).reshape(G, T * BN, D)

    # rough cost hints for the XLA scheduler
    flops, d_in = 0, D
    for _ in range(depth):
        flops += 2 * N_pad * T * d_in * 3 * HP + 2 * N_pad * T * HP * 3 * HP
        d_in = HP
    flops += 2 * N_pad * T * (HP * TOTP + TOTP * TOTP)
    trans = depth * N_pad * T * 3 * HP
    bytes_accessed = 4 * (int(x_blk.size) + G * T * BN * TOTP + G * depth * BN * HP
                          + sum(int(a.size) for a in gru_args + head_args))

    kernel = functools.partial(
        _pgrnn_kernel, depth=depth, HP=HP, T=T,
        prec_lo_col=total_w + node_num, prec_hi_col=TOT,
        down=float(prec_thresh[0]), up=float(prec_thresh[1]))

    y_flat, h_blk = pl.pallas_call(
        kernel,
        grid=(G,),
        out_shape=(jax.ShapeDtypeStruct((G, T * BN, TOTP), jnp.float32),
                   jax.ShapeDtypeStruct((G, depth, BN, HP), jnp.float32)),
        in_specs=[pl.BlockSpec((None, T * BN, D), lambda i: (i, 0, 0))]
                 + [_resident_spec(a.shape) for a in gru_args + head_args],
        out_specs=(pl.BlockSpec((None, T * BN, TOTP), lambda i: (i, 0, 0)),
                   pl.BlockSpec((None, depth, BN, HP), lambda i: (i, 0, 0, 0))),
        scratch_shapes=[pltpu.VMEM((T * BN, 3 * HP), jnp.float32)]
                       + [pltpu.VMEM((T * BN, HP), jnp.float32)
                          for _ in range(min(depth, 2))],
        compiler_params=pltpu.CompilerParams(dimension_semantics=("parallel",)),
        cost_estimate=pl.CostEstimate(flops=int(flops), transcendentals=int(trans),
                                      bytes_accessed=int(bytes_accessed)),
    )(x_blk, *gru_args, *head_args)

    # wrapper-side layout plumbing + padding removal (cheap XLA ops)
    y = (y_flat.reshape(G, T, BN, TOTP).transpose(0, 2, 1, 3)
         .reshape(N_pad, T, TOTP))[:N, :, :TOT]
    weights = y[..., :total_w]
    bias = y[..., total_w:total_w + node_num]
    prec = y[..., total_w + node_num:]
    Hstack = (h_blk.transpose(1, 0, 2, 3).reshape(depth, N_pad, HP))[:, :N, :H]
    return (weights, bias, prec), Hstack


# ----------------------------- parameter init ---------------------------------
def init_params(key, input_size, latent, depth, node_num, head_sizes):
    keys = iter(jax.random.split(key, 64))

    def lin(nin, nout):
        k1, k2 = jax.random.split(next(keys))
        s = 1.0 / float(nin) ** 0.5
        W = jax.random.uniform(k1, (nin, nout), jnp.float32, -s, s)
        b = jax.random.uniform(k2, (1, nout), jnp.float32, -s, s)
        return W, b

    gru = []
    d_in = input_size
    for _ in range(depth):
        s = 1.0 / float(latent) ** 0.5
        k1, k2, k3, k4 = (next(keys) for _ in range(4))
        gru.append(dict(
            w_ih=jax.random.uniform(k1, (d_in, 3 * latent), jnp.float32, -s, s),
            w_hh=jax.random.uniform(k2, (latent, 3 * latent), jnp.float32, -s, s),
            b_ih=jax.random.uniform(k3, (1, 3 * latent), jnp.float32, -s, s),
            b_hh=jax.random.uniform(k4, (1, 3 * latent), jnp.float32, -s, s)))
        d_in = latent

    def head(nin, nout):
        W1, b1 = lin(nin, nout)
        W2, b2 = lin(nout, nout)
        return (W1, b1, W2, b2)

    return dict(gru=gru,
                bias_head=head(latent, node_num),
                prec_head=head(latent, node_num),
                weight_heads=[head(latent, n) for n in head_sizes])


# --------------------------- pure-JAX reference --------------------------------
def ref_forward(X, params, head_sizes, node_num, prec_thresh):
    N, T, _ = X.shape
    H = params["gru"][0]["w_hh"].shape[0]
    x = jnp.transpose(X, (1, 0, 2))
    for p in params["gru"]:
        h = jnp.zeros((N, H), jnp.float32)
        ys = []
        for t in range(T):
            gi = x[t] @ p["w_ih"] + p["b_ih"]
            gh = h @ p["w_hh"] + p["b_hh"]
            r = jax.nn.sigmoid(gi[:, :H] + gh[:, :H])
            z = jax.nn.sigmoid(gi[:, H:2 * H] + gh[:, H:2 * H])
            n = jnp.tanh(gi[:, 2 * H:] + r * gh[:, 2 * H:])
            h = (1.0 - z) * n + z * h
            ys.append(h)
        x = jnp.stack(ys, axis=0)
    features = jnp.transpose(x, (1, 0, 2))

    def mlp(f, W1, b1, W2, b2):
        return jnp.maximum(f @ W1 + b1, 0.0) @ W2 + b2

    bias = mlp(features, *params["bias_head"])
    prec = jnp.clip(mlp(features, *params["prec_head"]),
                    prec_thresh[0], prec_thresh[1])
    weights = jnp.concatenate([mlp(features, *h) for h in params["weight_heads"]],
                              axis=-1)
    return weights, bias, prec


if __name__ == "__main__":
    # config (mirrors cf in the torch module); drop_out = 0 -> self.drop is None
    input_size = 4
    latent_size = 32
    depth = 2
    N, T = 2, 8
    node_parents = [0, 1, 2, 2, 3, 1]     # each < node_num
    node_num = len(node_parents)
    max_header_size = 4
    prec_thresh = (0.1, 10.0)

    # header_size computation, exactly as in PGRNN.__init__
    header_size = []
    cur_sum = node_parents[0]
    for n in node_parents[1:]:
        if cur_sum + n > max_header_size:
            header_size.append(cur_sum)
            cur_sum = n
        else:
            cur_sum += n
    header_size.append(cur_sum)           # -> [3, 2, 4]

    key = jax.random.PRNGKey(0)
    kp, kx = jax.random.split(key)
    params = init_params(kp, input_size, latent_size, depth, node_num, header_size)
    X = jax.random.normal(kx, (N, T, input_size), jnp.float32)

    (weights, bias, prec), Hst = pgrnn_forward(X, params, header_size,
                                               node_num, prec_thresh)
    jax.block_until_ready((weights, bias, prec, Hst))

    w_ref, b_ref, p_ref = ref_forward(X, params, header_size, node_num, prec_thresh)

    assert weights.shape == (N, T, sum(header_size))
    assert bias.shape == (N, T, node_num)
    assert prec.shape == (N, T, node_num)
    assert Hst.shape == (depth, N, latent_size)
    assert jnp.allclose(weights, w_ref, atol=2e-3, rtol=2e-3)
    assert jnp.allclose(bias, b_ref, atol=2e-3, rtol=2e-3)
    assert jnp.allclose(prec, p_ref, atol=2e-3, rtol=2e-3)

    print("KERNEL_OK")
</pallas_src>

<mosaic_0001>
module attributes {stable_mosaic.version = 11 : i64} {
  func.func @_pgrnn_kernel(%arg0: i32, %arg1: memref<1x64x4xf32, #tpu.memory_space<vmem>>, %arg2: memref<4x384xf32, #tpu.memory_space<vmem>>, %arg3: memref<128x384xf32, #tpu.memory_space<vmem>>, %arg4: memref<1x384xf32, #tpu.memory_space<vmem>>, %arg5: memref<1x128xf32, #tpu.memory_space<vmem>>, %arg6: memref<128x384xf32, #tpu.memory_space<vmem>>, %arg7: memref<128x384xf32, #tpu.memory_space<vmem>>, %arg8: memref<1x384xf32, #tpu.memory_space<vmem>>, %arg9: memref<1x128xf32, #tpu.memory_space<vmem>>, %arg10: memref<128x128xf32, #tpu.memory_space<vmem>>, %arg11: memref<1x128xf32, #tpu.memory_space<vmem>>, %arg12: memref<128x128xf32, #tpu.memory_space<vmem>>, %arg13: memref<1x128xf32, #tpu.memory_space<vmem>>, %arg14: memref<1x64x128xf32, #tpu.memory_space<vmem>>, %arg15: memref<1x2x8x128xf32, #tpu.memory_space<vmem>>, %arg16: memref<64x384xf32, #tpu.memory_space<vmem>>, %arg17: memref<64x128xf32, #tpu.memory_space<vmem>>, %arg18: memref<64x128xf32, #tpu.memory_space<vmem>>) attributes {dimension_semantics = [#tpu.dimension_semantics<parallel>], iteration_bounds = array<i64: 1>, scalar_prefetch = 0 : i64, scratch_operands = 3 : i64, tpu.core_type = #tpu.core_type<tc>, window_params = [{transform_indices = @transform_0, window_bounds = array<i64: 1, 64, 4>}, {pipeline_mode = #tpu.pipeline_mode<synchronous>, transform_indices = @transform_1, window_bounds = array<i64: 4, 384>}, {pipeline_mode = #tpu.pipeline_mode<synchronous>, transform_indices = @transform_2, window_bounds = array<i64: 128, 384>}, {pipeline_mode = #tpu.pipeline_mode<synchronous>, transform_indices = @transform_3, window_bounds = array<i64: 1, 384>}, {pipeline_mode = #tpu.pipeline_mode<synchronous>, transform_indices = @transform_4, window_bounds = array<i64: 1, 128>}, {pipeline_mode = #tpu.pipeline_mode<synchronous>, transform_indices = @transform_5, window_bounds = array<i64: 128, 384>}, {pipeline_mode = #tpu.pipeline_mode<synchronous>, transform_indices = @transform_6, window_bounds = array<i64: 128, 384>}, {pipeline_mode = #tpu.pipeline_mode<synchronous>, transform_indices = @transform_7, window_bounds = array<i64: 1, 384>}, {pipeline_mode = #tpu.pipeline_mode<synchronous>, transform_indices = @transform_8, window_bounds = array<i64: 1, 128>}, {pipeline_mode = #tpu.pipeline_mode<synchronous>, transform_indices = @transform_9, window_bounds = array<i64: 128, 128>}, {pipeline_mode = #tpu.pipeline_mode<synchronous>, transform_indices = @transform_10, window_bounds = array<i64: 1, 128>}, {pipeline_mode = #tpu.pipeline_mode<synchronous>, transform_indices = @transform_11, window_bounds = array<i64: 128, 128>}, {pipeline_mode = #tpu.pipeline_mode<synchronous>, transform_indices = @transform_12, window_bounds = array<i64: 1, 128>}, {transform_indices = @transform_13, window_bounds = array<i64: 1, 64, 128>}, {transform_indices = @transform_14, window_bounds = array<i64: 1, 2, 8, 128>}]} {
    %c0 = arith.constant 0 : index
    %c0_0 = arith.constant 0 : index
    %0 = vector.load %arg2[%c0, %c0_0] : memref<4x384xf32, #tpu.memory_space<vmem>>, vector<4x384xf32>
    %c0_1 = arith.constant 0 : index
    %c0_2 = arith.constant 0 : index
    %1 = vector.load %arg3[%c0_1, %c0_2] : memref<128x384xf32, #tpu.memory_space<vmem>>, vector<128x384xf32>
    %c0_3 = arith.constant 0 : index
    %c0_4 = arith.constant 0 : index
    %2 = vector.load %arg4[%c0_3, %c0_4] : memref<1x384xf32, #tpu.memory_space<vmem>>, vector<1x384xf32>
    %c0_5 = arith.constant 0 : index
    %c0_6 = arith.constant 0 : index
    %3 = vector.load %arg5[%c0_5, %c0_6] : memref<1x128xf32, #tpu.memory_space<vmem>>, vector<1x128xf32>
    %c0_7 = arith.constant 0 : index
    %c0_8 = arith.constant 0 : index
    %c0_9 = arith.constant 0 : index
    %4 = vector.load %arg1[%c0_7, %c0_8, %c0_9] : memref<1x64x4xf32, #tpu.memory_space<vmem>>, vector<1x64x4xf32>
    %5 = vector.shape_cast %4 : vector<1x64x4xf32> to vector<64x4xf32>
    %cst = arith.constant dense<0.000000e+00> : vector<64x384xf32>
    %6 = tpu.matmul %5, %0, %cst {dimension_numbers = #tpu.dot_dimension_numbers<[1], [0], [0], [1], [0, 0, 1, 1], [], []>} : vector<64x4xf32>, vector<4x384xf32>, vector<64x384xf32> -> vector<64x384xf32>
    %7 = vector.broadcast %2 : vector<1x384xf32> to vector<64x384xf32>
    %8 = arith.addf %6, %7 : vector<64x384xf32>
    %c0_10 = arith.constant 0 : index
    %c0_11 = arith.constant 0 : index
    %9 = vector.load %arg16[%c0_10, %c0_11] : memref<64x384xf32, #tpu.memory_space<vmem>>, vector<64x384xf32>
    tpu.vector_store %arg16[%c0_10, %c0_11], %8 {strides = array<i32>} : memref<64x384xf32, #tpu.memory_space<vmem>>, vector<64x384xf32>,
    %10 = vector.shape_cast %3 : vector<1x128xf32> to vector<1x128xf32>
    %11 = vector.broadcast %10 : vector<1x128xf32> to vector<8x128xf32>
    %cst_12 = arith.constant 0.000000e+00 : f32
    %12 = vector.broadcast %cst_12 : f32 to vector<8x128xf32>
    %c0_13 = arith.constant 0 : index
    %c0_14 = arith.constant 0 : index
    %13 = vector.load %arg16[%c0_13, %c0_14] : memref<64x384xf32, #tpu.memory_space<vmem>>, vector<8x384xf32>
    %cst_15 = arith.constant dense<0.000000e+00> : vector<8x384xf32>
    %14 = tpu.matmul %12, %1, %cst_15 {dimension_numbers = #tpu.dot_dimension_numbers<[1], [0], [0], [1], [0, 0, 1, 1], [], []>} : vector<8x128xf32>, vector<128x384xf32>, vector<8x384xf32> -> vector<8x384xf32>
    %15 = vector.extract_strided_slice %13 {offsets = [0, 0], sizes = [8, 128], strides = [1, 1]} : vector<8x384xf32> to vector<8x128xf32>
    %16 = vector.extract_strided_slice %14 {offsets = [0, 0], sizes = [8, 128], strides = [1, 1]} : vector<8x384xf32> to vector<8x128xf32>
    %17 = arith.addf %15, %16 : vector<8x128xf32>
    %18 = arith.negf %17 : vector<8x128xf32>
    %19 = math.exp %18 : vector<8x128xf32>
    %cst_16 = arith.constant 1.000000e+00 : f32
    %20 = vector.broadcast %cst_16 : f32 to vector<8x128xf32>
    %21 = arith.addf %20, %19 : vector<8x128xf32>
    %22 = arith.divf %20, %21 : vector<8x128xf32>
    %23 = vector.extract_strided_slice %13 {offsets = [0, 128], sizes = [8, 128], strides = [1, 1]} : vector<8x384xf32> to vector<8x128xf32>
    %24 = vector.extract_strided_slice %14 {offsets = [0, 128], sizes = [8, 128], strides = [1, 1]} : vector<8x384xf32> to vector<8x128xf32>
    %25 = arith.addf %23, %24 : vector<8x128xf32>
    %26 = arith.negf %25 : vector<8x128xf32>
    %27 = math.exp %26 : vector<8x128xf32>
    %cst_17 = arith.constant 1.000000e+00 : f32
    %28 = vector.broadcast %cst_17 : f32 to vector<8x128xf32>
    %29 = arith.addf %28, %27 : vector<8x128xf32>
    %30 = arith.divf %28, %29 : vector<8x128xf32>
    %31 = vector.extract_strided_slice %13 {offsets = [0, 256], sizes = [8, 128], strides = [1, 1]} : vector<8x384xf32> to vector<8x128xf32>
    %32 = vector.extract_strided_slice %14 {offsets = [0, 256], sizes = [8, 128], strides = [1, 1]} : vector<8x384xf32> to vector<8x128xf32>
    %33 = arith.addf %32, %11 : vector<8x128xf32>
    %34 = arith.mulf %22, %33 : vector<8x128xf32>
    %35 = arith.addf %31, %34 : vector<8x128xf32>
    %36 = math.tanh %35 : vector<8x128xf32>
    %cst_18 = arith.constant 1.000000e+00 : f32
    %37 = vector.broadcast %cst_18 : f32 to vector<8x128xf32>
    %38 = arith.subf %37, %30 : vector<8x128xf32>
    %39 = arith.mulf %38, %36 : vector<8x128xf32>
    %40 = arith.mulf %30, %12 : vector<8x128xf32>
    %41 = arith.addf %39, %40 : vector<8x128xf32>
    %c0_19 = arith.constant 0 : index
    %c0_20 = arith.constant 0 : index
    %42 = vector.load %arg17[%c0_19, %c0_20] : memref<64x128xf32, #tpu.memory_space<vmem>>, vector<8x128xf32>
    tpu.vector_store %arg17[%c0_19, %c0_20], %41 {strides = array<i32>} : memref<64x128xf32, #tpu.memory_space<vmem>>, vector<8x128xf32>,
    %c8 = arith.constant 8 : index
    %c0_21 = arith.constant 0 : index
    %43 = vector.load %arg16[%c8, %c0_21] : memref<64x384xf32, #tpu.memory_space<vmem>>, vector<8x384xf32>
    %cst_22 = arith.constant dense<0.000000e+00> : vector<8x384xf32>
    %44 = tpu.matmul %41, %1, %cst_22 {dimension_numbers = #tpu.dot_dimension_numbers<[1], [0], [0], [1], [0, 0, 1, 1], [], []>} : vector<8x128xf32>, vector<128x384xf32>, vector<8x384xf32> -> vector<8x384xf32>
    %45 = vector.extract_strided_slice %43 {offsets = [0, 0], sizes = [8, 128], strides = [1, 1]} : vector<8x384xf32> to vector<8x128xf32>
    %46 = vector.extract_strided_slice %44 {offsets = [0, 0], sizes = [8, 128], strides = [1, 1]} : vector<8x384xf32> to vector<8x128xf32>
    %47 = arith.addf %45, %46 : vector<8x128xf32>
    %48 = arith.negf %47 : vector<8x128xf32>
    %49 = math.exp %48 : vector<8x128xf32>
    %cst_23 = arith.constant 1.000000e+00 : f32
    %50 = vector.broadcast %cst_23 : f32 to vector<8x128xf32>
    %51 = arith.addf %50, %49 : vector<8x128xf32>
    %52 = arith.divf %50, %51 : vector<8x128xf32>
    %53 = vector.extract_strided_slice %43 {offsets = [0, 128], sizes = [8, 128], strides = [1, 1]} : vector<8x384xf32> to vector<8x128xf32>
    %54 = vector.extract_strided_slice %44 {offsets = [0, 128], sizes = [8, 128], strides = [1, 1]} : vector<8x384xf32> to vector<8x128xf32>
    %55 = arith.addf %53, %54 : vector<8x128xf32>
    %56 = arith.negf %55 : vector<8x128xf32>
    %57 = math.exp %56 : vector<8x128xf32>
    %cst_24 = arith.constant 1.000000e+00 : f32
    %58 = vector.broadcast %cst_24 : f32 to vector<8x128xf32>
    %59 = arith.addf %58, %57 : vector<8x128xf32>
    %60 = arith.divf %58, %59 : vector<8x128xf32>
    %61 = vector.extract_strided_slice %43 {offsets = [0, 256], sizes = [8, 128], strides = [1, 1]} : vector<8x384xf32> to vector<8x128xf32>
    %62 = vector.extract_strided_slice %44 {offsets = [0, 256], sizes = [8, 128], strides = [1, 1]} : vector<8x384xf32> to vector<8x128xf32>
    %63 = arith.addf %62, %11 : vector<8x128xf32>
    %64 = arith.mulf %52, %63 : vector<8x128xf32>
    %65 = arith.addf %61, %64 : vector<8x128xf32>
    %66 = math.tanh %65 : vector<8x128xf32>
    %cst_25 = arith.constant 1.000000e+00 : f32
    %67 = vector.broadcast %cst_25 : f32 to vector<8x128xf32>
    %68 = arith.subf %67, %60 : vector<8x128xf32>
    %69 = arith.mulf %68, %66 : vector<8x128xf32>
    %70 = arith.mulf %60, %41 : vector<8x128xf32>
    %71 = arith.addf %69, %70 : vector<8x128xf32>
    %c8_26 = arith.constant 8 : index
    %c0_27 = arith.constant 0 : index
    %72 = vector.load %arg17[%c8_26, %c0_27] : memref<64x128xf32, #tpu.memory_space<vmem>>, vector<8x128xf32>
    tpu.vector_store %arg17[%c8_26, %c0_27], %71 {strides = array<i32>} : memref<64x128xf32, #tpu.memory_space<vmem>>, vector<8x128xf32>,
    %c16 = arith.constant 16 : index
    %c0_28 = arith.constant 0 : index
    %73 = vector.load %arg16[%c16, %c0_28] : memref<64x384xf32, #tpu.memory_space<vmem>>, vector<8x384xf32>
    %cst_29 = arith.constant dense<0.000000e+00> : vector<8x384xf32>
    %74 = tpu.matmul %71, %1, %cst_29 {dimension_numbers = #tpu.dot_dimension_numbers<[1], [0], [0], [1], [0, 0, 1, 1], [], []>} : vector<8x128xf32>, vector<128x384xf32>, vector<8x384xf32> -> vector<8x384xf32>
    %75 = vector.extract_strided_slice %73 {offsets = [0, 0], sizes = [8, 128], strides = [1, 1]} : vector<8x384xf32> to vector<8x128xf32>
    %76 = vector.extract_strided_slice %74 {offsets = [0, 0], sizes = [8, 128], strides = [1, 1]} : vector<8x384xf32> to vector<8x128xf32>
    %77 = arith.addf %75, %76 : vector<8x128xf32>
    %78 = arith.negf %77 : vector<8x128xf32>
    %79 = math.exp %78 : vector<8x128xf32>
    %cst_30 = arith.constant 1.000000e+00 : f32
    %80 = vector.broadcast %cst_30 : f32 to vector<8x128xf32>
    %81 = arith.addf %80, %79 : vector<8x128xf32>
    %82 = arith.divf %80, %81 : vector<8x128xf32>
    %83 = vector.extract_strided_slice %73 {offsets = [0, 128], sizes = [8, 128], strides = [1, 1]} : vector<8x384xf32> to vector<8x128xf32>
    %84 = vector.extract_strided_slice %74 {offsets = [0, 128], sizes = [8, 128], strides = [1, 1]} : vector<8x384xf32> to vector<8x128xf32>
    %85 = arith.addf %83, %84 : vector<8x128xf32>
    %86 = arith.negf %85 : vector<8x128xf32>
    %87 = math.exp %86 : vector<8x128xf32>
    %cst_31 = arith.constant 1.000000e+00 : f32
    %88 = vector.broadcast %cst_31 : f32 to vector<8x128xf32>
    %89 = arith.addf %88, %87 : vector<8x128xf32>
    %90 = arith.divf %88, %89 : vector<8x128xf32>
    %91 = vector.extract_strided_slice %73 {offsets = [0, 256], sizes = [8, 128], strides = [1, 1]} : vector<8x384xf32> to vector<8x128xf32>
    %92 = vector.extract_strided_slice %74 {offsets = [0, 256], sizes = [8, 128], strides = [1, 1]} : vector<8x384xf32> to vector<8x128xf32>
    %93 = arith.addf %92, %11 : vector<8x128xf32>
    %94 = arith.mulf %82, %93 : vector<8x128xf32>
    %95 = arith.addf %91, %94 : vector<8x128xf32>
    %96 = math.tanh %95 : vector<8x128xf32>
    %cst_32 = arith.constant 1.000000e+00 : f32
    %97 = vector.broadcast %cst_32 : f32 to vector<8x128xf32>
    %98 = arith.subf %97, %90 : vector<8x128xf32>
    %99 = arith.mulf %98, %96 : vector<8x128xf32>
    %100 = arith.mulf %90, %71 : vector<8x128xf32>
    %101 = arith.addf %99, %100 : vector<8x128xf32>
    %c16_33 = arith.constant 16 : index
    %c0_34 = arith.constant 0 : index
    %102 = vector.load %arg17[%c16_33, %c0_34] : memref<64x128xf32, #tpu.memory_space<vmem>>, vector<8x128xf32>
    tpu.vector_store %arg17[%c16_33, %c0_34], %101 {strides = array<i32>} : memref<64x128xf32, #tpu.memory_space<vmem>>, vector<8x128xf32>,
    %c24 = arith.constant 24 : index
    %c0_35 = arith.constant 0 : index
    %103 = vector.load %arg16[%c24, %c0_35] : memref<64x384xf32, #tpu.memory_space<vmem>>, vector<8x384xf32>
    %cst_36 = arith.constant dense<0.000000e+00> : vector<8x384xf32>
    %104 = tpu.matmul %101, %1, %cst_36 {dimension_numbers = #tpu.dot_dimension_numbers<[1], [0], [0], [1], [0, 0, 1, 1], [], []>} : vector<8x128xf32>, vector<128x384xf32>, vector<8x384xf32> -> vector<8x384xf32>
    %105 = vector.extract_strided_slice %103 {offsets = [0, 0], sizes = [8, 128], strides = [1, 1]} : vector<8x384xf32> to vector<8x128xf32>
    %106 = vector.extract_strided_slice %104 {offsets = [0, 0], sizes = [8, 128], strides = [1, 1]} : vector<8x384xf32> to vector<8x128xf32>
    %107 = arith.addf %105, %106 : vector<8x128xf32>
    %108 = arith.negf %107 : vector<8x128xf32>
    %109 = math.exp %108 : vector<8x128xf32>
    %cst_37 = arith.constant 1.000000e+00 : f32
    %110 = vector.broadcast %cst_37 : f32 to vector<8x128xf32>
    %111 = arith.addf %110, %109 : vector<8x128xf32>
    %112 = arith.divf %110, %111 : vector<8x128xf32>
    %113 = vector.extract_strided_slice %103 {offsets = [0, 128], sizes = [8, 128], strides = [1, 1]} : vector<8x384xf32> to vector<8x128xf32>
    %114 = vector.extract_strided_slice %104 {offsets = [0, 128], sizes = [8, 128], strides = [1, 1]} : vector<8x384xf32> to vector<8x128xf32>
    %115 = arith.addf %113, %114 : vector<8x128xf32>
    %116 = arith.negf %115 : vector<8x128xf32>
    %117 = math.exp %116 : vector<8x128xf32>
    %cst_38 = arith.constant 1.000000e+00 : f32
    %118 = vector.broadcast %cst_38 : f32 to vector<8x128xf32>
    %119 = arith.addf %118, %117 : vector<8x128xf32>
    %120 = arith.divf %118, %119 : vector<8x128xf32>
    %121 = vector.extract_strided_slice %103 {offsets = [0, 256], sizes = [8, 128], strides = [1, 1]} : vector<8x384xf32> to vector<8x128xf32>
    %122 = vector.extract_strided_slice %104 {offsets = [0, 256], sizes = [8, 128], strides = [1, 1]} : vector<8x384xf32> to vector<8x128xf32>
    %123 = arith.addf %122, %11 : vector<8x128xf32>
    %124 = arith.mulf %112, %123 : vector<8x128xf32>
    %125 = arith.addf %121, %124 : vector<8x128xf32>
    %126 = math.tanh %125 : vector<8x128xf32>
    %cst_39 = arith.constant 1.000000e+00 : f32
    %127 = vector.broadcast %cst_39 : f32 to vector<8x128xf32>
    %128 = arith.subf %127, %120 : vector<8x128xf32>
    %129 = arith.mulf %128, %126 : vector<8x128xf32>
    %130 = arith.mulf %120, %101 : vector<8x128xf32>
    %131 = arith.addf %129, %130 : vector<8x128xf32>
    %c24_40 = arith.constant 24 : index
    %c0_41 = arith.constant 0 : index
    %132 = vector.load %arg17[%c24_40, %c0_41] : memref<64x128xf32, #tpu.memory_space<vmem>>, vector<8x128xf32>
    tpu.vector_store %arg17[%c24_40, %c0_41], %131 {strides = array<i32>} : memref<64x128xf32, #tpu.memory_space<vmem>>, vector<8x128xf32>,
    %c32 = arith.constant 32 : index
    %c0_42 = arith.constant 0 : index
    %133 = vector.load %arg16[%c32, %c0_42] : memref<64x384xf32, #tpu.memory_space<vmem>>, vector<8x384xf32>
    %cst_43 = arith.constant dense<0.000000e+00> : vector<8x384xf32>
    %134 = tpu.matmul %131, %1, %cst_43 {dimension_numbers = #tpu.dot_dimension_numbers<[1], [0], [0], [1], [0, 0, 1, 1], [], []>} : vector<8x128xf32>, vector<128x384xf32>, vector<8x384xf32> -> vector<8x384xf32>
    %135 = vector.extract_strided_slice %133 {offsets = [0, 0], sizes = [8, 128], strides = [1, 1]} : vector<8x384xf32> to vector<8x128xf32>
    %136 = vector.extract_strided_slice %134 {offsets = [0, 0], sizes = [8, 128], strides = [1, 1]} : vector<8x384xf32> to vector<8x128xf32>
    %137 = arith.addf %135, %136 : vector<8x128xf32>
    %138 = arith.negf %137 : vector<8x128xf32>
    %139 = math.exp %138 : vector<8x128xf32>
    %cst_44 = arith.constant 1.000000e+00 : f32
    %140 = vector.broadcast %cst_44 : f32 to vector<8x128xf32>
    %141 = arith.addf %140, %139 : vector<8x128xf32>
    %142 = arith.divf %140, %141 : vector<8x128xf32>
    %143 = vector.extract_strided_slice %133 {offsets = [0, 128], sizes = [8, 128], strides = [1, 1]} : vector<8x384xf32> to vector<8x128xf32>
    %144 = vector.extract_strided_slice %134 {offsets = [0, 128], sizes = [8, 128], strides = [1, 1]} : vector<8x384xf32> to vector<8x128xf32>
    %145 = arith.addf %143, %144 : vector<8x128xf32>
    %146 = arith.negf %145 : vector<8x128xf32>
    %147 = math.exp %146 : vector<8x128xf32>
    %cst_45 = arith.constant 1.000000e+00 : f32
    %148 = vector.broadcast %cst_45 : f32 to vector<8x128xf32>
    %149 = arith.addf %148, %147 : vector<8x128xf32>
    %150 = arith.divf %148, %149 : vector<8x128xf32>
    %151 = vector.extract_strided_slice %133 {offsets = [0, 256], sizes = [8, 128], strides = [1, 1]} : vector<8x384xf32> to vector<8x128xf32>
    %152 = vector.extract_strided_slice %134 {offsets = [0, 256], sizes = [8, 128], strides = [1, 1]} : vector<8x384xf32> to vector<8x128xf32>
    %153 = arith.addf %152, %11 : vector<8x128xf32>
    %154 = arith.mulf %142, %153 : vector<8x128xf32>
    %155 = arith.addf %151, %154 : vector<8x128xf32>
    %156 = math.tanh %155 : vector<8x128xf32>
    %cst_46 = arith.constant 1.000000e+00 : f32
    %157 = vector.broadcast %cst_46 : f32 to vector<8x128xf32>
    %158 = arith.subf %157, %150 : vector<8x128xf32>
    %159 = arith.mulf %158, %156 : vector<8x128xf32>
    %160 = arith.mulf %150, %131 : vector<8x128xf32>
    %161 = arith.addf %159, %160 : vector<8x128xf32>
    %c32_47 = arith.constant 32 : index
    %c0_48 = arith.constant 0 : index
    %162 = vector.load %arg17[%c32_47, %c0_48] : memref<64x128xf32, #tpu.memory_space<vmem>>, vector<8x128xf32>
    tpu.vector_store %arg17[%c32_47, %c0_48], %161 {strides = array<i32>} : memref<64x128xf32, #tpu.memory_space<vmem>>, vector<8x128xf32>,
    %c40 = arith.constant 40 : index
    %c0_49 = arith.constant 0 : index
    %163 = vector.load %arg16[%c40, %c0_49] : memref<64x384xf32, #tpu.memory_space<vmem>>, vector<8x384xf32>
    %cst_50 = arith.constant dense<0.000000e+00> : vector<8x384xf32>
    %164 = tpu.matmul %161, %1, %cst_50 {dimension_numbers = #tpu.dot_dimension_numbers<[1], [0], [0], [1], [0, 0, 1, 1], [], []>} : vector<8x128xf32>, vector<128x384xf32>, vector<8x384xf32> -> vector<8x384xf32>
    %165 = vector.extract_strided_slice %163 {offsets = [0, 0], sizes = [8, 128], strides = [1, 1]} : vector<8x384xf32> to vector<8x128xf32>
    %166 = vector.extract_strided_slice %164 {offsets = [0, 0], sizes = [8, 128], strides = [1, 1]} : vector<8x384xf32> to vector<8x128xf32>
    %167 = arith.addf %165, %166 : vector<8x128xf32>
    %168 = arith.negf %167 : vector<8x128xf32>
    %169 = math.exp %168 : vector<8x128xf32>
    %cst_51 = arith.constant 1.000000e+00 : f32
    %170 = vector.broadcast %cst_51 : f32 to vector<8x128xf32>
    %171 = arith.addf %170, %169 : vector<8x128xf32>
    %172 = arith.divf %170, %171 : vector<8x128xf32>
    %173 = vector.extract_strided_slice %163 {offsets = [0, 128], sizes = [8, 128], strides = [1, 1]} : vector<8x384xf32> to vector<8x128xf32>
    %174 = vector.extract_strided_slice %164 {offsets = [0, 128], sizes = [8, 128], strides = [1, 1]} : vector<8x384xf32> to vector<8x128xf32>
    %175 = arith.addf %173, %174 : vector<8x128xf32>
    %176 = arith.negf %175 : vector<8x128xf32>
    %177 = math.exp %176 : vector<8x128xf32>
    %cst_52 = arith.constant 1.000000e+00 : f32
    %178 = vector.broadcast %cst_52 : f32 to vector<8x128xf32>
    %179 = arith.addf %178, %177 : vector<8x128xf32>
    %180 = arith.divf %178, %179 : vector<8x128xf32>
    %181 = vector.extract_strided_slice %163 {offsets = [0, 256], sizes = [8, 128], strides = [1, 1]} : vector<8x384xf32> to vector<8x128xf32>
    %182 = vector.extract_strided_slice %164 {offsets = [0, 256], sizes = [8, 128], strides = [1, 1]} : vector<8x384xf32> to vector<8x128xf32>
    %183 = arith.addf %182, %11 : vector<8x128xf32>
    %184 = arith.mulf %172, %183 : vector<8x128xf32>
    %185 = arith.addf %181, %184 : vector<8x128xf32>
    %186 = math.tanh %185 : vector<8x128xf32>
    %cst_53 = arith.constant 1.000000e+00 : f32
    %187 = vector.broadcast %cst_53 : f32 to vector<8x128xf32>
    %188 = arith.subf %187, %180 : vector<8x128xf32>
    %189 = arith.mulf %188, %186 : vector<8x128xf32>
    %190 = arith.mulf %180, %161 : vector<8x128xf32>
    %191 = arith.addf %189, %190 : vector<8x128xf32>
    %c40_54 = arith.constant 40 : index
    %c0_55 = arith.constant 0 : index
    %192 = vector.load %arg17[%c40_54, %c0_55] : memref<64x128xf32, #tpu.memory_space<vmem>>, vector<8x128xf32>
    tpu.vector_store %arg17[%c40_54, %c0_55], %191 {strides = array<i32>} : memref<64x128xf32, #tpu.memory_space<vmem>>, vector<8x128xf32>,
    %c48 = arith.constant 48 : index
    %c0_56 = arith.constant 0 : index
    %193 = vector.load %arg16[%c48, %c0_56] : memref<64x384xf32, #tpu.memory_space<vmem>>, vector<8x384xf32>
    %cst_57 = arith.constant dense<0.000000e+00> : vector<8x384xf32>
    %194 = tpu.matmul %191, %1, %cst_57 {dimension_numbers = #tpu.dot_dimension_numbers<[1], [0], [0], [1], [0, 0, 1, 1], [], []>} : vector<8x128xf32>, vector<128x384xf32>, vector<8x384xf32> -> vector<8x384xf32>
    %195 = vector.extract_strided_slice %193 {offsets = [0, 0], sizes = [8, 128], strides = [1, 1]} : vector<8x384xf32> to vector<8x128xf32>
    %196 = vector.extract_strided_slice %194 {offsets = [0, 0], sizes = [8, 128], strides = [1, 1]} : vector<8x384xf32> to vector<8x128xf32>
    %197 = arith.addf %195, %196 : vector<8x128xf32>
    %198 = arith.negf %197 : vector<8x128xf32>
    %199 = math.exp %198 : vector<8x128xf32>
    %cst_58 = arith.constant 1.000000e+00 : f32
    %200 = vector.broadcast %cst_58 : f32 to vector<8x128xf32>
    %201 = arith.addf %200, %199 : vector<8x128xf32>
    %202 = arith.divf %200, %201 : vector<8x128xf32>
    %203 = vector.extract_strided_slice %193 {offsets = [0, 128], sizes = [8, 128], strides = [1, 1]} : vector<8x384xf32> to vector<8x128xf32>
    %204 = vector.extract_strided_slice %194 {offsets = [0, 128], sizes = [8, 128], strides = [1, 1]} : vector<8x384xf32> to vector<8x128xf32>
    %205 = arith.addf %203, %204 : vector<8x128xf32>
    %206 = arith.negf %205 : vector<8x128xf32>
    %207 = math.exp %206 : vector<8x128xf32>
    %cst_59 = arith.constant 1.000000e+00 : f32
    %208 = vector.broadcast %cst_59 : f32 to vector<8x128xf32>
    %209 = arith.addf %208, %207 : vector<8x128xf32>
    %210 = arith.divf %208, %209 : vector<8x128xf32>
    %211 = vector.extract_strided_slice %193 {offsets = [0, 256], sizes = [8, 128], strides = [1, 1]} : vector<8x384xf32> to vector<8x128xf32>
    %212 = vector.extract_strided_slice %194 {offsets = [0, 256], sizes = [8, 128], strides = [1, 1]} : vector<8x384xf32> to vector<8x128xf32>
    %213 = arith.addf %212, %11 : vector<8x128xf32>
    %214 = arith.mulf %202, %213 : vector<8x128xf32>
    %215 = arith.addf %211, %214 : vector<8x128xf32>
    %216 = math.tanh %215 : vector<8x128xf32>
    %cst_60 = arith.constant 1.000000e+00 : f32
    %217 = vector.broadcast %cst_60 : f32 to vector<8x128xf32>
    %218 = arith.subf %217, %210 : vector<8x128xf32>
    %219 = arith.mulf %218, %216 : vector<8x128xf32>
    %220 = arith.mulf %210, %191 : vector<8x128xf32>
    %221 = arith.addf %219, %220 : vector<8x128xf32>
    %c48_61 = arith.constant 48 : index
    %c0_62 = arith.constant 0 : index
    %222 = vector.load %arg17[%c48_61, %c0_62] : memref<64x128xf32, #tpu.memory_space<vmem>>, vector<8x128xf32>
    tpu.vector_store %arg17[%c48_61, %c0_62], %221 {strides = array<i32>} : memref<64x128xf32, #tpu.memory_space<vmem>>, vector<8x128xf32>,
    %c56 = arith.constant 56 : index
    %c0_63 = arith.constant 0 : index
    %223 = vector.load %arg16[%c56, %c0_63] : memref<64x384xf32, #tpu.memory_space<vmem>>, vector<8x384xf32>
    %cst_64 = arith.constant dense<0.000000e+00> : vector<8x384xf32>
    %224 = tpu.matmul %221, %1, %cst_64 {dimension_numbers = #tpu.dot_dimension_numbers<[1], [0], [0], [1], [0, 0, 1, 1], [], []>} : vector<8x128xf32>, vector<128x384xf32>, vector<8x384xf32> -> vector<8x384xf32>
    %225 = vector.extract_strided_slice %223 {offsets = [0, 0], sizes = [8, 128], strides = [1, 1]} : vector<8x384xf32> to vector<8x128xf32>
    %226 = vector.extract_strided_slice %224 {offsets = [0, 0], sizes = [8, 128], strides = [1, 1]} : vector<8x384xf32> to vector<8x128xf32>
    %227 = arith.addf %225, %226 : vector<8x128xf32>
    %228 = arith.negf %227 : vector<8x128xf32>
    %229 = math.exp %228 : vector<8x128xf32>
    %cst_65 = arith.constant 1.000000e+00 : f32
    %230 = vector.broadcast %cst_65 : f32 to vector<8x128xf32>
    %231 = arith.addf %230, %229 : vector<8x128xf32>
    %232 = arith.divf %230, %231 : vector<8x128xf32>
    %233 = vector.extract_strided_slice %223 {offsets = [0, 128], sizes = [8, 128], strides = [1, 1]} : vector<8x384xf32> to vector<8x128xf32>
    %234 = vector.extract_strided_slice %224 {offsets = [0, 128], sizes = [8, 128], strides = [1, 1]} : vector<8x384xf32> to vector<8x128xf32>
    %235 = arith.addf %233, %234 : vector<8x128xf32>
    %236 = arith.negf %235 : vector<8x128xf32>
    %237 = math.exp %236 : vector<8x128xf32>
    %cst_66 = arith.constant 1.000000e+00 : f32
    %238 = vector.broadcast %cst_66 : f32 to vector<8x128xf32>
    %239 = arith.addf %238, %237 : vector<8x128xf32>
    %240 = arith.divf %238, %239 : vector<8x128xf32>
    %241 = vector.extract_strided_slice %223 {offsets = [0, 256], sizes = [8, 128], strides = [1, 1]} : vector<8x384xf32> to vector<8x128xf32>
    %242 = vector.extract_strided_slice %224 {offsets = [0, 256], sizes = [8, 128], strides = [1, 1]} : vector<8x384xf32> to vector<8x128xf32>
    %243 = arith.addf %242, %11 : vector<8x128xf32>
    %244 = arith.mulf %232, %243 : vector<8x128xf32>
    %245 = arith.addf %241, %244 : vector<8x128xf32>
    %246 = math.tanh %245 : vector<8x128xf32>
    %cst_67 = arith.constant 1.000000e+00 : f32
    %247 = vector.broadcast %cst_67 : f32 to vector<8x128xf32>
    %248 = arith.subf %247, %240 : vector<8x128xf32>
    %249 = arith.mulf %248, %246 : vector<8x128xf32>
    %250 = arith.mulf %240, %221 : vector<8x128xf32>
    %251 = arith.addf %249, %250 : vector<8x128xf32>
    %c56_68 = arith.constant 56 : index
    %c0_69 = arith.constant 0 : index
    %252 = vector.load %arg17[%c56_68, %c0_69] : memref<64x128xf32, #tpu.memory_space<vmem>>, vector<8x128xf32>
    tpu.vector_store %arg17[%c56_68, %c0_69], %251 {strides = array<i32>} : memref<64x128xf32, #tpu.memory_space<vmem>>, vector<8x128xf32>,
    %c0_70 = arith.constant 0 : index
    %c0_71 = arith.constant 0 : index
    %c0_72 = arith.constant 0 : index
    %c0_73 = arith.constant 0 : index
    %253 = vector.load %arg15[%c0_70, %c0_71, %c0_72, %c0_73] : memref<1x2x8x128xf32, #tpu.memory_space<vmem>>, vector<1x1x8x128xf32>
    %254 = vector.shape_cast %253 : vector<1x1x8x128xf32> to vector<8x128xf32>
    %255 = vector.shape_cast %251 : vector<8x128xf32> to vector<1x1x8x128xf32>
    tpu.vector_store %arg15[%c0_70, %c0_71, %c0_72, %c0_73], %255 {strides = array<i32>} : memref<1x2x8x128xf32, #tpu.memory_space<vmem>>, vector<1x1x8x128xf32>,
    %c0_74 = arith.constant 0 : index
    %c0_75 = arith.constant 0 : index
    %256 = vector.load %arg6[%c0_74, %c0_75] : memref<128x384xf32, #tpu.memory_space<vmem>>, vector<128x384xf32>
    %c0_76 = arith.constant 0 : index
    %c0_77 = arith.constant 0 : index
    %257 = vector.load %arg7[%c0_76, %c0_77] : memref<128x384xf32, #tpu.memory_space<vmem>>, vector<128x384xf32>
    %c0_78 = arith.constant 0 : index
    %c0_79 = arith.constant 0 : index
    %258 = vector.load %arg8[%c0_78, %c0_79] : memref<1x384xf32, #tpu.memory_space<vmem>>, vector<1x384xf32>
    %c0_80 = arith.constant 0 : index
    %c0_81 = arith.constant 0 : index
    %259 = vector.load %arg9[%c0_80, %c0_81] : memref<1x128xf32, #tpu.memory_space<vmem>>, vector<1x128xf32>
    %c0_82 = arith.constant 0 : index
    %c0_83 = arith.constant 0 : index
    %260 = vector.load %arg17[%c0_82, %c0_83] : memref<64x128xf32, #tpu.memory_space<vmem>>, vector<64x128xf32>
    %cst_84 = arith.constant dense<0.000000e+00> : vector<64x384xf32>
    %261 = tpu.matmul %260, %256, %cst_84 {dimension_numbers = #tpu.dot_dimension_numbers<[1], [0], [0], [1], [0, 0, 1, 1], [], []>} : vector<64x128xf32>, vector<128x384xf32>, vector<64x384xf32> -> vector<64x384xf32>
    %262 = vector.broadcast %258 : vector<1x384xf32> to vector<64x384xf32>
    %263 = arith.addf %261, %262 : vector<64x384xf32>
    %c0_85 = arith.constant 0 : index
    %c0_86 = arith.constant 0 : index
    %264 = vector.load %arg16[%c0_85, %c0_86] : memref<64x384xf32, #tpu.memory_space<vmem>>, vector<64x384xf32>
    tpu.vector_store %arg16[%c0_85, %c0_86], %263 {strides = array<i32>} : memref<64x384xf32, #tpu.memory_space<vmem>>, vector<64x384xf32>,
    %265 = vector.shape_cast %259 : vector<1x128xf32> to vector<1x128xf32>
    %266 = vector.broadcast %265 : vector<1x128xf32> to vector<8x128xf32>
    %cst_87 = arith.constant 0.000000e+00 : f32
    %267 = vector.broadcast %cst_87 : f32 to vector<8x128xf32>
    %c0_88 = arith.constant 0 : index
    %c0_89 = arith.constant 0 : index
    %268 = vector.load %arg16[%c0_88, %c0_89] : memref<64x384xf32, #tpu.memory_space<vmem>>, vector<8x384xf32>
    %cst_90 = arith.constant dense<0.000000e+00> : vector<8x384xf32>
    %269 = tpu.matmul %267, %257, %cst_90 {dimension_numbers = #tpu.dot_dimension_numbers<[1], [0], [0], [1], [0, 0, 1, 1], [], []>} : vector<8x128xf32>, vector<128x384xf32>, vector<8x384xf32> -> vector<8x384xf32>
    %270 = vector.extract_strided_slice %268 {offsets = [0, 0], sizes = [8, 128], strides = [1, 1]} : vector<8x384xf32> to vector<8x128xf32>
    %271 = vector.extract_strided_slice %269 {offsets = [0, 0], sizes = [8, 128], strides = [1, 1]} : vector<8x384xf32> to vector<8x128xf32>
    %272 = arith.addf %270, %271 : vector<8x128xf32>
    %273 = arith.negf %272 : vector<8x128xf32>
    %274 = math.exp %273 : vector<8x128xf32>
    %cst_91 = arith.constant 1.000000e+00 : f32
    %275 = vector.broadcast %cst_91 : f32 to vector<8x128xf32>
    %276 = arith.addf %275, %274 : vector<8x128xf32>
    %277 = arith.divf %275, %276 : vector<8x128xf32>
    %278 = vector.extract_strided_slice %268 {offsets = [0, 128], sizes = [8, 128], strides = [1, 1]} : vector<8x384xf32> to vector<8x128xf32>
    %279 = vector.extract_strided_slice %269 {offsets = [0, 128], sizes = [8, 128], strides = [1, 1]} : vector<8x384xf32> to vector<8x128xf32>
    %280 = arith.addf %278, %279 : vector<8x128xf32>
    %281 = arith.negf %280 : vector<8x128xf32>
    %282 = math.exp %281 : vector<8x128xf32>
    %cst_92 = arith.constant 1.000000e+00 : f32
    %283 = vector.broadcast %cst_92 : f32 to vector<8x128xf32>
    %284 = arith.addf %283, %282 : vector<8x128xf32>
    %285 = arith.divf %283, %284 : vector<8x128xf32>
    %286 = vector.extract_strided_slice %268 {offsets = [0, 256], sizes = [8, 128], strides = [1, 1]} : vector<8x384xf32> to vector<8x128xf32>
    %287 = vector.extract_strided_slice %269 {offsets = [0, 256], sizes = [8, 128], strides = [1, 1]} : vector<8x384xf32> to vector<8x128xf32>
    %288 = arith.addf %287, %266 : vector<8x128xf32>
    %289 = arith.mulf %277, %288 : vector<8x128xf32>
    %290 = arith.addf %286, %289 : vector<8x128xf32>
    %291 = math.tanh %290 : vector<8x128xf32>
    %cst_93 = arith.constant 1.000000e+00 : f32
    %292 = vector.broadcast %cst_93 : f32 to vector<8x128xf32>
    %293 = arith.subf %292, %285 : vector<8x128xf32>
    %294 = arith.mulf %293, %291 : vector<8x128xf32>
    %295 = arith.mulf %285, %267 : vector<8x128xf32>
    %296 = arith.addf %294, %295 : vector<8x128xf32>
    %c0_94 = arith.constant 0 : index
    %c0_95 = arith.constant 0 : index
    %297 = vector.load %arg18[%c0_94, %c0_95] : memref<64x128xf32, #tpu.memory_space<vmem>>, vector<8x128xf32>
    tpu.vector_store %arg18[%c0_94, %c0_95], %296 {strides = array<i32>} : memref<64x128xf32, #tpu.memory_space<vmem>>, vector<8x128xf32>,
    %c8_96 = arith.constant 8 : index
    %c0_97 = arith.constant 0 : index
    %298 = vector.load %arg16[%c8_96, %c0_97] : memref<64x384xf32, #tpu.memory_space<vmem>>, vector<8x384xf32>
    %cst_98 = arith.constant dense<0.000000e+00> : vector<8x384xf32>
    %299 = tpu.matmul %296, %257, %cst_98 {dimension_numbers = #tpu.dot_dimension_numbers<[1], [0], [0], [1], [0, 0, 1, 1], [], []>} : vector<8x128xf32>, vector<128x384xf32>, vector<8x384xf32> -> vector<8x384xf32>
    %300 = vector.extract_strided_slice %298 {offsets = [0, 0], sizes = [8, 128], strides = [1, 1]} : vector<8x384xf32> to vector<8x128xf32>
    %301 = vector.extract_strided_slice %299 {offsets = [0, 0], sizes = [8, 128], strides = [1, 1]} : vector<8x384xf32> to vector<8x128xf32>
    %302 = arith.addf %300, %301 : vector<8x128xf32>
    %303 = arith.negf %302 : vector<8x128xf32>
    %304 = math.exp %303 : vector<8x128xf32>
    %cst_99 = arith.constant 1.000000e+00 : f32
    %305 = vector.broadcast %cst_99 : f32 to vector<8x128xf32>
    %306 = arith.addf %305, %304 : vector<8x128xf32>
    %307 = arith.divf %305, %306 : vector<8x128xf32>
    %308 = vector.extract_strided_slice %298 {offsets = [0, 128], sizes = [8, 128], strides = [1, 1]} : vector<8x384xf32> to vector<8x128xf32>
    %309 = vector.extract_strided_slice %299 {offsets = [0, 128], sizes = [8, 128], strides = [1, 1]} : vector<8x384xf32> to vector<8x128xf32>
    %310 = arith.addf %308, %309 : vector<8x128xf32>
    %311 = arith.negf %310 : vector<8x128xf32>
    %312 = math.exp %311 : vector<8x128xf32>
    %cst_100 = arith.constant 1.000000e+00 : f32
    %313 = vector.broadcast %cst_100 : f32 to vector<8x128xf32>
    %314 = arith.addf %313, %312 : vector<8x128xf32>
    %315 = arith.divf %313, %314 : vector<8x128xf32>
    %316 = vector.extract_strided_slice %298 {offsets = [0, 256], sizes = [8, 128], strides = [1, 1]} : vector<8x384xf32> to vector<8x128xf32>
    %317 = vector.extract_strided_slice %299 {offsets = [0, 256], sizes = [8, 128], strides = [1, 1]} : vector<8x384xf32> to vector<8x128xf32>
    %318 = arith.addf %317, %266 : vector<8x128xf32>
    %319 = arith.mulf %307, %318 : vector<8x128xf32>
    %320 = arith.addf %316, %319 : vector<8x128xf32>
    %321 = math.tanh %320 : vector<8x128xf32>
    %cst_101 = arith.constant 1.000000e+00 : f32
    %322 = vector.broadcast %cst_101 : f32 to vector<8x128xf32>
    %323 = arith.subf %322, %315 : vector<8x128xf32>
    %324 = arith.mulf %323, %321 : vector<8x128xf32>
    %325 = arith.mulf %315, %296 : vector<8x128xf32>
    %326 = arith.addf %324, %325 : vector<8x128xf32>
    %c8_102 = arith.constant 8 : index
    %c0_103 = arith.constant 0 : index
    %327 = vector.load %arg18[%c8_102, %c0_103] : memref<64x128xf32, #tpu.memory_space<vmem>>, vector<8x128xf32>
    tpu.vector_store %arg18[%c8_102, %c0_103], %326 {strides = array<i32>} : memref<64x128xf32, #tpu.memory_space<vmem>>, vector<8x128xf32>,
    %c16_104 = arith.constant 16 : index
    %c0_105 = arith.constant 0 : index
    %328 = vector.load %arg16[%c16_104, %c0_105] : memref<64x384xf32, #tpu.memory_space<vmem>>, vector<8x384xf32>
    %cst_106 = arith.constant dense<0.000000e+00> : vector<8x384xf32>
    %329 = tpu.matmul %326, %257, %cst_106 {dimension_numbers = #tpu.dot_dimension_numbers<[1], [0], [0], [1], [0, 0, 1, 1], [], []>} : vector<8x128xf32>, vector<128x384xf32>, vector<8x384xf32> -> vector<8x384xf32>
    %330 = vector.extract_strided_slice %328 {offsets = [0, 0], sizes = [8, 128], strides = [1, 1]} : vector<8x384xf32> to vector<8x128xf32>
    %331 = vector.extract_strided_slice %329 {offsets = [0, 0], sizes = [8, 128], strides = [1, 1]} : vector<8x384xf32> to vector<8x128xf32>
    %332 = arith.addf %330, %331 : vector<8x128xf32>
    %333 = arith.negf %332 : vector<8x128xf32>
    %334 = math.exp %333 : vector<8x128xf32>
    %cst_107 = arith.constant 1.000000e+00 : f32
    %335 = vector.broadcast %cst_107 : f32 to vector<8x128xf32>
    %336 = arith.addf %335, %334 : vector<8x128xf32>
    %337 = arith.divf %335, %336 : vector<8x128xf32>
    %338 = vector.extract_strided_slice %328 {offsets = [0, 128], sizes = [8, 128], strides = [1, 1]} : vector<8x384xf32> to vector<8x128xf32>
    %339 = vector.extract_strided_slice %329 {offsets = [0, 128], sizes = [8, 128], strides = [1, 1]} : vector<8x384xf32> to vector<8x128xf32>
    %340 = arith.addf %338, %339 : vector<8x128xf32>
    %341 = arith.negf %340 : vector<8x128xf32>
    %342 = math.exp %341 : vector<8x128xf32>
    %cst_108 = arith.constant 1.000000e+00 : f32
    %343 = vector.broadcast %cst_108 : f32 to vector<8x128xf32>
    %344 = arith.addf %343, %342 : vector<8x128xf32>
    %345 = arith.divf %343, %344 : vector<8x128xf32>
    %346 = vector.extract_strided_slice %328 {offsets = [0, 256], sizes = [8, 128], strides = [1, 1]} : vector<8x384xf32> to vector<8x128xf32>
    %347 = vector.extract_strided_slice %329 {offsets = [0, 256], sizes = [8, 128], strides = [1, 1]} : vector<8x384xf32> to vector<8x128xf32>
    %348 = arith.addf %347, %266 : vector<8x128xf32>
    %349 = arith.mulf %337, %348 : vector<8x128xf32>
    %350 = arith.addf %346, %349 : vector<8x128xf32>
    %351 = math.tanh %350 : vector<8x128xf32>
    %cst_109 = arith.constant 1.000000e+00 : f32
    %352 = vector.broadcast %cst_109 : f32 to vector<8x128xf32>
    %353 = arith.subf %352, %345 : vector<8x128xf32>
    %354 = arith.mulf %353, %351 : vector<8x128xf32>
    %355 = arith.mulf %345, %326 : vector<8x128xf32>
    %356 = arith.addf %354, %355 : vector<8x128xf32>
    %c16_110 = arith.constant 16 : index
    %c0_111 = arith.constant 0 : index
    %357 = vector.load %arg18[%c16_110, %c0_111] : memref<64x128xf32, #tpu.memory_space<vmem>>, vector<8x128xf32>
    tpu.vector_store %arg18[%c16_110, %c0_111], %356 {strides = array<i32>} : memref<64x128xf32, #tpu.memory_space<vmem>>, vector<8x128xf32>,
    %c24_112 = arith.constant 24 : index
    %c0_113 = arith.constant 0 : index
    %358 = vector.load %arg16[%c24_112, %c0_113] : memref<64x384xf32, #tpu.memory_space<vmem>>, vector<8x384xf32>
    %cst_114 = arith.constant dense<0.000000e+00> : vector<8x384xf32>
    %359 = tpu.matmul %356, %257, %cst_114 {dimension_numbers = #tpu.dot_dimension_numbers<[1], [0], [0], [1], [0, 0, 1, 1], [], []>} : vector<8x128xf32>, vector<128x384xf32>, vector<8x384xf32> -> vector<8x384xf32>
    %360 = vector.extract_strided_slice %358 {offsets = [0, 0], sizes = [8, 128], strides = [1, 1]} : vector<8x384xf32> to vector<8x128xf32>
    %361 = vector.extract_strided_slice %359 {offsets = [0, 0], sizes = [8, 128], strides = [1, 1]} : vector<8x384xf32> to vector<8x128xf32>
    %362 = arith.addf %360, %361 : vector<8x128xf32>
    %363 = arith.negf %362 : vector<8x128xf32>
    %364 = math.exp %363 : vector<8x128xf32>
    %cst_115 = arith.constant 1.000000e+00 : f32
    %365 = vector.broadcast %cst_115 : f32 to vector<8x128xf32>
    %366 = arith.addf %365, %364 : vector<8x128xf32>
    %367 = arith.divf %365, %366 : vector<8x128xf32>
    %368 = vector.extract_strided_slice %358 {offsets = [0, 128], sizes = [8, 128], strides = [1, 1]} : vector<8x384xf32> to vector<8x128xf32>
    %369 = vector.extract_strided_slice %359 {offsets = [0, 128], sizes = [8, 128], strides = [1, 1]} : vector<8x384xf32> to vector<8x128xf32>
    %370 = arith.addf %368, %369 : vector<8x128xf32>
    %371 = arith.negf %370 : vector<8x128xf32>
    %372 = math.exp %371 : vector<8x128xf32>
    %cst_116 = arith.constant 1.000000e+00 : f32
    %373 = vector.broadcast %cst_116 : f32 to vector<8x128xf32>
    %374 = arith.addf %373, %372 : vector<8x128xf32>
    %375 = arith.divf %373, %374 : vector<8x128xf32>
    %376 = vector.extract_strided_slice %358 {offsets = [0, 256], sizes = [8, 128], strides = [1, 1]} : vector<8x384xf32> to vector<8x128xf32>
    %377 = vector.extract_strided_slice %359 {offsets = [0, 256], sizes = [8, 128], strides = [1, 1]} : vector<8x384xf32> to vector<8x128xf32>
    %378 = arith.addf %377, %266 : vector<8x128xf32>
    %379 = arith.mulf %367, %378 : vector<8x128xf32>
    %380 = arith.addf %376, %379 : vector<8x128xf32>
    %381 = math.tanh %380 : vector<8x128xf32>
    %cst_117 = arith.constant 1.000000e+00 : f32
    %382 = vector.broadcast %cst_117 : f32 to vector<8x128xf32>
    %383 = arith.subf %382, %375 : vector<8x128xf32>
    %384 = arith.mulf %383, %381 : vector<8x128xf32>
    %385 = arith.mulf %375, %356 : vector<8x128xf32>
    %386 = arith.addf %384, %385 : vector<8x128xf32>
    %c24_118 = arith.constant 24 : index
    %c0_119 = arith.constant 0 : index
    %387 = vector.load %arg18[%c24_118, %c0_119] : memref<64x128xf32, #tpu.memory_space<vmem>>, vector<8x128xf32>
    tpu.vector_store %arg18[%c24_118, %c0_119], %386 {strides = array<i32>} : memref<64x128xf32, #tpu.memory_space<vmem>>, vector<8x128xf32>,
    %c32_120 = arith.constant 32 : index
    %c0_121 = arith.constant 0 : index
    %388 = vector.load %arg16[%c32_120, %c0_121] : memref<64x384xf32, #tpu.memory_space<vmem>>, vector<8x384xf32>
    %cst_122 = arith.constant dense<0.000000e+00> : vector<8x384xf32>
    %389 = tpu.matmul %386, %257, %cst_122 {dimension_numbers = #tpu.dot_dimension_numbers<[1], [0], [0], [1], [0, 0, 1, 1], [], []>} : vector<8x128xf32>, vector<128x384xf32>, vector<8x384xf32> -> vector<8x384xf32>
    %390 = vector.extract_strided_slice %388 {offsets = [0, 0], sizes = [8, 128], strides = [1, 1]} : vector<8x384xf32> to vector<8x128xf32>
    %391 = vector.extract_strided_slice %389 {offsets = [0, 0], sizes = [8, 128], strides = [1, 1]} : vector<8x384xf32> to vector<8x128xf32>
    %392 = arith.addf %390, %391 : vector<8x128xf32>
    %393 = arith.negf %392 : vector<8x128xf32>
    %394 = math.exp %393 : vector<8x128xf32>
    %cst_123 = arith.constant 1.000000e+00 : f32
    %395 = vector.broadcast %cst_123 : f32 to vector<8x128xf32>
    %396 = arith.addf %395, %394 : vector<8x128xf32>
    %397 = arith.divf %395, %396 : vector<8x128xf32>
    %398 = vector.extract_strided_slice %388 {offsets = [0, 128], sizes = [8, 128], strides = [1, 1]} : vector<8x384xf32> to vector<8x128xf32>
    %399 = vector.extract_strided_slice %389 {offsets = [0, 128], sizes = [8, 128], strides = [1, 1]} : vector<8x384xf32> to vector<8x128xf32>
    %400 = arith.addf %398, %399 : vector<8x128xf32>
    %401 = arith.negf %400 : vector<8x128xf32>
    %402 = math.exp %401 : vector<8x128xf32>
    %cst_124 = arith.constant 1.000000e+00 : f32
    %403 = vector.broadcast %cst_124 : f32 to vector<8x128xf32>
    %404 = arith.addf %403, %402 : vector<8x128xf32>
    %405 = arith.divf %403, %404 : vector<8x128xf32>
    %406 = vector.extract_strided_slice %388 {offsets = [0, 256], sizes = [8, 128], strides = [1, 1]} : vector<8x384xf32> to vector<8x128xf32>
    %407 = vector.extract_strided_slice %389 {offsets = [0, 256], sizes = [8, 128], strides = [1, 1]} : vector<8x384xf32> to vector<8x128xf32>
    %408 = arith.addf %407, %266 : vector<8x128xf32>
    %409 = arith.mulf %397, %408 : vector<8x128xf32>
    %410 = arith.addf %406, %409 : vector<8x128xf32>
    %411 = math.tanh %410 : vector<8x128xf32>
    %cst_125 = arith.constant 1.000000e+00 : f32
    %412 = vector.broadcast %cst_125 : f32 to vector<8x128xf32>
    %413 = arith.subf %412, %405 : vector<8x128xf32>
    %414 = arith.mulf %413, %411 : vector<8x128xf32>
    %415 = arith.mulf %405, %386 : vector<8x128xf32>
    %416 = arith.addf %414, %415 : vector<8x128xf32>
    %c32_126 = arith.constant 32 : index
    %c0_127 = arith.constant 0 : index
    %417 = vector.load %arg18[%c32_126, %c0_127] : memref<64x128xf32, #tpu.memory_space<vmem>>, vector<8x128xf32>
    tpu.vector_store %arg18[%c32_126, %c0_127], %416 {strides = array<i32>} : memref<64x128xf32, #tpu.memory_space<vmem>>, vector<8x128xf32>,
    %c40_128 = arith.constant 40 : index
    %c0_129 = arith.constant 0 : index
    %418 = vector.load %arg16[%c40_128, %c0_129] : memref<64x384xf32, #tpu.memory_space<vmem>>, vector<8x384xf32>
    %cst_130 = arith.constant dense<0.000000e+00> : vector<8x384xf32>
    %419 = tpu.matmul %416, %257, %cst_130 {dimension_numbers = #tpu.dot_dimension_numbers<[1], [0], [0], [1], [0, 0, 1, 1], [], []>} : vector<8x128xf32>, vector<128x384xf32>, vector<8x384xf32> -> vector<8x384xf32>
    %420 = vector.extract_strided_slice %418 {offsets = [0, 0], sizes = [8, 128], strides = [1, 1]} : vector<8x384xf32> to vector<8x128xf32>
    %421 = vector.extract_strided_slice %419 {offsets = [0, 0], sizes = [8, 128], strides = [1, 1]} : vector<8x384xf32> to vector<8x128xf32>
    %422 = arith.addf %420, %421 : vector<8x128xf32>
    %423 = arith.negf %422 : vector<8x128xf32>
    %424 = math.exp %423 : vector<8x128xf32>
    %cst_131 = arith.constant 1.000000e+00 : f32
    %425 = vector.broadcast %cst_131 : f32 to vector<8x128xf32>
    %426 = arith.addf %425, %424 : vector<8x128xf32>
    %427 = arith.divf %425, %426 : vector<8x128xf32>
    %428 = vector.extract_strided_slice %418 {offsets = [0, 128], sizes = [8, 128], strides = [1, 1]} : vector<8x384xf32> to vector<8x128xf32>
    %429 = vector.extract_strided_slice %419 {offsets = [0, 128], sizes = [8, 128], strides = [1, 1]} : vector<8x384xf32> to vector<8x128xf32>
    %430 = arith.addf %428, %429 : vector<8x128xf32>
    %431 = arith.negf %430 : vector<8x128xf32>
    %432 = math.exp %431 : vector<8x128xf32>
    %cst_132 = arith.constant 1.000000e+00 : f32
    %433 = vector.broadcast %cst_132 : f32 to vector<8x128xf32>
    %434 = arith.addf %433, %432 : vector<8x128xf32>
    %435 = arith.divf %433, %434 : vector<8x128xf32>
    %436 = vector.extract_strided_slice %418 {offsets = [0, 256], sizes = [8, 128], strides = [1, 1]} : vector<8x384xf32> to vector<8x128xf32>
    %437 = vector.extract_strided_slice %419 {offsets = [0, 256], sizes = [8, 128], strides = [1, 1]} : vector<8x384xf32> to vector<8x128xf32>
    %438 = arith.addf %437, %266 : vector<8x128xf32>
    %439 = arith.mulf %427, %438 : vector<8x128xf32>
    %440 = arith.addf %436, %439 : vector<8x128xf32>
    %441 = math.tanh %440 : vector<8x128xf32>
    %cst_133 = arith.constant 1.000000e+00 : f32
    %442 = vector.broadcast %cst_133 : f32 to vector<8x128xf32>
    %443 = arith.subf %442, %435 : vector<8x128xf32>
    %444 = arith.mulf %443, %441 : vector<8x128xf32>
    %445 = arith.mulf %435, %416 : vector<8x128xf32>
    %446 = arith.addf %444, %445 : vector<8x128xf32>
    %c40_134 = arith.constant 40 : index
    %c0_135 = arith.constant 0 : index
    %447 = vector.load %arg18[%c40_134, %c0_135] : memref<64x128xf32, #tpu.memory_space<vmem>>, vector<8x128xf32>
    tpu.vector_store %arg18[%c40_134, %c0_135], %446 {strides = array<i32>} : memref<64x128xf32, #tpu.memory_space<vmem>>, vector<8x128xf32>,
    %c48_136 = arith.constant 48 : index
    %c0_137 = arith.constant 0 : index
    %448 = vector.load %arg16[%c48_136, %c0_137] : memref<64x384xf32, #tpu.memory_space<vmem>>, vector<8x384xf32>
    %cst_138 = arith.constant dense<0.000000e+00> : vector<8x384xf32>
    %449 = tpu.matmul %446, %257, %cst_138 {dimension_numbers = #tpu.dot_dimension_numbers<[1], [0], [0], [1], [0, 0, 1, 1], [], []>} : vector<8x128xf32>, vector<128x384xf32>, vector<8x384xf32> -> vector<8x384xf32>
    %450 = vector.extract_strided_slice %448 {offsets = [0, 0], sizes = [8, 128], strides = [1, 1]} : vector<8x384xf32> to vector<8x128xf32>
    %451 = vector.extract_strided_slice %449 {offsets = [0, 0], sizes = [8, 128], strides = [1, 1]} : vector<8x384xf32> to vector<8x128xf32>
    %452 = arith.addf %450, %451 : vector<8x128xf32>
    %453 = arith.negf %452 : vector<8x128xf32>
    %454 = math.exp %453 : vector<8x128xf32>
    %cst_139 = arith.constant 1.000000e+00 : f32
    %455 = vector.broadcast %cst_139 : f32 to vector<8x128xf32>
    %456 = arith.addf %455, %454 : vector<8x128xf32>
    %457 = arith.divf %455, %456 : vector<8x128xf32>
    %458 = vector.extract_strided_slice %448 {offsets = [0, 128], sizes = [8, 128], strides = [1, 1]} : vector<8x384xf32> to vector<8x128xf32>
    %459 = vector.extract_strided_slice %449 {offsets = [0, 128], sizes = [8, 128], strides = [1, 1]} : vector<8x384xf32> to vector<8x128xf32>
    %460 = arith.addf %458, %459 : vector<8x128xf32>
    %461 = arith.negf %460 : vector<8x128xf32>
    %462 = math.exp %461 : vector<8x128xf32>
    %cst_140 = arith.constant 1.000000e+00 : f32
    %463 = vector.broadcast %cst_140 : f32 to vector<8x128xf32>
    %464 = arith.addf %463, %462 : vector<8x128xf32>
    %465 = arith.divf %463, %464 : vector<8x128xf32>
    %466 = vector.extract_strided_slice %448 {offsets = [0, 256], sizes = [8, 128], strides = [1, 1]} : vector<8x384xf32> to vector<8x128xf32>
    %467 = vector.extract_strided_slice %449 {offsets = [0, 256], sizes = [8, 128], strides = [1, 1]} : vector<8x384xf32> to vector<8x128xf32>
    %468 = arith.addf %467, %266 : vector<8x128xf32>
    %469 = arith.mulf %457, %468 : vector<8x128xf32>
    %470 = arith.addf %466, %469 : vector<8x128xf32>
    %471 = math.tanh %470 : vector<8x128xf32>
    %cst_141 = arith.constant 1.000000e+00 : f32
    %472 = vector.broadcast %cst_141 : f32 to vector<8x128xf32>
    %473 = arith.subf %472, %465 : vector<8x128xf32>
    %474 = arith.mulf %473, %471 : vector<8x128xf32>
    %475 = arith.mulf %465, %446 : vector<8x128xf32>
    %476 = arith.addf %474, %475 : vector<8x128xf32>
    %c48_142 = arith.constant 48 : index
    %c0_143 = arith.constant 0 : index
    %477 = vector.load %arg18[%c48_142, %c0_143] : memref<64x128xf32, #tpu.memory_space<vmem>>, vector<8x128xf32>
    tpu.vector_store %arg18[%c48_142, %c0_143], %476 {strides = array<i32>} : memref<64x128xf32, #tpu.memory_space<vmem>>, vector<8x128xf32>,
    %c56_144 = arith.constant 56 : index
    %c0_145 = arith.constant 0 : index
    %478 = vector.load %arg16[%c56_144, %c0_145] : memref<64x384xf32, #tpu.memory_space<vmem>>, vector<8x384xf32>
    %cst_146 = arith.constant dense<0.000000e+00> : vector<8x384xf32>
    %479 = tpu.matmul %476, %257, %cst_146 {dimension_numbers = #tpu.dot_dimension_numbers<[1], [0], [0], [1], [0, 0, 1, 1], [], []>} : vector<8x128xf32>, vector<128x384xf32>, vector<8x384xf32> -> vector<8x384xf32>
    %480 = vector.extract_strided_slice %478 {offsets = [0, 0], sizes = [8, 128], strides = [1, 1]} : vector<8x384xf32> to vector<8x128xf32>
    %481 = vector.extract_strided_slice %479 {offsets = [0, 0], sizes = [8, 128], strides = [1, 1]} : vector<8x384xf32> to vector<8x128xf32>
    %482 = arith.addf %480, %481 : vector<8x128xf32>
    %483 = arith.negf %482 : vector<8x128xf32>
    %484 = math.exp %483 : vector<8x128xf32>
    %cst_147 = arith.constant 1.000000e+00 : f32
    %485 = vector.broadcast %cst_147 : f32 to vector<8x128xf32>
    %486 = arith.addf %485, %484 : vector<8x128xf32>
    %487 = arith.divf %485, %486 : vector<8x128xf32>
    %488 = vector.extract_strided_slice %478 {offsets = [0, 128], sizes = [8, 128], strides = [1, 1]} : vector<8x384xf32> to vector<8x128xf32>
    %489 = vector.extract_strided_slice %479 {offsets = [0, 128], sizes = [8, 128], strides = [1, 1]} : vector<8x384xf32> to vector<8x128xf32>
    %490 = arith.addf %488, %489 : vector<8x128xf32>
    %491 = arith.negf %490 : vector<8x128xf32>
    %492 = math.exp %491 : vector<8x128xf32>
    %cst_148 = arith.constant 1.000000e+00 : f32
    %493 = vector.broadcast %cst_148 : f32 to vector<8x128xf32>
    %494 = arith.addf %493, %492 : vector<8x128xf32>
    %495 = arith.divf %493, %494 : vector<8x128xf32>
    %496 = vector.extract_strided_slice %478 {offsets = [0, 256], sizes = [8, 128], strides = [1, 1]} : vector<8x384xf32> to vector<8x128xf32>
    %497 = vector.extract_strided_slice %479 {offsets = [0, 256], sizes = [8, 128], strides = [1, 1]} : vector<8x384xf32> to vector<8x128xf32>
    %498 = arith.addf %497, %266 : vector<8x128xf32>
    %499 = arith.mulf %487, %498 : vector<8x128xf32>
    %500 = arith.addf %496, %499 : vector<8x128xf32>
    %501 = math.tanh %500 : vector<8x128xf32>
    %cst_149 = arith.constant 1.000000e+00 : f32
    %502 = vector.broadcast %cst_149 : f32 to vector<8x128xf32>
    %503 = arith.subf %502, %495 : vector<8x128xf32>
    %504 = arith.mulf %503, %501 : vector<8x128xf32>
    %505 = arith.mulf %495, %476 : vector<8x128xf32>
    %506 = arith.addf %504, %505 : vector<8x128xf32>
    %c56_150 = arith.constant 56 : index
    %c0_151 = arith.constant 0 : index
    %507 = vector.load %arg18[%c56_150, %c0_151] : memref<64x128xf32, #tpu.memory_space<vmem>>, vector<8x128xf32>
    tpu.vector_store %arg18[%c56_150, %c0_151], %506 {strides = array<i32>} : memref<64x128xf32, #tpu.memory_space<vmem>>, vector<8x128xf32>,
    %c0_152 = arith.constant 0 : index
    %c1 = arith.constant 1 : index
    %c0_153 = arith.constant 0 : index
    %c0_154 = arith.constant 0 : index
    %508 = vector.load %arg15[%c0_152, %c1, %c0_153, %c0_154] : memref<1x2x8x128xf32, #tpu.memory_space<vmem>>, vector<1x1x8x128xf32>
    %509 = vector.shape_cast %508 : vector<1x1x8x128xf32> to vector<8x128xf32>
    %510 = vector.shape_cast %506 : vector<8x128xf32> to vector<1x1x8x128xf32>
    tpu.vector_store %arg15[%c0_152, %c1, %c0_153, %c0_154], %510 {strides = array<i32>} : memref<1x2x8x128xf32, #tpu.memory_space<vmem>>, vector<1x1x8x128xf32>,
    %c0_155 = arith.constant 0 : index
    %c0_156 = arith.constant 0 : index
    %511 = vector.load %arg18[%c0_155, %c0_156] : memref<64x128xf32, #tpu.memory_space<vmem>>, vector<64x128xf32>
    %c0_157 = arith.constant 0 : index
    %c0_158 = arith.constant 0 : index
    %512 = vector.load %arg10[%c0_157, %c0_158] : memref<128x128xf32, #tpu.memory_space<vmem>>, vector<128x128xf32>
    %cst_159 = arith.constant dense<0.000000e+00> : vector<64x128xf32>
    %513 = tpu.matmul %511, %512, %cst_159 {dimension_numbers = #tpu.dot_dimension_numbers<[1], [0], [0], [1], [0, 0, 1, 1], [], []>} : vector<64x128xf32>, vector<128x128xf32>, vector<64x128xf32> -> vector<64x128xf32>
    %c0_160 = arith.constant 0 : index
    %c0_161 = arith.constant 0 : index
    %514 = vector.load %arg11[%c0_160, %c0_161] : memref<1x128xf32, #tpu.memory_space<vmem>>, vector<1x128xf32>
    %515 = vector.broadcast %514 : vector<1x128xf32> to vector<64x128xf32>
    %516 = arith.addf %513, %515 : vector<64x128xf32>
    %cst_162 = arith.constant 0.000000e+00 : f32
    %517 = vector.broadcast %cst_162 : f32 to vector<64x128xf32>
    %518 = arith.maximumf %516, %517 : vector<64x128xf32>
    %c0_163 = arith.constant 0 : index
    %c0_164 = arith.constant 0 : index
    %519 = vector.load %arg12[%c0_163, %c0_164] : memref<128x128xf32, #tpu.memory_space<vmem>>, vector<128x128xf32>
    %cst_165 = arith.constant dense<0.000000e+00> : vector<64x128xf32>
    %520 = tpu.matmul %518, %519, %cst_165 {dimension_numbers = #tpu.dot_dimension_numbers<[1], [0], [0], [1], [0, 0, 1, 1], [], []>} : vector<64x128xf32>, vector<128x128xf32>, vector<64x128xf32> -> vector<64x128xf32>
    %c0_166 = arith.constant 0 : index
    %c0_167 = arith.constant 0 : index
    %521 = vector.load %arg13[%c0_166, %c0_167] : memref<1x128xf32, #tpu.memory_space<vmem>>, vector<1x128xf32>
    %522 = vector.broadcast %521 : vector<1x128xf32> to vector<64x128xf32>
    %523 = arith.addf %520, %522 : vector<64x128xf32>
    %524 = tpu.iota {dimensions = array<i32: 1>} : vector<64x128xi32>
    %c15_i32 = arith.constant 15 : i32
    %525 = vector.broadcast %c15_i32 : i32 to vector<64x128xi32>
    %526 = arith.cmpi sge, %524, %525 : vector<64x128xi32>
    %c21_i32 = arith.constant 21 : i32
    %527 = vector.broadcast %c21_i32 : i32 to vector<64x128xi32>
    %528 = arith.cmpi slt, %524, %527 : vector<64x128xi32>
    %529 = arith.andi %526, %528 : vector<64x128xi1>
    %cst_168 = arith.constant 1.000000e-01 : f32
    %cst_169 = arith.constant 1.000000e+01 : f32
    %530 = vector.broadcast %cst_168 : f32 to vector<64x128xf32>
    %531 = arith.maximumf %530, %523 : vector<64x128xf32>
    %532 = vector.broadcast %cst_169 : f32 to vector<64x128xf32>
    %533 = arith.minimumf %532, %531 : vector<64x128xf32>
    %534 = arith.select %529, %533, %523 : vector<64x128xi1>, vector<64x128xf32>
    %c0_170 = arith.constant 0 : index
    %c0_171 = arith.constant 0 : index
    %c0_172 = arith.constant 0 : index
    %535 = vector.load %arg14[%c0_170, %c0_171, %c0_172] : memref<1x64x128xf32, #tpu.memory_space<vmem>>, vector<1x64x128xf32>
    %536 = vector.shape_cast %535 : vector<1x64x128xf32> to vector<64x128xf32>
    %537 = vector.shape_cast %534 : vector<64x128xf32> to vector<1x64x128xf32>
    tpu.vector_store %arg14[%c0_170, %c0_171, %c0_172], %537 {strides = array<i32>} : memref<1x64x128xf32, #tpu.memory_space<vmem>>, vector<1x64x128xf32>,
    return
  }
  func.func @transform_0(%arg0: i32) -> (i32, i32, i32) {
    %c0_i32 = arith.constant 0 : i32
    %c0_i32_0 = arith.constant 0 : i32
    %c0_i32_1 = arith.constant 0 : i32
    return %arg0, %c0_i32, %c0_i32_0 : i32, i32, i32
  }
  func.func @transform_1(%arg0: i32) -> (i32, i32) {
    %c0_i32 = arith.constant 0 : i32
    %c0_i32_0 = arith.constant 0 : i32
    %c0_i32_1 = arith.constant 0 : i32
    return %c0_i32, %c0_i32_0 : i32, i32
  }
  func.func @transform_2(%arg0: i32) -> (i32, i32) {
    %c0_i32 = arith.constant 0 : i32
    %c0_i32_0 = arith.constant 0 : i32
    %c0_i32_1 = arith.constant 0 : i32
    return %c0_i32, %c0_i32_0 : i32, i32
  }
  func.func @transform_3(%arg0: i32) -> (i32, i32) {
    %c0_i32 = arith.constant 0 : i32
    %c0_i32_0 = arith.constant 0 : i32
    %c0_i32_1 = arith.constant 0 : i32
    return %c0_i32, %c0_i32_0 : i32, i32
  }
  func.func @transform_4(%arg0: i32) -> (i32, i32) {
    %c0_i32 = arith.constant 0 : i32
    %c0_i32_0 = arith.constant 0 : i32
    %c0_i32_1 = arith.constant 0 : i32
    return %c0_i32, %c0_i32_0 : i32, i32
  }
  func.func @transform_5(%arg0: i32) -> (i32, i32) {
    %c0_i32 = arith.constant 0 : i32
    %c0_i32_0 = arith.constant 0 : i32
    %c0_i32_1 = arith.constant 0 : i32
    return %c0_i32, %c0_i32_0 : i32, i32
  }
  func.func @transform_6(%arg0: i32) -> (i32, i32) {
    %c0_i32 = arith.constant 0 : i32
    %c0_i32_0 = arith.constant 0 : i32
    %c0_i32_1 = arith.constant 0 : i32
    return %c0_i32, %c0_i32_0 : i32, i32
  }
  func.func @transform_7(%arg0: i32) -> (i32, i32) {
    %c0_i32 = arith.constant 0 : i32
    %c0_i32_0 = arith.constant 0 : i32
    %c0_i32_1 = arith.constant 0 : i32
    return %c0_i32, %c0_i32_0 : i32, i32
  }
  func.func @transform_8(%arg0: i32) -> (i32, i32) {
    %c0_i32 = arith.constant 0 : i32
    %c0_i32_0 = arith.constant 0 : i32
    %c0_i32_1 = arith.constant 0 : i32
    return %c0_i32, %c0_i32_0 : i32, i32
  }
  func.func @transform_9(%arg0: i32) -> (i32, i32) {
    %c0_i32 = arith.constant 0 : i32
    %c0_i32_0 = arith.constant 0 : i32
    %c0_i32_1 = arith.constant 0 : i32
    return %c0_i32, %c0_i32_0 : i32, i32
  }
  func.func @transform_10(%arg0: i32) -> (i32, i32) {
    %c0_i32 = arith.constant 0 : i32
    %c0_i32_0 = arith.constant 0 : i32
    %c0_i32_1 = arith.constant 0 : i32
    return %c0_i32, %c0_i32_0 : i32, i32
  }
  func.func @transform_11(%arg0: i32) -> (i32, i32) {
    %c0_i32 = arith.constant 0 : i32
    %c0_i32_0 = arith.constant 0 : i32
    %c0_i32_1 = arith.constant 0 : i32
    return %c0_i32, %c0_i32_0 : i32, i32
  }
  func.func @transform_12(%arg0: i32) -> (i32, i32) {
    %c0_i32 = arith.constant 0 : i32
    %c0_i32_0 = arith.constant 0 : i32
    %c0_i32_1 = arith.constant 0 : i32
    return %c0_i32, %c0_i32_0 : i32, i32
  }
  func.func @transform_13(%arg0: i32) -> (i32, i32, i32) {
    %c0_i32 = arith.constant 0 : i32
    %c0_i32_0 = arith.constant 0 : i32
    %c0_i32_1 = arith.constant 0 : i32
    return %arg0, %c0_i32, %c0_i32_0 : i32, i32, i32
  }
  func.func @transform_14(%arg0: i32) -> (i32, i32, i32, i32) {
    %c0_i32 = arith.constant 0 : i32
    %c0_i32_0 = arith.constant 0 : i32
    %c0_i32_1 = arith.constant 0 : i32
    %c0_i32_2 = arith.constant 0 : i32
    return %arg0, %c0_i32, %c0_i32_0, %c0_i32_1 : i32, i32, i32, i32
  }
}

</mosaic_0001>

<llo_original>
// kernel: tpu_custom_call.1
$region0: #{tpu_custom_call.1}
  #allocation0 [shape = 'u32[]', space=smem, size = 0x4, offset = 0x4, fixed_abs, tag = 'smem constant byte address 0x4 - core index']
  #allocation1 [shape = 'u32[72,128]{1,0:T(1,128)}', space=vmem, size = 0x9000, scoped, tag = 'internal scratch']
  #allocation2 [shape = 'f32[64,384]{1,0:T(8,128)}', space=vmem, size = 0x18000, scoped, tag = 'scratch operand']
  #allocation3 [shape = 'f32[64,128]{1,0:T(8,128)}', space=vmem, size = 0x8000, scoped, tag = 'scratch operand']
  #allocation4 [shape = 'f32[64,128]{1,0:T(8,128)}', space=vmem, size = 0x8000, scoped, tag = 'scratch operand']
  %s0 = inlined_call_operand.vmem [shape: f32[1,64,4], index: 0, kind: input, shape index: {}]
  %s1 = inlined_call_operand.vmem [shape: f32[4,384], index: 1, kind: input, shape index: {}]
  %s2 = inlined_call_operand.hbm [shape: f32[128,384], index: 2, kind: input, shape index: {}]
  %s3 = inlined_call_operand.vmem [shape: f32[1,384], index: 3, kind: input, shape index: {}]
  %s4 = inlined_call_operand.vmem [shape: f32[1,128], index: 4, kind: input, shape index: {}]
  %s5 = inlined_call_operand.hbm [shape: f32[128,384], index: 5, kind: input, shape index: {}]
  %s6 = inlined_call_operand.hbm [shape: f32[128,384], index: 6, kind: input, shape index: {}]
  %s7 = inlined_call_operand.vmem [shape: f32[1,384], index: 7, kind: input, shape index: {}]
  %s8 = inlined_call_operand.vmem [shape: f32[1,128], index: 8, kind: input, shape index: {}]
  %s9 = inlined_call_operand.hbm [shape: f32[128,128], index: 9, kind: input, shape index: {}]
  %s10 = inlined_call_operand.vmem [shape: f32[1,128], index: 10, kind: input, shape index: {}]
  %s11 = inlined_call_operand.hbm [shape: f32[128,128], index: 11, kind: input, shape index: {}]
  %s12 = inlined_call_operand.vmem [shape: f32[1,128], index: 12, kind: input, shape index: {}]
  %s13 = inlined_call_operand.hbm [shape: f32[1,64,128], index: 13, kind: output, shape index: {0}]
  %s14 = inlined_call_operand.hbm [shape: f32[1,2,8,128], index: 14, kind: output, shape index: {1}]
  %15 = xla_tuple %s13, %s14
  %s16 = sld [smem:[#allocation0]]
  $region90: #{tpu_custom_call.1} parent=0
    _
  %s18 = ssub.s32 1, %s16
  %s19 = scalar_select 0, %s18, %s16
  $region1: #{tpu_custom_call.1} parent=0
    #allocation5 [shape = 'u8[196608]{0}', space=vmem, size = 0x30000, scoped, tag = 'input window, operand 2, single buffered']
    #allocation6 [shape = 's32[1]{0}', space=sflag, size = 0x4, scoped, tag = 'scoped memory for tpu_custom_call.1']
    #allocation7 [shape = 's32[1]{0}', space=sflag, size = 0x4, scoped, tag = 'scoped memory for tpu_custom_call.1']
    #allocation8 [shape = 'u8[196608]{0}', space=vmem, size = 0x30000, scoped, tag = 'input window, operand 5, single buffered']
    #allocation9 [shape = 's32[1]{0}', space=sflag, size = 0x4, scoped, tag = 'scoped memory for tpu_custom_call.1']
    #allocation10 [shape = 'u8[196608]{0}', space=vmem, size = 0x30000, scoped, tag = 'input window, operand 6, single buffered']
    #allocation11 [shape = 'u8[65536]{0}', space=vmem, size = 0x10000, scoped, tag = 'input window, operand 9, single buffered']
    #allocation12 [shape = 's32[1]{0}', space=sflag, size = 0x4, scoped, tag = 'scoped memory for tpu_custom_call.1']
    #allocation13 [shape = 'u8[65536]{0}', space=vmem, size = 0x10000, scoped, tag = 'input window, operand 11, single buffered']
    #allocation14 [shape = 'u8[32768]{0}', space=vmem, size = 0x8000, scoped, tag = 'output window, operand 0, single buffered']
    #allocation15 [shape = 'u8[8192]{0}', space=vmem, size = 0x2000, scoped, tag = 'output window, operand 1, single buffered']
    #allocation16 [shape = 's32[1]{0}', space=sflag, size = 0x4, scoped, tag = 'scoped memory for tpu_custom_call.1']
    %20 = vsyncpa [#allocation6], 0
    %21 = vsyncpa [#allocation9], 0
    %22 = vsyncpa [#allocation12], 0
    %23 = vsyncpa [#allocation7], 0
    %24 = vsyncpa [#allocation16], 0
    // Predicated region
    $region2: #{tpu_custom_call.1} parent=1 // pred_check
      _
    $region3: #{tpu_custom_call.1} parent=1 // pred_check_branch
      %26 = sbr.rel (0) target = $region5
    $region4: #{tpu_custom_call.1} parent=1 // pred_region
      _
    $region5: #{tpu_custom_call.1} parent=1 // pred_fallthru
      _
    // Predicated region
    $region6: #{tpu_custom_call.1} parent=1 // pred_check
      _
    $region7: #{tpu_custom_call.1} parent=1 // pred_check_branch
      %28 = sbr.rel (0) target = $region9
    $region8: #{tpu_custom_call.1} parent=1 // pred_region
      _
    $region9: #{tpu_custom_call.1} parent=1 // pred_fallthru
      _
    // Predicated region
    $region10: #{tpu_custom_call.1} parent=1 // pred_check
      _
    $region11: #{tpu_custom_call.1} parent=1 // pred_check_branch
      %30 = sbr.rel (0) target = $region13
    $region12: #{tpu_custom_call.1} parent=1 // pred_region
      %32 = vsyncadd [#allocation6], 0
      %s33 = sshll.u32 %s2, 4
      %s34 = int_to_ptr.hbm [resolvable:$true] %s33
      %s35 = sshll.u32 [#allocation5], 4
      %s36 = int_to_ptr.vmem [resolvable:$true] %s35
      %41 = dma.hbm_to_vmem [thread:$0]  %s34, 6144, %s36, [#allocation6], 384, 384, 24
    $region13: #{tpu_custom_call.1} parent=1 // pred_fallthru
      _
    // Predicated region
    $region14: #{tpu_custom_call.1} parent=1 // pred_check
      _
    $region15: #{tpu_custom_call.1} parent=1 // pred_check_branch
      %43 = sbr.rel (0) target = $region17
    $region16: #{tpu_custom_call.1} parent=1 // pred_region
      _
    $region17: #{tpu_custom_call.1} parent=1 // pred_fallthru
      _
    // Predicated region
    $region18: #{tpu_custom_call.1} parent=1 // pred_check
      _
    $region19: #{tpu_custom_call.1} parent=1 // pred_check_branch
      %45 = sbr.rel (0) target = $region21
    $region20: #{tpu_custom_call.1} parent=1 // pred_region
      _
    $region21: #{tpu_custom_call.1} parent=1 // pred_fallthru
      _
    // Predicated region
    $region22: #{tpu_custom_call.1} parent=1 // pred_check
      _
    $region23: #{tpu_custom_call.1} parent=1 // pred_check_branch
      %47 = sbr.rel (0) target = $region25
    $region24: #{tpu_custom_call.1} parent=1 // pred_region
      %49 = vsyncadd [#allocation9], 0
      %s50 = sshll.u32 %s5, 4
      %s51 = int_to_ptr.hbm [resolvable:$true] %s50
      %s52 = sshll.u32 [#allocation8], 4
      %s53 = int_to_ptr.vmem [resolvable:$true] %s52
      %58 = dma.hbm_to_vmem [thread:$0]  %s51, 6144, %s53, [#allocation9], 384, 384, 24
    $region25: #{tpu_custom_call.1} parent=1 // pred_fallthru
      _
    // Predicated region
    $region26: #{tpu_custom_call.1} parent=1 // pred_check
      _
    $region27: #{tpu_custom_call.1} parent=1 // pred_check_branch
      %60 = sbr.rel (0) target = $region29
    $region28: #{tpu_custom_call.1} parent=1 // pred_region
      %62 = vsyncadd [#allocation9], 0
      %s63 = sshll.u32 %s6, 4
      %s64 = int_to_ptr.hbm [resolvable:$true] %s63
      %s65 = sshll.u32 [#allocation10], 4
      %s66 = int_to_ptr.vmem [resolvable:$true] %s65
      %71 = dma.hbm_to_vmem [thread:$0]  %s64, 6144, %s66, [#allocation9], 384, 384, 24
    $region29: #{tpu_custom_call.1} parent=1 // pred_fallthru
      _
    // Predicated region
    $region30: #{tpu_custom_call.1} parent=1 // pred_check
      _
    $region31: #{tpu_custom_call.1} parent=1 // pred_check_branch
      %73 = sbr.rel (0) target = $region33
    $region32: #{tpu_custom_call.1} parent=1 // pred_region
      _
    $region33: #{tpu_custom_call.1} parent=1 // pred_fallthru
      _
    // Predicated region
    $region34: #{tpu_custom_call.1} parent=1 // pred_check
      _
    $region35: #{tpu_custom_call.1} parent=1 // pred_check_branch
      %75 = sbr.rel (0) target = $region37
    $region36: #{tpu_custom_call.1} parent=1 // pred_region
      _
    $region37: #{tpu_custom_call.1} parent=1 // pred_fallthru
      _
    // Predicated region
    $region38: #{tpu_custom_call.1} parent=1 // pred_check
      _
    $region39: #{tpu_custom_call.1} parent=1 // pred_check_branch
      %77 = sbr.rel (0) target = $region41
    $region40: #{tpu_custom_call.1} parent=1 // pred_region
      %79 = vsyncadd [#allocation12], 0
      %s80 = sshll.u32 %s9, 4
      %s81 = int_to_ptr.hbm [resolvable:$true] %s80
      %s82 = sshll.u32 [#allocation11], 4
      %s83 = int_to_ptr.vmem [resolvable:$true] %s82
      %88 = dma.hbm_to_vmem [thread:$0]  %s81, 2048, %s83, [#allocation12], 128, 128, 8
    $region41: #{tpu_custom_call.1} parent=1 // pred_fallthru
      _
    // Predicated region
    $region42: #{tpu_custom_call.1} parent=1 // pred_check
      _
    $region43: #{tpu_custom_call.1} parent=1 // pred_check_branch
      %90 = sbr.rel (0) target = $region45
    $region44: #{tpu_custom_call.1} parent=1 // pred_region
      _
    $region45: #{tpu_custom_call.1} parent=1 // pred_fallthru
      _
    // Predicated region
    $region46: #{tpu_custom_call.1} parent=1 // pred_check
      _
    $region47: #{tpu_custom_call.1} parent=1 // pred_check_branch
      %92 = sbr.rel (0) target = $region49
    $region48: #{tpu_custom_call.1} parent=1 // pred_region
      %94 = vsyncadd [#allocation12], 0
      %s95 = sshll.u32 %s11, 4
      %s96 = int_to_ptr.hbm [resolvable:$true] %s95
      %s97 = sshll.u32 [#allocation13], 4
      %s98 = int_to_ptr.vmem [resolvable:$true] %s97
      %103 = dma.hbm_to_vmem [thread:$0]  %s96, 2048, %s98, [#allocation12], 128, 128, 8
    $region49: #{tpu_custom_call.1} parent=1 // pred_fallthru
      _
    // Predicated region
    $region50: #{tpu_custom_call.1} parent=1 // pred_check
      _
    $region51: #{tpu_custom_call.1} parent=1 // pred_check_branch
      %105 = sbr.rel (0) target = $region53
    $region52: #{tpu_custom_call.1} parent=1 // pred_region
      _
    $region53: #{tpu_custom_call.1} parent=1 // pred_fallthru
      _
    // Predicated region
    $region54: #{tpu_custom_call.1} parent=1 // pred_check
      _
    $region55: #{tpu_custom_call.1} parent=1 // pred_check_branch
      %107 = sbr.rel (0) target = $region57
    $region56: #{tpu_custom_call.1} parent=1 // pred_region
      %109 = dma.done [#allocation6], 6144
    $region57: #{tpu_custom_call.1} parent=1 // pred_fallthru
      _
    // Predicated region
    $region58: #{tpu_custom_call.1} parent=1 // pred_check
      _
    $region59: #{tpu_custom_call.1} parent=1 // pred_check_branch
      %111 = sbr.rel (0) target = $region61
    $region60: #{tpu_custom_call.1} parent=1 // pred_region
      %113 = dma.done [#allocation9], 6144
    $region61: #{tpu_custom_call.1} parent=1 // pred_fallthru
      _
    // Predicated region
    $region62: #{tpu_custom_call.1} parent=1 // pred_check
      _
    $region63: #{tpu_custom_call.1} parent=1 // pred_check_branch
      %115 = sbr.rel (0) target = $region65
    $region64: #{tpu_custom_call.1} parent=1 // pred_region
      %117 = dma.done [#allocation9], 6144
    $region65: #{tpu_custom_call.1} parent=1 // pred_fallthru
      _
    // Predicated region
    $region66: #{tpu_custom_call.1} parent=1 // pred_check
      _
    $region67: #{tpu_custom_call.1} parent=1 // pred_check_branch
      %119 = sbr.rel (0) target = $region69
    $region68: #{tpu_custom_call.1} parent=1 // pred_region
      %121 = dma.done [#allocation12], 2048
    $region69: #{tpu_custom_call.1} parent=1 // pred_fallthru
      _
    // Predicated region
    $region70: #{tpu_custom_call.1} parent=1 // pred_check
      _
    $region71: #{tpu_custom_call.1} parent=1 // pred_check_branch
      %123 = sbr.rel (0) target = $region73
    $region72: #{tpu_custom_call.1} parent=1 // pred_region
      %125 = dma.done [#allocation12], 2048
    $region73: #{tpu_custom_call.1} parent=1 // pred_fallthru
      _
    %v126 = vld [vmem:[%s1] sm:$0xff]
    %v127 = vld [vmem:[%s1 + $0x8] sm:$0xf]
    %v128 = vld [vmem:[#allocation5] sm:$0xff]
    %v129 = vld [vmem:[#allocation5 + $0x8] sm:$0xff]
    %v130 = vld [vmem:[#allocation5 + $0x10] sm:$0xff]
    %v131 = vld [vmem:[#allocation5 + $0x18] sm:$0xff]
    %v132 = vld [vmem:[#allocation5 + $0x20] sm:$0xff]
    %v133 = vld [vmem:[#allocation5 + $0x28] sm:$0xff]
    %v134 = vld [vmem:[#allocation5 + $0x30] sm:$0xff]
    %v135 = vld [vmem:[#allocation5 + $0x38] sm:$0xff]
    %v136 = vld [vmem:[#allocation5 + $0x40] sm:$0xff]
    %v137 = vld [vmem:[#allocation5 + $0x48] sm:$0xff]
    %v138 = vld [vmem:[#allocation5 + $0x50] sm:$0xff]
    %v139 = vld [vmem:[#allocation5 + $0x58] sm:$0xff]
    %v140 = vld [vmem:[#allocation5 + $0x60] sm:$0xff]
    %v141 = vld [vmem:[#allocation5 + $0x68] sm:$0xff]
    %v142 = vld [vmem:[#allocation5 + $0x70] sm:$0xff]
    %v143 = vld [vmem:[#allocation5 + $0x78] sm:$0xff]
    %v144 = vld [vmem:[#allocation5 + $0x80] sm:$0xff]
    %v145 = vld [vmem:[#allocation5 + $0x88] sm:$0xff]
    %v146 = vld [vmem:[#allocation5 + $0x90] sm:$0xff]
    %v147 = vld [vmem:[#allocation5 + $0x98] sm:$0xff]
    %v148 = vld [vmem:[#allocation5 + $0xa0] sm:$0xff]
    %v149 = vld [vmem:[#allocation5 + $0xa8] sm:$0xff]
    %v150 = vld [vmem:[#allocation5 + $0xb0] sm:$0xff]
    %v151 = vld [vmem:[#allocation5 + $0xb8] sm:$0xff]
    %v152 = vld [vmem:[#allocation5 + $0xc0] sm:$0xff]
    %v153 = vld [vmem:[#allocation5 + $0xc8] sm:$0xff]
    %v154 = vld [vmem:[#allocation5 + $0xd0] sm:$0xff]
    %v155 = vld [vmem:[#allocation5 + $0xd8] sm:$0xff]
    %v156 = vld [vmem:[#allocation5 + $0xe0] sm:$0xff]
    %v157 = vld [vmem:[#allocation5 + $0xe8] sm:$0xff]
    %v158 = vld [vmem:[#allocation5 + $0xf0] sm:$0xff]
    %v159 = vld [vmem:[#allocation5 + $0xf8] sm:$0xff]
    %v160 = vld [vmem:[#allocation5 + $0x100] sm:$0xff]
    %v161 = vld [vmem:[#allocation5 + $0x108] sm:$0xff]
    %v162 = vld [vmem:[#allocation5 + $0x110] sm:$0xff]
    %v163 = vld [vmem:[#allocation5 + $0x118] sm:$0xff]
    %v164 = vld [vmem:[#allocation5 + $0x120] sm:$0xff]
    %v165 = vld [vmem:[#allocation5 + $0x128] sm:$0xff]
    %v166 = vld [vmem:[#allocation5 + $0x130] sm:$0xff]
    %v167 = vld [vmem:[#allocation5 + $0x138] sm:$0xff]
    %v168 = vld [vmem:[#allocation5 + $0x140] sm:$0xff]
    %v169 = vld [vmem:[#allocation5 + $0x148] sm:$0xff]
    %v170 = vld [vmem:[#allocation5 + $0x150] sm:$0xff]
    %v171 = vld [vmem:[#allocation5 + $0x158] sm:$0xff]
    %v172 = vld [vmem:[#allocation5 + $0x160] sm:$0xff]
    %v173 = vld [vmem:[#allocation5 + $0x168] sm:$0xff]
    %v174 = vld [vmem:[#allocation5 + $0x170] sm:$0xff]
    %v175 = vld [vmem:[#allocation5 + $0x178] sm:$0xff]
    %v176 = vld [vmem:[%s3] sm:$0x7]
    %v177 = vld [vmem:[%s4] sm:$0x1]
    %v178 = vld [vmem:[%s0] sm:$0xff]
    %v179 = vld [vmem:[%s0 + $0x8] sm:$0xff]
    %v180 = vld [vmem:[%s0 + $0x10] sm:$0xff]
    %v181 = vld [vmem:[%s0 + $0x18] sm:$0xff]
    %v182 = vld [vmem:[%s0 + $0x20] sm:$0xff]
    %v183 = vld [vmem:[%s0 + $0x28] sm:$0xff]
    %v184 = vld [vmem:[%s0 + $0x30] sm:$0xff]
    %v185 = vld [vmem:[%s0 + $0x38] sm:$0xff]
    %v187 = vperm.slane %v176, 0
    %v188 = vperm.slane %v176, 1
    %v189 = vperm.slane %v176, 2
    %195 = vst [vmem:[#allocation1] ss:$2 sm:$0xff] %v126
    %s196 = scalar_lea.vmem [#allocation1], 16
    %197 = vst [vmem:[%s196] ss:$2 sm:$0xff] %v127
    %v198 = vld.sshfl [vmem:[#allocation1] sm:$0xff pattern:$0x75316420]
    %v199 = vld.sshfl [vmem:[#allocation1 + $0x8] sm:$0xff pattern:$0x75316420]
    %v200 = vld.sshfl [vmem:[#allocation1 + $0x10] sm:$0xff pattern:$0x75316420]
    %vm201 = vcmask 31744
    %v203 = vsel %vm201, %v178, 0
    %v206 = vsel %vm201, %v179, 0
    %v209 = vsel %vm201, %v180, 0
    %v212 = vsel %vm201, %v181, 0
    %v215 = vsel %vm201, %v182, 0
    %v218 = vsel %vm201, %v183, 0
    %v221 = vsel %vm201, %v184, 0
    %v224 = vsel %vm201, %v185, 0
    %vm226 = vcmask 1043456
    %v227 = vsel %vm226, %v198, 0
    %v229 = vsel %vm226, %v199, 0
    %v231 = vsel %vm226, %v200, 0
    %233 = vmatpush.msra.mxu0 0.0
    %234 = vmatpush.msra.mxu0 0.0
    %235 = vmatpush.msra.mxu0 0.0
    %236 = vmatpush.msra.mxu0 0.0
    %237 = vmatpush.msra.mxu0 0.0
    %238 = vmatpush.msra.mxu0 0.0
    %239 = vmatpush.msra.mxu0 0.0
    %240 = vmatpush.msra.mxu0 0.0
    %241 = vmatpush.msra.mxu0 0.0
    %242 = vmatpush.msra.mxu0 0.0
    %243 = vmatpush.msra.mxu0 0.0
    %244 = vmatpush.msra.mxu0 0.0
    %245 = vmatpush.msra.mxu0 0.0
    %246 = vmatpush.msra.mxu0 0.0
    %247 = vmatpush.msra.mxu0 0.0
    %248 = vmatpush.msra.mxu0 %v227
    %249 = vmatmul.f32.gmra.mxu0 %v203
    %v250 = vpop.f32.mrf.mxu0
    %v251 = vadd.f32 %v187, %v250
    %252 = vmatmul.f32.gmra.mxu0 %v206
    %v253 = vpop.f32.mrf.mxu0
    %v254 = vadd.f32 %v187, %v253
    %255 = vmatmul.f32.gmra.mxu0 %v209
    %v256 = vpop.f32.mrf.mxu0
    %v257 = vadd.f32 %v187, %v256
    %258 = vmatmul.f32.gmra.mxu0 %v212
    %v259 = vpop.f32.mrf.mxu0
    %v260 = vadd.f32 %v187, %v259
    %261 = vmatmul.f32.gmra.mxu0 %v215
    %v262 = vpop.f32.mrf.mxu0
    %v263 = vadd.f32 %v187, %v262
    %264 = vmatmul.f32.gmra.mxu0 %v218
    %v265 = vpop.f32.mrf.mxu0
    %v266 = vadd.f32 %v187, %v265
    %267 = vmatmul.f32.gmra.mxu0 %v221
    %v268 = vpop.f32.mrf.mxu0
    %v269 = vadd.f32 %v187, %v268
    %270 = vmatmul.f32.gmra.mxu0 %v224
    %v271 = vpop.f32.mrf.mxu0
    %v272 = vadd.f32 %v187, %v271
    %273 = vdwg.mxu0
    %274 = vmatpush.msra.mxu0 0.0
    %275 = vmatpush.msra.mxu0 0.0
    %276 = vmatpush.msra.mxu0 0.0
    %277 = vmatpush.msra.mxu0 0.0
    %278 = vmatpush.msra.mxu0 0.0
    %279 = vmatpush.msra.mxu0 0.0
    %280 = vmatpush.msra.mxu0 0.0
    %281 = vmatpush.msra.mxu0 0.0
    %282 = vmatpush.msra.mxu0 0.0
    %283 = vmatpush.msra.mxu0 0.0
    %284 = vmatpush.msra.mxu0 0.0
    %285 = vmatpush.msra.mxu0 0.0
    %286 = vmatpush.msra.mxu0 0.0
    %287 = vmatpush.msra.mxu0 0.0
    %288 = vmatpush.msra.mxu0 0.0
    %289 = vmatpush.msra.mxu0 %v229
    %290 = vmatmul.f32.gmra.mxu0 %v203
    %v291 = vpop.f32.mrf.mxu0
    %v292 = vadd.f32 %v188, %v291
    %293 = vmatmul.f32.gmra.mxu0 %v206
    %v294 = vpop.f32.mrf.mxu0
    %v295 = vadd.f32 %v188, %v294
    %296 = vmatmul.f32.gmra.mxu0 %v209
    %v297 = vpop.f32.mrf.mxu0
    %v298 = vadd.f32 %v188, %v297
    %299 = vmatmul.f32.gmra.mxu0 %v212
    %v300 = vpop.f32.mrf.mxu0
    %v301 = vadd.f32 %v188, %v300
    %302 = vmatmul.f32.gmra.mxu0 %v215
    %v303 = vpop.f32.mrf.mxu0
    %v304 = vadd.f32 %v188, %v303
    %305 = vmatmul.f32.gmra.mxu0 %v218
    %v306 = vpop.f32.mrf.mxu0
    %v307 = vadd.f32 %v188, %v306
    %308 = vmatmul.f32.gmra.mxu0 %v221
    %v309 = vpop.f32.mrf.mxu0
    %v310 = vadd.f32 %v188, %v309
    %311 = vmatmul.f32.gmra.mxu0 %v224
    %v312 = vpop.f32.mrf.mxu0
    %v313 = vadd.f32 %v188, %v312
    %314 = vdwg.mxu0
    %315 = vmatpush.msra.mxu0 0.0
    %316 = vmatpush.msra.mxu0 0.0
    %317 = vmatpush.msra.mxu0 0.0
    %318 = vmatpush.msra.mxu0 0.0
    %319 = vmatpush.msra.mxu0 0.0
    %320 = vmatpush.msra.mxu0 0.0
    %321 = vmatpush.msra.mxu0 0.0
    %322 = vmatpush.msra.mxu0 0.0
    %323 = vmatpush.msra.mxu0 0.0
    %324 = vmatpush.msra.mxu0 0.0
    %325 = vmatpush.msra.mxu0 0.0
    %326 = vmatpush.msra.mxu0 0.0
    %327 = vmatpush.msra.mxu0 0.0
    %328 = vmatpush.msra.mxu0 0.0
    %329 = vmatpush.msra.mxu0 0.0
    %330 = vmatpush.msra.mxu0 %v231
    %331 = vmatmul.f32.gmra.mxu0 %v203
    %v332 = vpop.f32.mrf.mxu0
    %v333 = vadd.f32 %v189, %v332
    %334 = vmatmul.f32.gmra.mxu0 %v206
    %v335 = vpop.f32.mrf.mxu0
    %v336 = vadd.f32 %v189, %v335
    %337 = vmatmul.f32.gmra.mxu0 %v209
    %v338 = vpop.f32.mrf.mxu0
    %v339 = vadd.f32 %v189, %v338
    %340 = vmatmul.f32.gmra.mxu0 %v212
    %v341 = vpop.f32.mrf.mxu0
    %v342 = vadd.f32 %v189, %v341
    %343 = vmatmul.f32.gmra.mxu0 %v215
    %v344 = vpop.f32.mrf.mxu0
    %v345 = vadd.f32 %v189, %v344
    %346 = vmatmul.f32.gmra.mxu0 %v218
    %v347 = vpop.f32.mrf.mxu0
    %v348 = vadd.f32 %v189, %v347
    %349 = vmatmul.f32.gmra.mxu0 %v221
    %v350 = vpop.f32.mrf.mxu0
    %v351 = vadd.f32 %v189, %v350
    %352 = vmatmul.f32.gmra.mxu0 %v224
    %v353 = vpop.f32.mrf.mxu0
    %v354 = vadd.f32 %v189, %v353
    %355 = vdwg.mxu0
    %356 = vst [vmem:[#allocation2] sm:$0xff] %v251
    %357 = vst [vmem:[#allocation2 + $0x8] sm:$0xff] %v292
    %358 = vst [vmem:[#allocation2 + $0x10] sm:$0xff] %v333
    %359 = vst [vmem:[#allocation2 + $0x18] sm:$0xff] %v254
    %360 = vst [vmem:[#allocation2 + $0x20] sm:$0xff] %v295
    %361 = vst [vmem:[#allocation2 + $0x28] sm:$0xff] %v336
    %362 = vst [vmem:[#allocation2 + $0x30] sm:$0xff] %v257
    %363 = vst [vmem:[#allocation2 + $0x38] sm:$0xff] %v298
    %364 = vst [vmem:[#allocation2 + $0x40] sm:$0xff] %v339
    %365 = vst [vmem:[#allocation2 + $0x48] sm:$0xff] %v260
    %366 = vst [vmem:[#allocation2 + $0x50] sm:$0xff] %v301
    %367 = vst [vmem:[#allocation2 + $0x58] sm:$0xff] %v342
    %368 = vst [vmem:[#allocation2 + $0x60] sm:$0xff] %v263
    %369 = vst [vmem:[#allocation2 + $0x68] sm:$0xff] %v304
    %370 = vst [vmem:[#allocation2 + $0x70] sm:$0xff] %v345
    %371 = vst [vmem:[#allocation2 + $0x78] sm:$0xff] %v266
    %372 = vst [vmem:[#allocation2 + $0x80] sm:$0xff] %v307
    %373 = vst [vmem:[#allocation2 + $0x88] sm:$0xff] %v348
    %374 = vst [vmem:[#allocation2 + $0x90] sm:$0xff] %v269
    %375 = vst [vmem:[#allocation2 + $0x98] sm:$0xff] %v310
    %376 = vst [vmem:[#allocation2 + $0xa0] sm:$0xff] %v351
    %377 = vst [vmem:[#allocation2 + $0xa8] sm:$0xff] %v272
    %378 = vst [vmem:[#allocation2 + $0xb0] sm:$0xff] %v313
    %379 = vst [vmem:[#allocation2 + $0xb8] sm:$0xff] %v354
    %v381 = vperm.slane %v177, 0
    %v383 = vld [vmem:[#allocation2] sm:$0xff]
    %v384 = vld [vmem:[#allocation2 + $0x8] sm:$0xff]
    %v385 = vld [vmem:[#allocation2 + $0x10] sm:$0xff]
    %386 = vmatpush.msra.mxu0 %v173
    %387 = vmatpush.msra.mxu0 %v170
    %388 = vmatpush.msra.mxu0 %v167
    %389 = vmatpush.msra.mxu0 %v164
    %390 = vmatpush.msra.mxu0 %v161
    %391 = vmatpush.msra.mxu0 %v158
    %392 = vmatpush.msra.mxu0 %v155
    %393 = vmatpush.msra.mxu0 %v152
    %394 = vmatpush.msra.mxu0 %v149
    %395 = vmatpush.msra.mxu0 %v146
    %396 = vmatpush.msra.mxu0 %v143
    %397 = vmatpush.msra.mxu0 %v140
    %398 = vmatpush.msra.mxu0 %v137
    %399 = vmatpush.msra.mxu0 %v134
    %400 = vmatpush.msra.mxu0 %v131
    %401 = vmatpush.msra.mxu0 %v128
    %402 = vmatmul.f32.gmra.mxu0 0.0
    %v403 = vpop.f32.mrf.mxu0
    %v404 = vadd.f32 0.0, %v403
    %405 = vdwg.mxu0
    %406 = vmatpush.msra.mxu0 %v174
    %407 = vmatpush.msra.mxu0 %v171
    %408 = vmatpush.msra.mxu0 %v168
    %409 = vmatpush.msra.mxu0 %v165
    %410 = vmatpush.msra.mxu0 %v162
    %411 = vmatpush.msra.mxu0 %v159
    %412 = vmatpush.msra.mxu0 %v156
    %413 = vmatpush.msra.mxu0 %v153
    %414 = vmatpush.msra.mxu0 %v150
    %415 = vmatpush.msra.mxu0 %v147
    %416 = vmatpush.msra.mxu0 %v144
    %417 = vmatpush.msra.mxu0 %v141
    %418 = vmatpush.msra.mxu0 %v138
    %419 = vmatpush.msra.mxu0 %v135
    %420 = vmatpush.msra.mxu0 %v132
    %421 = vmatpush.msra.mxu0 %v129
    %422 = vmatmul.f32.gmra.mxu0 0.0
    %v423 = vpop.f32.mrf.mxu0
    %v424 = vadd.f32 0.0, %v423
    %425 = vdwg.mxu0
    %426 = vmatpush.msra.mxu0 %v175
    %427 = vmatpush.msra.mxu0 %v172
    %428 = vmatpush.msra.mxu0 %v169
    %429 = vmatpush.msra.mxu0 %v166
    %430 = vmatpush.msra.mxu0 %v163
    %431 = vmatpush.msra.mxu0 %v160
    %432 = vmatpush.msra.mxu0 %v157
    %433 = vmatpush.msra.mxu0 %v154
    %434 = vmatpush.msra.mxu0 %v151
    %435 = vmatpush.msra.mxu0 %v148
    %436 = vmatpush.msra.mxu0 %v145
    %437 = vmatpush.msra.mxu0 %v142
    %438 = vmatpush.msra.mxu0 %v139
    %439 = vmatpush.msra.mxu0 %v136
    %440 = vmatpush.msra.mxu0 %v133
    %441 = vmatpush.msra.mxu0 %v130
    %442 = vmatmul.f32.gmra.mxu0 0.0
    %v443 = vpop.f32.mrf.mxu0
    %v444 = vadd.f32 0.0, %v443
    %445 = vdwg.mxu0
    %v446 = vadd.f32 %v383, %v404
    %v447 = vxor.u32 %v446, 2147483648
    %v448 = vmul.f32 %v447, 1.442695
    %v449 = vpow.pop %v448
    %v450 = vadd.f32 %v449, 1.0
    %v451 = vrcp.pop %v450
    %v452 = vmul.f32 %v450, %v451
    %v453 = vsub.f32 1.0, %v452
    %v454 = vmul.f32 %v451, %v453
    %v455 = vadd.f32 %v451, %v454
    %vm456 = vweird.f32 %v450
    %vm457 = vweird.f32 %v451
    %vm458 = vmor %vm456, %vm457
    %v459 = vsel %vm458, %v451, %v455
    %v460 = vand.u32 2147483647, %v450
    %vm461 = vcmp.eq.f32.partialorder %v460, 8.507059e+37
    %v462 = vand.u32 %v450, 2147483648
    %v463 = vor.u32 1.1754944e-38, %v462
    %v464 = vsel %vm461, %v463, %v459
    %v465 = vmul.f32 1.0, %v464
    %v466 = vadd.f32 %v384, %v424
    %v467 = vxor.u32 %v466, 2147483648
    %v468 = vmul.f32 %v467, 1.442695
    %v469 = vpow.pop %v468
    %v470 = vadd.f32 %v469, 1.0
    %v471 = vrcp.pop %v470
    %v472 = vmul.f32 %v470, %v471
    %v473 = vsub.f32 1.0, %v472
    %v474 = vmul.f32 %v471, %v473
    %v475 = vadd.f32 %v471, %v474
    %vm476 = vweird.f32 %v470
    %vm477 = vweird.f32 %v471
    %vm478 = vmor %vm476, %vm477
    %v479 = vsel %vm478, %v471, %v475
    %v480 = vand.u32 2147483647, %v470
    %vm481 = vcmp.eq.f32.partialorder %v480, 8.507059e+37
    %v482 = vand.u32 %v470, 2147483648
    %v483 = vor.u32 1.1754944e-38, %v482
    %v484 = vsel %vm481, %v483, %v479
    %v485 = vmul.f32 1.0, %v484
    %v486 = vadd.f32 %v444, %v381
    %v487 = vmul.f32 %v465, %v486
    %v488 = vadd.f32 %v385, %v487
    %v489 = vtanh.pop %v488
    %v490 = vsub.f32 1.0, %v485
    %v491 = vmul.f32 %v490, %v489
    %v492 = vmul.f32 %v485, 0.0
    %v493 = vadd.f32 %v491, %v492
    %494 = vst [vmem:[#allocation3] sm:$0xff] %v493
    %v495 = vld [vmem:[#allocation2 + $0x18] sm:$0xff]
    %v496 = vld [vmem:[#allocation2 + $0x20] sm:$0xff]
    %v497 = vld [vmem:[#allocation2 + $0x28] sm:$0xff]
    %498 = vmatpush.msra.mxu0 %v173
    %499 = vmatpush.msra.mxu0 %v170
    %500 = vmatpush.msra.mxu0 %v167
    %501 = vmatpush.msra.mxu0 %v164
    %502 = vmatpush.msra.mxu0 %v161
    %503 = vmatpush.msra.mxu0 %v158
    %504 = vmatpush.msra.mxu0 %v155
    %505 = vmatpush.msra.mxu0 %v152
    %506 = vmatpush.msra.mxu0 %v149
    %507 = vmatpush.msra.mxu0 %v146
    %508 = vmatpush.msra.mxu0 %v143
    %509 = vmatpush.msra.mxu0 %v140
    %510 = vmatpush.msra.mxu0 %v137
    %511 = vmatpush.msra.mxu0 %v134
    %512 = vmatpush.msra.mxu0 %v131
    %513 = vmatpush.msra.mxu0 %v128
    %514 = vmatmul.f32.gmra.mxu0 %v493
    %v515 = vpop.f32.mrf.mxu0
    %v516 = vadd.f32 0.0, %v515
    %517 = vdwg.mxu0
    %518 = vmatpush.msra.mxu0 %v174
    %519 = vmatpush.msra.mxu0 %v171
    %520 = vmatpush.msra.mxu0 %v168
    %521 = vmatpush.msra.mxu0 %v165
    %522 = vmatpush.msra.mxu0 %v162
    %523 = vmatpush.msra.mxu0 %v159
    %524 = vmatpush.msra.mxu0 %v156
    %525 = vmatpush.msra.mxu0 %v153
    %526 = vmatpush.msra.mxu0 %v150
    %527 = vmatpush.msra.mxu0 %v147
    %528 = vmatpush.msra.mxu0 %v144
    %529 = vmatpush.msra.mxu0 %v141
    %530 = vmatpush.msra.mxu0 %v138
    %531 = vmatpush.msra.mxu0 %v135
    %532 = vmatpush.msra.mxu0 %v132
    %533 = vmatpush.msra.mxu0 %v129
    %534 = vmatmul.f32.gmra.mxu0 %v493
    %v535 = vpop.f32.mrf.mxu0
    %v536 = vadd.f32 0.0, %v535
    %537 = vdwg.mxu0
    %538 = vmatpush.msra.mxu0 %v175
    %539 = vmatpush.msra.mxu0 %v172
    %540 = vmatpush.msra.mxu0 %v169
    %541 = vmatpush.msra.mxu0 %v166
    %542 = vmatpush.msra.mxu0 %v163
    %543 = vmatpush.msra.mxu0 %v160
    %544 = vmatpush.msra.mxu0 %v157
    %545 = vmatpush.msra.mxu0 %v154
    %546 = vmatpush.msra.mxu0 %v151
    %547 = vmatpush.msra.mxu0 %v148
    %548 = vmatpush.msra.mxu0 %v145
    %549 = vmatpush.msra.mxu0 %v142
    %550 = vmatpush.msra.mxu0 %v139
    %551 = vmatpush.msra.mxu0 %v136
    %552 = vmatpush.msra.mxu0 %v133
    %553 = vmatpush.msra.mxu0 %v130
    %554 = vmatmul.f32.gmra.mxu0 %v493
    %v555 = vpop.f32.mrf.mxu0
    %v556 = vadd.f32 0.0, %v555
    %557 = vdwg.mxu0
    %v558 = vadd.f32 %v495, %v516
    %v559 = vxor.u32 %v558, 2147483648
    %v560 = vmul.f32 %v559, 1.442695
    %v561 = vpow.pop %v560
    %v562 = vadd.f32 %v561, 1.0
    %v563 = vrcp.pop %v562
    %v564 = vmul.f32 %v562, %v563
    %v565 = vsub.f32 1.0, %v564
    %v566 = vmul.f32 %v563, %v565
    %v567 = vadd.f32 %v563, %v566
    %vm568 = vweird.f32 %v562
    %vm569 = vweird.f32 %v563
    %vm570 = vmor %vm568, %vm569
    %v571 = vsel %vm570, %v563, %v567
    %v572 = vand.u32 2147483647, %v562
    %vm573 = vcmp.eq.f32.partialorder %v572, 8.507059e+37
    %v574 = vand.u32 %v562, 2147483648
    %v575 = vor.u32 1.1754944e-38, %v574
    %v576 = vsel %vm573, %v575, %v571
    %v577 = vmul.f32 1.0, %v576
    %v578 = vadd.f32 %v496, %v536
    %v579 = vxor.u32 %v578, 2147483648
    %v580 = vmul.f32 %v579, 1.442695
    %v581 = vpow.pop %v580
    %v582 = vadd.f32 %v581, 1.0
    %v583 = vrcp.pop %v582
    %v584 = vmul.f32 %v582, %v583
    %v585 = vsub.f32 1.0, %v584
    %v586 = vmul.f32 %v583, %v585
    %v587 = vadd.f32 %v583, %v586
    %vm588 = vweird.f32 %v582
    %vm589 = vweird.f32 %v583
    %vm590 = vmor %vm588, %vm589
    %v591 = vsel %vm590, %v583, %v587
    %v592 = vand.u32 2147483647, %v582
    %vm593 = vcmp.eq.f32.partialorder %v592, 8.507059e+37
    %v594 = vand.u32 %v582, 2147483648
    %v595 = vor.u32 1.1754944e-38, %v594
    %v596 = vsel %vm593, %v595, %v591
    %v597 = vmul.f32 1.0, %v596
    %v598 = vadd.f32 %v556, %v381
    %v599 = vmul.f32 %v577, %v598
    %v600 = vadd.f32 %v497, %v599
    %v601 = vtanh.pop %v600
    %v602 = vsub.f32 1.0, %v597
    %v603 = vmul.f32 %v602, %v601
    %v604 = vmul.f32 %v597, %v493
    %v605 = vadd.f32 %v603, %v604
    %606 = vst [vmem:[#allocation3 + $0x8] sm:$0xff] %v605
    %v607 = vld [vmem:[#allocation2 + $0x30] sm:$0xff]
    %v608 = vld [vmem:[#allocation2 + $0x38] sm:$0xff]
    %v609 = vld [vmem:[#allocation2 + $0x40] sm:$0xff]
    %610 = vmatpush.msra.mxu0 %v173
    %611 = vmatpush.msra.mxu0 %v170
    %612 = vmatpush.msra.mxu0 %v167
    %613 = vmatpush.msra.mxu0 %v164
    %614 = vmatpush.msra.mxu0 %v161
    %615 = vmatpush.msra.mxu0 %v158
    %616 = vmatpush.msra.mxu0 %v155
    %617 = vmatpush.msra.mxu0 %v152
    %618 = vmatpush.msra.mxu0 %v149
    %619 = vmatpush.msra.mxu0 %v146
    %620 = vmatpush.msra.mxu0 %v143
    %621 = vmatpush.msra.mxu0 %v140
    %622 = vmatpush.msra.mxu0 %v137
    %623 = vmatpush.msra.mxu0 %v134
    %624 = vmatpush.msra.mxu0 %v131
    %625 = vmatpush.msra.mxu0 %v128
    %626 = vmatmul.f32.gmra.mxu0 %v605
    %v627 = vpop.f32.mrf.mxu0
    %v628 = vadd.f32 0.0, %v627
    %629 = vdwg.mxu0
    %630 = vmatpush.msra.mxu0 %v174
    %631 = vmatpush.msra.mxu0 %v171
    %632 = vmatpush.msra.mxu0 %v168
    %633 = vmatpush.msra.mxu0 %v165
    %634 = vmatpush.msra.mxu0 %v162
    %635 = vmatpush.msra.mxu0 %v159
    %636 = vmatpush.msra.mxu0 %v156
    %637 = vmatpush.msra.mxu0 %v153
    %638 = vmatpush.msra.mxu0 %v150
    %639 = vmatpush.msra.mxu0 %v147
    %640 = vmatpush.msra.mxu0 %v144
    %641 = vmatpush.msra.mxu0 %v141
    %642 = vmatpush.msra.mxu0 %v138
    %643 = vmatpush.msra.mxu0 %v135
    %644 = vmatpush.msra.mxu0 %v132
    %645 = vmatpush.msra.mxu0 %v129
    %646 = vmatmul.f32.gmra.mxu0 %v605
    %v647 = vpop.f32.mrf.mxu0
    %v648 = vadd.f32 0.0, %v647
    %649 = vdwg.mxu0
    %650 = vmatpush.msra.mxu0 %v175
    %651 = vmatpush.msra.mxu0 %v172
    %652 = vmatpush.msra.mxu0 %v169
    %653 = vmatpush.msra.mxu0 %v166
    %654 = vmatpush.msra.mxu0 %v163
    %655 = vmatpush.msra.mxu0 %v160
    %656 = vmatpush.msra.mxu0 %v157
    %657 = vmatpush.msra.mxu0 %v154
    %658 = vmatpush.msra.mxu0 %v151
    %659 = vmatpush.msra.mxu0 %v148
    %660 = vmatpush.msra.mxu0 %v145
    %661 = vmatpush.msra.mxu0 %v142
    %662 = vmatpush.msra.mxu0 %v139
    %663 = vmatpush.msra.mxu0 %v136
    %664 = vmatpush.msra.mxu0 %v133
    %665 = vmatpush.msra.mxu0 %v130
    %666 = vmatmul.f32.gmra.mxu0 %v605
    %v667 = vpop.f32.mrf.mxu0
    %v668 = vadd.f32 0.0, %v667
    %669 = vdwg.mxu0
    %v670 = vadd.f32 %v607, %v628
    %v671 = vxor.u32 %v670, 2147483648
    %v672 = vmul.f32 %v671, 1.442695
    %v673 = vpow.pop %v672
    %v674 = vadd.f32 %v673, 1.0
    %v675 = vrcp.pop %v674
    %v676 = vmul.f32 %v674, %v675
    %v677 = vsub.f32 1.0, %v676
    %v678 = vmul.f32 %v675, %v677
    %v679 = vadd.f32 %v675, %v678
    %vm680 = vweird.f32 %v674
    %vm681 = vweird.f32 %v675
    %vm682 = vmor %vm680, %vm681
    %v683 = vsel %vm682, %v675, %v679
    %v684 = vand.u32 2147483647, %v674
    %vm685 = vcmp.eq.f32.partialorder %v684, 8.507059e+37
    %v686 = vand.u32 %v674, 2147483648
    %v687 = vor.u32 1.1754944e-38, %v686
    %v688 = vsel %vm685, %v687, %v683
    %v689 = vmul.f32 1.0, %v688
    %v690 = vadd.f32 %v608, %v648
    %v691 = vxor.u32 %v690, 2147483648
    %v692 = vmul.f32 %v691, 1.442695
    %v693 = vpow.pop %v692
    %v694 = vadd.f32 %v693, 1.0
    %v695 = vrcp.pop %v694
    %v696 = vmul.f32 %v694, %v695
    %v697 = vsub.f32 1.0, %v696
    %v698 = vmul.f32 %v695, %v697
    %v699 = vadd.f32 %v695, %v698
    %vm700 = vweird.f32 %v694
    %vm701 = vweird.f32 %v695
    %vm702 = vmor %vm700, %vm701
    %v703 = vsel %vm702, %v695, %v699
    %v704 = vand.u32 2147483647, %v694
    %vm705 = vcmp.eq.f32.partialorder %v704, 8.507059e+37
    %v706 = vand.u32 %v694, 2147483648
    %v707 = vor.u32 1.1754944e-38, %v706
    %v708 = vsel %vm705, %v707, %v703
    %v709 = vmul.f32 1.0, %v708
    %v710 = vadd.f32 %v668, %v381
    %v711 = vmul.f32 %v689, %v710
    %v712 = vadd.f32 %v609, %v711
    %v713 = vtanh.pop %v712
    %v714 = vsub.f32 1.0, %v709
    %v715 = vmul.f32 %v714, %v713
    %v716 = vmul.f32 %v709, %v605
    %v717 = vadd.f32 %v715, %v716
    %718 = vst [vmem:[#allocation3 + $0x10] sm:$0xff] %v717
    %v719 = vld [vmem:[#allocation2 + $0x48] sm:$0xff]
    %v720 = vld [vmem:[#allocation2 + $0x50] sm:$0xff]
    %v721 = vld [vmem:[#allocation2 + $0x58] sm:$0xff]
    %722 = vmatpush.msra.mxu0 %v173
    %723 = vmatpush.msra.mxu0 %v170
    %724 = vmatpush.msra.mxu0 %v167
    %725 = vmatpush.msra.mxu0 %v164
    %726 = vmatpush.msra.mxu0 %v161
    %727 = vmatpush.msra.mxu0 %v158
    %728 = vmatpush.msra.mxu0 %v155
    %729 = vmatpush.msra.mxu0 %v152
    %730 = vmatpush.msra.mxu0 %v149
    %731 = vmatpush.msra.mxu0 %v146
    %732 = vmatpush.msra.mxu0 %v143
    %733 = vmatpush.msra.mxu0 %v140
    %734 = vmatpush.msra.mxu0 %v137
    %735 = vmatpush.msra.mxu0 %v134
    %736 = vmatpush.msra.mxu0 %v131
    %737 = vmatpush.msra.mxu0 %v128
    %738 = vmatmul.f32.gmra.mxu0 %v717
    %v739 = vpop.f32.mrf.mxu0
    %v740 = vadd.f32 0.0, %v739
    %741 = vdwg.mxu0
    %742 = vmatpush.msra.mxu0 %v174
    %743 = vmatpush.msra.mxu0 %v171
    %744 = vmatpush.msra.mxu0 %v168
    %745 = vmatpush.msra.mxu0 %v165
    %746 = vmatpush.msra.mxu0 %v162
    %747 = vmatpush.msra.mxu0 %v159
    %748 = vmatpush.msra.mxu0 %v156
    %749 = vmatpush.msra.mxu0 %v153
    %750 = vmatpush.msra.mxu0 %v150
    %751 = vmatpush.msra.mxu0 %v147
    %752 = vmatpush.msra.mxu0 %v144
    %753 = vmatpush.msra.mxu0 %v141
    %754 = vmatpush.msra.mxu0 %v138
    %755 = vmatpush.msra.mxu0 %v135
    %756 = vmatpush.msra.mxu0 %v132
    %757 = vmatpush.msra.mxu0 %v129
    %758 = vmatmul.f32.gmra.mxu0 %v717
    %v759 = vpop.f32.mrf.mxu0
    %v760 = vadd.f32 0.0, %v759
    %761 = vdwg.mxu0
    %762 = vmatpush.msra.mxu0 %v175
    %763 = vmatpush.msra.mxu0 %v172
    %764 = vmatpush.msra.mxu0 %v169
    %765 = vmatpush.msra.mxu0 %v166
    %766 = vmatpush.msra.mxu0 %v163
    %767 = vmatpush.msra.mxu0 %v160
    %768 = vmatpush.msra.mxu0 %v157
    %769 = vmatpush.msra.mxu0 %v154
    %770 = vmatpush.msra.mxu0 %v151
    %771 = vmatpush.msra.mxu0 %v148
    %772 = vmatpush.msra.mxu0 %v145
    %773 = vmatpush.msra.mxu0 %v142
    %774 = vmatpush.msra.mxu0 %v139
    %775 = vmatpush.msra.mxu0 %v136
    %776 = vmatpush.msra.mxu0 %v133
    %777 = vmatpush.msra.mxu0 %v130
    %778 = vmatmul.f32.gmra.mxu0 %v717
    %v779 = vpop.f32.mrf.mxu0
    %v780 = vadd.f32 0.0, %v779
    %781 = vdwg.mxu0
    %v782 = vadd.f32 %v719, %v740
    %v783 = vxor.u32 %v782, 2147483648
    %v784 = vmul.f32 %v783, 1.442695
    %v785 = vpow.pop %v784
    %v786 = vadd.f32 %v785, 1.0
    %v787 = vrcp.pop %v786
    %v788 = vmul.f32 %v786, %v787
    %v789 = vsub.f32 1.0, %v788
    %v790 = vmul.f32 %v787, %v789
    %v791 = vadd.f32 %v787, %v790
    %vm792 = vweird.f32 %v786
    %vm793 = vweird.f32 %v787
    %vm794 = vmor %vm792, %vm793
    %v795 = vsel %vm794, %v787, %v791
    %v796 = vand.u32 2147483647, %v786
    %vm797 = vcmp.eq.f32.partialorder %v796, 8.507059e+37
    %v798 = vand.u32 %v786, 2147483648
    %v799 = vor.u32 1.1754944e-38, %v798
    %v800 = vsel %vm797, %v799, %v795
    %v801 = vmul.f32 1.0, %v800
    %v802 = vadd.f32 %v720, %v760
    %v803 = vxor.u32 %v802, 2147483648
    %v804 = vmul.f32 %v803, 1.442695
    %v805 = vpow.pop %v804
    %v806 = vadd.f32 %v805, 1.0
    %v807 = vrcp.pop %v806
    %v808 = vmul.f32 %v806, %v807
    %v809 = vsub.f32 1.0, %v808
    %v810 = vmul.f32 %v807, %v809
    %v811 = vadd.f32 %v807, %v810
    %vm812 = vweird.f32 %v806
    %vm813 = vweird.f32 %v807
    %vm814 = vmor %vm812, %vm813
    %v815 = vsel %vm814, %v807, %v811
    %v816 = vand.u32 2147483647, %v806
    %vm817 = vcmp.eq.f32.partialorder %v816, 8.507059e+37
    %v818 = vand.u32 %v806, 2147483648
    %v819 = vor.u32 1.1754944e-38, %v818
    %v820 = vsel %vm817, %v819, %v815
    %v821 = vmul.f32 1.0, %v820
    %v822 = vadd.f32 %v780, %v381
    %v823 = vmul.f32 %v801, %v822
    %v824 = vadd.f32 %v721, %v823
    %v825 = vtanh.pop %v824
    %v826 = vsub.f32 1.0, %v821
    %v827 = vmul.f32 %v826, %v825
    %v828 = vmul.f32 %v821, %v717
    %v829 = vadd.f32 %v827, %v828
    %830 = vst [vmem:[#allocation3 + $0x18] sm:$0xff] %v829
    %v831 = vld [vmem:[#allocation2 + $0x60] sm:$0xff]
    %v832 = vld [vmem:[#allocation2 + $0x68] sm:$0xff]
    %v833 = vld [vmem:[#allocation2 + $0x70] sm:$0xff]
    %834 = vmatpush.msra.mxu0 %v173
    %835 = vmatpush.msra.mxu0 %v170
    %836 = vmatpush.msra.mxu0 %v167
    %837 = vmatpush.msra.mxu0 %v164
    %838 = vmatpush.msra.mxu0 %v161
    %839 = vmatpush.msra.mxu0 %v158
    %840 = vmatpush.msra.mxu0 %v155
    %841 = vmatpush.msra.mxu0 %v152
    %842 = vmatpush.msra.mxu0 %v149
    %843 = vmatpush.msra.mxu0 %v146
    %844 = vmatpush.msra.mxu0 %v143
    %845 = vmatpush.msra.mxu0 %v140
    %846 = vmatpush.msra.mxu0 %v137
    %847 = vmatpush.msra.mxu0 %v134
    %848 = vmatpush.msra.mxu0 %v131
    %849 = vmatpush.msra.mxu0 %v128
    %850 = vmatmul.f32.gmra.mxu0 %v829
    %v851 = vpop.f32.mrf.mxu0
    %v852 = vadd.f32 0.0, %v851
    %853 = vdwg.mxu0
    %854 = vmatpush.msra.mxu0 %v174
    %855 = vmatpush.msra.mxu0 %v171
    %856 = vmatpush.msra.mxu0 %v168
    %857 = vmatpush.msra.mxu0 %v165
    %858 = vmatpush.msra.mxu0 %v162
    %859 = vmatpush.msra.mxu0 %v159
    %860 = vmatpush.msra.mxu0 %v156
    %861 = vmatpush.msra.mxu0 %v153
    %862 = vmatpush.msra.mxu0 %v150
    %863 = vmatpush.msra.mxu0 %v147
    %864 = vmatpush.msra.mxu0 %v144
    %865 = vmatpush.msra.mxu0 %v141
    %866 = vmatpush.msra.mxu0 %v138
    %867 = vmatpush.msra.mxu0 %v135
    %868 = vmatpush.msra.mxu0 %v132
    %869 = vmatpush.msra.mxu0 %v129
    %870 = vmatmul.f32.gmra.mxu0 %v829
    %v871 = vpop.f32.mrf.mxu0
    %v872 = vadd.f32 0.0, %v871
    %873 = vdwg.mxu0
    %874 = vmatpush.msra.mxu0 %v175
    %875 = vmatpush.msra.mxu0 %v172
    %876 = vmatpush.msra.mxu0 %v169
    %877 = vmatpush.msra.mxu0 %v166
    %878 = vmatpush.msra.mxu0 %v163
    %879 = vmatpush.msra.mxu0 %v160
    %880 = vmatpush.msra.mxu0 %v157
    %881 = vmatpush.msra.mxu0 %v154
    %882 = vmatpush.msra.mxu0 %v151
    %883 = vmatpush.msra.mxu0 %v148
    %884 = vmatpush.msra.mxu0 %v145
    %885 = vmatpush.msra.mxu0 %v142
    %886 = vmatpush.msra.mxu0 %v139
    %887 = vmatpush.msra.mxu0 %v136
    %888 = vmatpush.msra.mxu0 %v133
    %889 = vmatpush.msra.mxu0 %v130
    %890 = vmatmul.f32.gmra.mxu0 %v829
    %v891 = vpop.f32.mrf.mxu0
    %v892 = vadd.f32 0.0, %v891
    %893 = vdwg.mxu0
    %v894 = vadd.f32 %v831, %v852
    %v895 = vxor.u32 %v894, 2147483648
    %v896 = vmul.f32 %v895, 1.442695
    %v897 = vpow.pop %v896
    %v898 = vadd.f32 %v897, 1.0
    %v899 = vrcp.pop %v898
    %v900 = vmul.f32 %v898, %v899
    %v901 = vsub.f32 1.0, %v900
    %v902 = vmul.f32 %v899, %v901
    %v903 = vadd.f32 %v899, %v902
    %vm904 = vweird.f32 %v898
    %vm905 = vweird.f32 %v899
    %vm906 = vmor %vm904, %vm905
    %v907 = vsel %vm906, %v899, %v903
    %v908 = vand.u32 2147483647, %v898
    %vm909 = vcmp.eq.f32.partialorder %v908, 8.507059e+37
    %v910 = vand.u32 %v898, 2147483648
    %v911 = vor.u32 1.1754944e-38, %v910
    %v912 = vsel %vm909, %v911, %v907
    %v913 = vmul.f32 1.0, %v912
    %v914 = vadd.f32 %v832, %v872
    %v915 = vxor.u32 %v914, 2147483648
    %v916 = vmul.f32 %v915, 1.442695
    %v917 = vpow.pop %v916
    %v918 = vadd.f32 %v917, 1.0
    %v919 = vrcp.pop %v918
    %v920 = vmul.f32 %v918, %v919
    %v921 = vsub.f32 1.0, %v920
    %v922 = vmul.f32 %v919, %v921
    %v923 = vadd.f32 %v919, %v922
    %vm924 = vweird.f32 %v918
    %vm925 = vweird.f32 %v919
    %vm926 = vmor %vm924, %vm925
    %v927 = vsel %vm926, %v919, %v923
    %v928 = vand.u32 2147483647, %v918
    %vm929 = vcmp.eq.f32.partialorder %v928, 8.507059e+37
    %v930 = vand.u32 %v918, 2147483648
    %v931 = vor.u32 1.1754944e-38, %v930
    %v932 = vsel %vm929, %v931, %v927
    %v933 = vmul.f32 1.0, %v932
    %v934 = vadd.f32 %v892, %v381
    %v935 = vmul.f32 %v913, %v934
    %v936 = vadd.f32 %v833, %v935
    %v937 = vtanh.pop %v936
    %v938 = vsub.f32 1.0, %v933
    %v939 = vmul.f32 %v938, %v937
    %v940 = vmul.f32 %v933, %v829
    %v941 = vadd.f32 %v939, %v940
    %942 = vst [vmem:[#allocation3 + $0x20] sm:$0xff] %v941
    %v943 = vld [vmem:[#allocation2 + $0x78] sm:$0xff]
    %v944 = vld [vmem:[#allocation2 + $0x80] sm:$0xff]
    %v945 = vld [vmem:[#allocation2 + $0x88] sm:$0xff]
    %946 = vmatpush.msra.mxu0 %v173
    %947 = vmatpush.msra.mxu0 %v170
    %948 = vmatpush.msra.mxu0 %v167
    %949 = vmatpush.msra.mxu0 %v164
    %950 = vmatpush.msra.mxu0 %v161
    %951 = vmatpush.msra.mxu0 %v158
    %952 = vmatpush.msra.mxu0 %v155
    %953 = vmatpush.msra.mxu0 %v152
    %954 = vmatpush.msra.mxu0 %v149
    %955 = vmatpush.msra.mxu0 %v146
    %956 = vmatpush.msra.mxu0 %v143
    %957 = vmatpush.msra.mxu0 %v140
    %958 = vmatpush.msra.mxu0 %v137
    %959 = vmatpush.msra.mxu0 %v134
    %960 = vmatpush.msra.mxu0 %v131
    %961 = vmatpush.msra.mxu0 %v128
    %962 = vmatmul.f32.gmra.mxu0 %v941
    %v963 = vpop.f32.mrf.mxu0
    %v964 = vadd.f32 0.0, %v963
    %965 = vdwg.mxu0
    %966 = vmatpush.msra.mxu0 %v174
    %967 = vmatpush.msra.mxu0 %v171
    %968 = vmatpush.msra.mxu0 %v168
    %969 = vmatpush.msra.mxu0 %v165
    %970 = vmatpush.msra.mxu0 %v162
    %971 = vmatpush.msra.mxu0 %v159
    %972 = vmatpush.msra.mxu0 %v156
    %973 = vmatpush.msra.mxu0 %v153
    %974 = vmatpush.msra.mxu0 %v150
    %975 = vmatpush.msra.mxu0 %v147
    %976 = vmatpush.msra.mxu0 %v144
    %977 = vmatpush.msra.mxu0 %v141
    %978 = vmatpush.msra.mxu0 %v138
    %979 = vmatpush.msra.mxu0 %v135
    %980 = vmatpush.msra.mxu0 %v132
    %981 = vmatpush.msra.mxu0 %v129
    %982 = vmatmul.f32.gmra.mxu0 %v941
    %v983 = vpop.f32.mrf.mxu0
    %v984 = vadd.f32 0.0, %v983
    %985 = vdwg.mxu0
    %986 = vmatpush.msra.mxu0 %v175
    %987 = vmatpush.msra.mxu0 %v172
    %988 = vmatpush.msra.mxu0 %v169
    %989 = vmatpush.msra.mxu0 %v166
    %990 = vmatpush.msra.mxu0 %v163
    %991 = vmatpush.msra.mxu0 %v160
    %992 = vmatpush.msra.mxu0 %v157
    %993 = vmatpush.msra.mxu0 %v154
    %994 = vmatpush.msra.mxu0 %v151
    %995 = vmatpush.msra.mxu0 %v148
    %996 = vmatpush.msra.mxu0 %v145
    %997 = vmatpush.msra.mxu0 %v142
    %998 = vmatpush.msra.mxu0 %v139
    %999 = vmatpush.msra.mxu0 %v136
    %1000 = vmatpush.msra.mxu0 %v133
    %1001 = vmatpush.msra.mxu0 %v130
    %1002 = vmatmul.f32.gmra.mxu0 %v941
    %v1003 = vpop.f32.mrf.mxu0
    %v1004 = vadd.f32 0.0, %v1003
    %1005 = vdwg.mxu0
    %v1006 = vadd.f32 %v943, %v964
    %v1007 = vxor.u32 %v1006, 2147483648
    %v1008 = vmul.f32 %v1007, 1.442695
    %v1009 = vpow.pop %v1008
    %v1010 = vadd.f32 %v1009, 1.0
    %v1011 = vrcp.pop %v1010
    %v1012 = vmul.f32 %v1010, %v1011
    %v1013 = vsub.f32 1.0, %v1012
    %v1014 = vmul.f32 %v1011, %v1013
    %v1015 = vadd.f32 %v1011, %v1014
    %vm1016 = vweird.f32 %v1010
    %vm1017 = vweird.f32 %v1011
    %vm1018 = vmor %vm1016, %vm1017
    %v1019 = vsel %vm1018, %v1011, %v1015
    %v1020 = vand.u32 2147483647, %v1010
    %vm1021 = vcmp.eq.f32.partialorder %v1020, 8.507059e+37
    %v1022 = vand.u32 %v1010, 2147483648
    %v1023 = vor.u32 1.1754944e-38, %v1022
    %v1024 = vsel %vm1021, %v1023, %v1019
    %v1025 = vmul.f32 1.0, %v1024
    %v1026 = vadd.f32 %v944, %v984
    %v1027 = vxor.u32 %v1026, 2147483648
    %v1028 = vmul.f32 %v1027, 1.442695
    %v1029 = vpow.pop %v1028
    %v1030 = vadd.f32 %v1029, 1.0
    %v1031 = vrcp.pop %v1030
    %v1032 = vmul.f32 %v1030, %v1031
    %v1033 = vsub.f32 1.0, %v1032
    %v1034 = vmul.f32 %v1031, %v1033
    %v1035 = vadd.f32 %v1031, %v1034
    %vm1036 = vweird.f32 %v1030
    %vm1037 = vweird.f32 %v1031
    %vm1038 = vmor %vm1036, %vm1037
    %v1039 = vsel %vm1038, %v1031, %v1035
    %v1040 = vand.u32 2147483647, %v1030
    %vm1041 = vcmp.eq.f32.partialorder %v1040, 8.507059e+37
    %v1042 = vand.u32 %v1030, 2147483648
    %v1043 = vor.u32 1.1754944e-38, %v1042
    %v1044 = vsel %vm1041, %v1043, %v1039
    %v1045 = vmul.f32 1.0, %v1044
    %v1046 = vadd.f32 %v1004, %v381
    %v1047 = vmul.f32 %v1025, %v1046
    %v1048 = vadd.f32 %v945, %v1047
    %v1049 = vtanh.pop %v1048
    %v1050 = vsub.f32 1.0, %v1045
    %v1051 = vmul.f32 %v1050, %v1049
    %v1052 = vmul.f32 %v1045, %v941
    %v1053 = vadd.f32 %v1051, %v1052
    %1054 = vst [vmem:[#allocation3 + $0x28] sm:$0xff] %v1053
    %v1055 = vld [vmem:[#allocation2 + $0x90] sm:$0xff]
    %v1056 = vld [vmem:[#allocation2 + $0x98] sm:$0xff]
    %v1057 = vld [vmem:[#allocation2 + $0xa0] sm:$0xff]
    %1058 = vmatpush.msra.mxu0 %v173
    %1059 = vmatpush.msra.mxu0 %v170
    %1060 = vmatpush.msra.mxu0 %v167
    %1061 = vmatpush.msra.mxu0 %v164
    %1062 = vmatpush.msra.mxu0 %v161
    %1063 = vmatpush.msra.mxu0 %v158
    %1064 = vmatpush.msra.mxu0 %v155
    %1065 = vmatpush.msra.mxu0 %v152
    %1066 = vmatpush.msra.mxu0 %v149
    %1067 = vmatpush.msra.mxu0 %v146
    %1068 = vmatpush.msra.mxu0 %v143
    %1069 = vmatpush.msra.mxu0 %v140
    %1070 = vmatpush.msra.mxu0 %v137
    %1071 = vmatpush.msra.mxu0 %v134
    %1072 = vmatpush.msra.mxu0 %v131
    %1073 = vmatpush.msra.mxu0 %v128
    %1074 = vmatmul.f32.gmra.mxu0 %v1053
    %v1075 = vpop.f32.mrf.mxu0
    %v1076 = vadd.f32 0.0, %v1075
    %1077 = vdwg.mxu0
    %1078 = vmatpush.msra.mxu0 %v174
    %1079 = vmatpush.msra.mxu0 %v171
    %1080 = vmatpush.msra.mxu0 %v168
    %1081 = vmatpush.msra.mxu0 %v165
    %1082 = vmatpush.msra.mxu0 %v162
    %1083 = vmatpush.msra.mxu0 %v159
    %1084 = vmatpush.msra.mxu0 %v156
    %1085 = vmatpush.msra.mxu0 %v153
    %1086 = vmatpush.msra.mxu0 %v150
    %1087 = vmatpush.msra.mxu0 %v147
    %1088 = vmatpush.msra.mxu0 %v144
    %1089 = vmatpush.msra.mxu0 %v141
    %1090 = vmatpush.msra.mxu0 %v138
    %1091 = vmatpush.msra.mxu0 %v135
    %1092 = vmatpush.msra.mxu0 %v132
    %1093 = vmatpush.msra.mxu0 %v129
    %1094 = vmatmul.f32.gmra.mxu0 %v1053
    %v1095 = vpop.f32.mrf.mxu0
    %v1096 = vadd.f32 0.0, %v1095
    %1097 = vdwg.mxu0
    %1098 = vmatpush.msra.mxu0 %v175
    %1099 = vmatpush.msra.mxu0 %v172
    %1100 = vmatpush.msra.mxu0 %v169
    %1101 = vmatpush.msra.mxu0 %v166
    %1102 = vmatpush.msra.mxu0 %v163
    %1103 = vmatpush.msra.mxu0 %v160
    %1104 = vmatpush.msra.mxu0 %v157
    %1105 = vmatpush.msra.mxu0 %v154
    %1106 = vmatpush.msra.mxu0 %v151
    %1107 = vmatpush.msra.mxu0 %v148
    %1108 = vmatpush.msra.mxu0 %v145
    %1109 = vmatpush.msra.mxu0 %v142
    %1110 = vmatpush.msra.mxu0 %v139
    %1111 = vmatpush.msra.mxu0 %v136
    %1112 = vmatpush.msra.mxu0 %v133
    %1113 = vmatpush.msra.mxu0 %v130
    %1114 = vmatmul.f32.gmra.mxu0 %v1053
    %v1115 = vpop.f32.mrf.mxu0
    %v1116 = vadd.f32 0.0, %v1115
    %1117 = vdwg.mxu0
    %v1118 = vadd.f32 %v1055, %v1076
    %v1119 = vxor.u32 %v1118, 2147483648
    %v1120 = vmul.f32 %v1119, 1.442695
    %v1121 = vpow.pop %v1120
    %v1122 = vadd.f32 %v1121, 1.0
    %v1123 = vrcp.pop %v1122
    %v1124 = vmul.f32 %v1122, %v1123
    %v1125 = vsub.f32 1.0, %v1124
    %v1126 = vmul.f32 %v1123, %v1125
    %v1127 = vadd.f32 %v1123, %v1126
    %vm1128 = vweird.f32 %v1122
    %vm1129 = vweird.f32 %v1123
    %vm1130 = vmor %vm1128, %vm1129
    %v1131 = vsel %vm1130, %v1123, %v1127
    %v1132 = vand.u32 2147483647, %v1122
    %vm1133 = vcmp.eq.f32.partialorder %v1132, 8.507059e+37
    %v1134 = vand.u32 %v1122, 2147483648
    %v1135 = vor.u32 1.1754944e-38, %v1134
    %v1136 = vsel %vm1133, %v1135, %v1131
    %v1137 = vmul.f32 1.0, %v1136
    %v1138 = vadd.f32 %v1056, %v1096
    %v1139 = vxor.u32 %v1138, 2147483648
    %v1140 = vmul.f32 %v1139, 1.442695
    %v1141 = vpow.pop %v1140
    %v1142 = vadd.f32 %v1141, 1.0
    %v1143 = vrcp.pop %v1142
    %v1144 = vmul.f32 %v1142, %v1143
    %v1145 = vsub.f32 1.0, %v1144
    %v1146 = vmul.f32 %v1143, %v1145
    %v1147 = vadd.f32 %v1143, %v1146
    %vm1148 = vweird.f32 %v1142
    %vm1149 = vweird.f32 %v1143
    %vm1150 = vmor %vm1148, %vm1149
    %v1151 = vsel %vm1150, %v1143, %v1147
    %v1152 = vand.u32 2147483647, %v1142
    %vm1153 = vcmp.eq.f32.partialorder %v1152, 8.507059e+37
    %v1154 = vand.u32 %v1142, 2147483648
    %v1155 = vor.u32 1.1754944e-38, %v1154
    %v1156 = vsel %vm1153, %v1155, %v1151
    %v1157 = vmul.f32 1.0, %v1156
    %v1158 = vadd.f32 %v1116, %v381
    %v1159 = vmul.f32 %v1137, %v1158
    %v1160 = vadd.f32 %v1057, %v1159
    %v1161 = vtanh.pop %v1160
    %v1162 = vsub.f32 1.0, %v1157
    %v1163 = vmul.f32 %v1162, %v1161
    %v1164 = vmul.f32 %v1157, %v1053
    %v1165 = vadd.f32 %v1163, %v1164
    %1166 = vst [vmem:[#allocation3 + $0x30] sm:$0xff] %v1165
    %v1167 = vld [vmem:[#allocation2 + $0xa8] sm:$0xff]
    %v1168 = vld [vmem:[#allocation2 + $0xb0] sm:$0xff]
    %v1169 = vld [vmem:[#allocation2 + $0xb8] sm:$0xff]
    %1170 = vmatpush.msra.mxu0 %v173
    %1171 = vmatpush.msra.mxu0 %v170
    %1172 = vmatpush.msra.mxu0 %v167
    %1173 = vmatpush.msra.mxu0 %v164
    %1174 = vmatpush.msra.mxu0 %v161
    %1175 = vmatpush.msra.mxu0 %v158
    %1176 = vmatpush.msra.mxu0 %v155
    %1177 = vmatpush.msra.mxu0 %v152
    %1178 = vmatpush.msra.mxu0 %v149
    %1179 = vmatpush.msra.mxu0 %v146
    %1180 = vmatpush.msra.mxu0 %v143
    %1181 = vmatpush.msra.mxu0 %v140
    %1182 = vmatpush.msra.mxu0 %v137
    %1183 = vmatpush.msra.mxu0 %v134
    %1184 = vmatpush.msra.mxu0 %v131
    %1185 = vmatpush.msra.mxu0 %v128
    %1186 = vmatmul.f32.gmra.mxu0 %v1165
    %v1187 = vpop.f32.mrf.mxu0
    %v1188 = vadd.f32 0.0, %v1187
    %1189 = vdwg.mxu0
    %1190 = vmatpush.msra.mxu0 %v174
    %1191 = vmatpush.msra.mxu0 %v171
    %1192 = vmatpush.msra.mxu0 %v168
    %1193 = vmatpush.msra.mxu0 %v165
    %1194 = vmatpush.msra.mxu0 %v162
    %1195 = vmatpush.msra.mxu0 %v159
    %1196 = vmatpush.msra.mxu0 %v156
    %1197 = vmatpush.msra.mxu0 %v153
    %1198 = vmatpush.msra.mxu0 %v150
    %1199 = vmatpush.msra.mxu0 %v147
    %1200 = vmatpush.msra.mxu0 %v144
    %1201 = vmatpush.msra.mxu0 %v141
    %1202 = vmatpush.msra.mxu0 %v138
    %1203 = vmatpush.msra.mxu0 %v135
    %1204 = vmatpush.msra.mxu0 %v132
    %1205 = vmatpush.msra.mxu0 %v129
    %1206 = vmatmul.f32.gmra.mxu0 %v1165
    %v1207 = vpop.f32.mrf.mxu0
    %v1208 = vadd.f32 0.0, %v1207
    %1209 = vdwg.mxu0
    %1210 = vmatpush.msra.mxu0 %v175
    %1211 = vmatpush.msra.mxu0 %v172
    %1212 = vmatpush.msra.mxu0 %v169
    %1213 = vmatpush.msra.mxu0 %v166
    %1214 = vmatpush.msra.mxu0 %v163
    %1215 = vmatpush.msra.mxu0 %v160
    %1216 = vmatpush.msra.mxu0 %v157
    %1217 = vmatpush.msra.mxu0 %v154
    %1218 = vmatpush.msra.mxu0 %v151
    %1219 = vmatpush.msra.mxu0 %v148
    %1220 = vmatpush.msra.mxu0 %v145
    %1221 = vmatpush.msra.mxu0 %v142
    %1222 = vmatpush.msra.mxu0 %v139
    %1223 = vmatpush.msra.mxu0 %v136
    %1224 = vmatpush.msra.mxu0 %v133
    %1225 = vmatpush.msra.mxu0 %v130
    %1226 = vmatmul.f32.gmra.mxu0 %v1165
    %v1227 = vpop.f32.mrf.mxu0
    %v1228 = vadd.f32 0.0, %v1227
    %1229 = vdwg.mxu0
    %v1230 = vadd.f32 %v1167, %v1188
    %v1231 = vxor.u32 %v1230, 2147483648
    %v1232 = vmul.f32 %v1231, 1.442695
    %v1233 = vpow.pop %v1232
    %v1234 = vadd.f32 %v1233, 1.0
    %v1235 = vrcp.pop %v1234
    %v1236 = vmul.f32 %v1234, %v1235
    %v1237 = vsub.f32 1.0, %v1236
    %v1238 = vmul.f32 %v1235, %v1237
    %v1239 = vadd.f32 %v1235, %v1238
    %vm1240 = vweird.f32 %v1234
    %vm1241 = vweird.f32 %v1235
    %vm1242 = vmor %vm1240, %vm1241
    %v1243 = vsel %vm1242, %v1235, %v1239
    %v1244 = vand.u32 2147483647, %v1234
    %vm1245 = vcmp.eq.f32.partialorder %v1244, 8.507059e+37
    %v1246 = vand.u32 %v1234, 2147483648
    %v1247 = vor.u32 1.1754944e-38, %v1246
    %v1248 = vsel %vm1245, %v1247, %v1243
    %v1249 = vmul.f32 1.0, %v1248
    %v1250 = vadd.f32 %v1168, %v1208
    %v1251 = vxor.u32 %v1250, 2147483648
    %v1252 = vmul.f32 %v1251, 1.442695
    %v1253 = vpow.pop %v1252
    %v1254 = vadd.f32 %v1253, 1.0
    %v1255 = vrcp.pop %v1254
    %v1256 = vmul.f32 %v1254, %v1255
    %v1257 = vsub.f32 1.0, %v1256
    %v1258 = vmul.f32 %v1255, %v1257
    %v1259 = vadd.f32 %v1255, %v1258
    %vm1260 = vweird.f32 %v1254
    %vm1261 = vweird.f32 %v1255
    %vm1262 = vmor %vm1260, %vm1261
    %v1263 = vsel %vm1262, %v1255, %v1259
    %v1264 = vand.u32 2147483647, %v1254
    %vm1265 = vcmp.eq.f32.partialorder %v1264, 8.507059e+37
    %v1266 = vand.u32 %v1254, 2147483648
    %v1267 = vor.u32 1.1754944e-38, %v1266
    %v1268 = vsel %vm1265, %v1267, %v1263
    %v1269 = vmul.f32 1.0, %v1268
    %v1270 = vadd.f32 %v1228, %v381
    %v1271 = vmul.f32 %v1249, %v1270
    %v1272 = vadd.f32 %v1169, %v1271
    %v1273 = vtanh.pop %v1272
    %v1274 = vsub.f32 1.0, %v1269
    %v1275 = vmul.f32 %v1274, %v1273
    %v1276 = vmul.f32 %v1269, %v1165
    %v1277 = vadd.f32 %v1275, %v1276
    %1278 = vst [vmem:[#allocation3 + $0x38] sm:$0xff] %v1277
    %1279 = vst [vmem:[#allocation15] sm:$0xff] %v1277
    %v1280 = vld [vmem:[#allocation8] sm:$0xff]
    %v1281 = vld [vmem:[#allocation8 + $0x8] sm:$0xff]
    %v1282 = vld [vmem:[#allocation8 + $0x10] sm:$0xff]
    %v1283 = vld [vmem:[#allocation8 + $0x18] sm:$0xff]
    %v1284 = vld [vmem:[#allocation8 + $0x20] sm:$0xff]
    %v1285 = vld [vmem:[#allocation8 + $0x28] sm:$0xff]
    %v1286 = vld [vmem:[#allocation8 + $0x30] sm:$0xff]
    %v1287 = vld [vmem:[#allocation8 + $0x38] sm:$0xff]
    %v1288 = vld [vmem:[#allocation8 + $0x40] sm:$0xff]
    %v1289 = vld [vmem:[#allocation8 + $0x48] sm:$0xff]
    %v1290 = vld [vmem:[#allocation8 + $0x50] sm:$0xff]
    %v1291 = vld [vmem:[#allocation8 + $0x58] sm:$0xff]
    %v1292 = vld [vmem:[#allocation8 + $0x60] sm:$0xff]
    %v1293 = vld [vmem:[#allocation8 + $0x68] sm:$0xff]
    %v1294 = vld [vmem:[#allocation8 + $0x70] sm:$0xff]
    %v1295 = vld [vmem:[#allocation8 + $0x78] sm:$0xff]
    %v1296 = vld [vmem:[#allocation8 + $0x80] sm:$0xff]
    %v1297 = vld [vmem:[#allocation8 + $0x88] sm:$0xff]
    %v1298 = vld [vmem:[#allocation8 + $0x90] sm:$0xff]
    %v1299 = vld [vmem:[#allocation8 + $0x98] sm:$0xff]
    %v1300 = vld [vmem:[#allocation8 + $0xa0] sm:$0xff]
    %v1301 = vld [vmem:[#allocation8 + $0xa8] sm:$0xff]
    %v1302 = vld [vmem:[#allocation8 + $0xb0] sm:$0xff]
    %v1303 = vld [vmem:[#allocation8 + $0xb8] sm:$0xff]
    %v1304 = vld [vmem:[#allocation8 + $0xc0] sm:$0xff]
    %v1305 = vld [vmem:[#allocation8 + $0xc8] sm:$0xff]
    %v1306 = vld [vmem:[#allocation8 + $0xd0] sm:$0xff]
    %v1307 = vld [vmem:[#allocation8 + $0xd8] sm:$0xff]
    %v1308 = vld [vmem:[#allocation8 + $0xe0] sm:$0xff]
    %v1309 = vld [vmem:[#allocation8 + $0xe8] sm:$0xff]
    %v1310 = vld [vmem:[#allocation8 + $0xf0] sm:$0xff]
    %v1311 = vld [vmem:[#allocation8 + $0xf8] sm:$0xff]
    %v1312 = vld [vmem:[#allocation8 + $0x100] sm:$0xff]
    %v1313 = vld [vmem:[#allocation8 + $0x108] sm:$0xff]
    %v1314 = vld [vmem:[#allocation8 + $0x110] sm:$0xff]
    %v1315 = vld [vmem:[#allocation8 + $0x118] sm:$0xff]
    %v1316 = vld [vmem:[#allocation8 + $0x120] sm:$0xff]
    %v1317 = vld [vmem:[#allocation8 + $0x128] sm:$0xff]
    %v1318 = vld [vmem:[#allocation8 + $0x130] sm:$0xff]
    %v1319 = vld [vmem:[#allocation8 + $0x138] sm:$0xff]
    %v1320 = vld [vmem:[#allocation8 + $0x140] sm:$0xff]
    %v1321 = vld [vmem:[#allocation8 + $0x148] sm:$0xff]
    %v1322 = vld [vmem:[#allocation8 + $0x150] sm:$0xff]
    %v1323 = vld [vmem:[#allocation8 + $0x158] sm:$0xff]
    %v1324 = vld [vmem:[#allocation8 + $0x160] sm:$0xff]
    %v1325 = vld [vmem:[#allocation8 + $0x168] sm:$0xff]
    %v1326 = vld [vmem:[#allocation8 + $0x170] sm:$0xff]
    %v1327 = vld [vmem:[#allocation8 + $0x178] sm:$0xff]
    %v1328 = vld [vmem:[#allocation10] sm:$0xff]
    %v1329 = vld [vmem:[#allocation10 + $0x8] sm:$0xff]
    %v1330 = vld [vmem:[#allocation10 + $0x10] sm:$0xff]
    %v1331 = vld [vmem:[#allocation10 + $0x18] sm:$0xff]
    %v1332 = vld [vmem:[#allocation10 + $0x20] sm:$0xff]
    %v1333 = vld [vmem:[#allocation10 + $0x28] sm:$0xff]
    %v1334 = vld [vmem:[#allocation10 + $0x30] sm:$0xff]
    %v1335 = vld [vmem:[#allocation10 + $0x38] sm:$0xff]
    %v1336 = vld [vmem:[#allocation10 + $0x40] sm:$0xff]
    %v1337 = vld [vmem:[#allocation10 + $0x48] sm:$0xff]
    %v1338 = vld [vmem:[#allocation10 + $0x50] sm:$0xff]
    %v1339 = vld [vmem:[#allocation10 + $0x58] sm:$0xff]
    %v1340 = vld [vmem:[#allocation10 + $0x60] sm:$0xff]
    %v1341 = vld [vmem:[#allocation10 + $0x68] sm:$0xff]
    %v1342 = vld [vmem:[#allocation10 + $0x70] sm:$0xff]
    %v1343 = vld [vmem:[#allocation10 + $0x78] sm:$0xff]
    %v1344 = vld [vmem:[#allocation10 + $0x80] sm:$0xff]
    %v1345 = vld [vmem:[#allocation10 + $0x88] sm:$0xff]
    %v1346 = vld [vmem:[#allocation10 + $0x90] sm:$0xff]
    %v1347 = vld [vmem:[#allocation10 + $0x98] sm:$0xff]
    %v1348 = vld [vmem:[#allocation10 + $0xa0] sm:$0xff]
    %v1349 = vld [vmem:[#allocation10 + $0xa8] sm:$0xff]
    %v1350 = vld [vmem:[#allocation10 + $0xb0] sm:$0xff]
    %v1351 = vld [vmem:[#allocation10 + $0xb8] sm:$0xff]
    %v1352 = vld [vmem:[#allocation10 + $0xc0] sm:$0xff]
    %v1353 = vld [vmem:[#allocation10 + $0xc8] sm:$0xff]
    %v1354 = vld [vmem:[#allocation10 + $0xd0] sm:$0xff]
    %v1355 = vld [vmem:[#allocation10 + $0xd8] sm:$0xff]
    %v1356 = vld [vmem:[#allocation10 + $0xe0] sm:$0xff]
    %v1357 = vld [vmem:[#allocation10 + $0xe8] sm:$0xff]
    %v1358 = vld [vmem:[#allocation10 + $0xf0] sm:$0xff]
    %v1359 = vld [vmem:[#allocation10 + $0xf8] sm:$0xff]
    %v1360 = vld [vmem:[#allocation10 + $0x100] sm:$0xff]
    %v1361 = vld [vmem:[#allocation10 + $0x108] sm:$0xff]
    %v1362 = vld [vmem:[#allocation10 + $0x110] sm:$0xff]
    %v1363 = vld [vmem:[#allocation10 + $0x118] sm:$0xff]
    %v1364 = vld [vmem:[#allocation10 + $0x120] sm:$0xff]
    %v1365 = vld [vmem:[#allocation10 + $0x128] sm:$0xff]
    %v1366 = vld [vmem:[#allocation10 + $0x130] sm:$0xff]
    %v1367 = vld [vmem:[#allocation10 + $0x138] sm:$0xff]
    %v1368 = vld [vmem:[#allocation10 + $0x140] sm:$0xff]
    %v1369 = vld [vmem:[#allocation10 + $0x148] sm:$0xff]
    %v1370 = vld [vmem:[#allocation10 + $0x150] sm:$0xff]
    %v1371 = vld [vmem:[#allocation10 + $0x158] sm:$0xff]
    %v1372 = vld [vmem:[#allocation10 + $0x160] sm:$0xff]
    %v1373 = vld [vmem:[#allocation10 + $0x168] sm:$0xff]
    %v1374 = vld [vmem:[#allocation10 + $0x170] sm:$0xff]
    %v1375 = vld [vmem:[#allocation10 + $0x178] sm:$0xff]
    %v1376 = vld [vmem:[%s7] sm:$0x7]
    %v1377 = vld [vmem:[%s8] sm:$0x1]
    %v1378 = vld [vmem:[#allocation3] sm:$0xff]
    %v1379 = vld [vmem:[#allocation3 + $0x8] sm:$0xff]
    %v1380 = vld [vmem:[#allocation3 + $0x10] sm:$0xff]
    %v1381 = vld [vmem:[#allocation3 + $0x18] sm:$0xff]
    %v1382 = vld [vmem:[#allocation3 + $0x20] sm:$0xff]
    %v1383 = vld [vmem:[#allocation3 + $0x28] sm:$0xff]
    %v1384 = vld [vmem:[#allocation3 + $0x30] sm:$0xff]
    %v1385 = vld [vmem:[#allocation3 + $0x38] sm:$0xff]
    %v1387 = vperm.slane %v1376, 0
    %v1388 = vperm.slane %v1376, 1
    %v1389 = vperm.slane %v1376, 2
    %1393 = vmatpush.msra.mxu0 %v1325
    %1394 = vmatpush.msra.mxu0 %v1322
    %1395 = vmatpush.msra.mxu0 %v1319
    %1396 = vmatpush.msra.mxu0 %v1316
    %1397 = vmatpush.msra.mxu0 %v1313
    %1398 = vmatpush.msra.mxu0 %v1310
    %1399 = vmatpush.msra.mxu0 %v1307
    %1400 = vmatpush.msra.mxu0 %v1304
    %1401 = vmatpush.msra.mxu0 %v1301
    %1402 = vmatpush.msra.mxu0 %v1298
    %1403 = vmatpush.msra.mxu0 %v1295
    %1404 = vmatpush.msra.mxu0 %v1292
    %1405 = vmatpush.msra.mxu0 %v1289
    %1406 = vmatpush.msra.mxu0 %v1286
    %1407 = vmatpush.msra.mxu0 %v1283
    %1408 = vmatpush.msra.mxu0 %v1280
    %1409 = vmatmul.f32.gmra.mxu0 %v1378
    %v1410 = vpop.f32.mrf.mxu0
    %v1411 = vadd.f32 %v1387, %v1410
    %1412 = vmatmul.f32.gmra.mxu0 %v1379
    %v1413 = vpop.f32.mrf.mxu0
    %v1414 = vadd.f32 %v1387, %v1413
    %1415 = vmatmul.f32.gmra.mxu0 %v1380
    %v1416 = vpop.f32.mrf.mxu0
    %v1417 = vadd.f32 %v1387, %v1416
    %1418 = vmatmul.f32.gmra.mxu0 %v1381
    %v1419 = vpop.f32.mrf.mxu0
    %v1420 = vadd.f32 %v1387, %v1419
    %1421 = vmatmul.f32.gmra.mxu0 %v1382
    %v1422 = vpop.f32.mrf.mxu0
    %v1423 = vadd.f32 %v1387, %v1422
    %1424 = vmatmul.f32.gmra.mxu0 %v1383
    %v1425 = vpop.f32.mrf.mxu0
    %v1426 = vadd.f32 %v1387, %v1425
    %1427 = vmatmul.f32.gmra.mxu0 %v1384
    %v1428 = vpop.f32.mrf.mxu0
    %v1429 = vadd.f32 %v1387, %v1428
    %1430 = vmatmul.f32.gmra.mxu0 %v1385
    %v1431 = vpop.f32.mrf.mxu0
    %v1432 = vadd.f32 %v1387, %v1431
    %1433 = vdwg.mxu0
    %1434 = vmatpush.msra.mxu0 %v1326
    %1435 = vmatpush.msra.mxu0 %v1323
    %1436 = vmatpush.msra.mxu0 %v1320
    %1437 = vmatpush.msra.mxu0 %v1317
    %1438 = vmatpush.msra.mxu0 %v1314
    %1439 = vmatpush.msra.mxu0 %v1311
    %1440 = vmatpush.msra.mxu0 %v1308
    %1441 = vmatpush.msra.mxu0 %v1305
    %1442 = vmatpush.msra.mxu0 %v1302
    %1443 = vmatpush.msra.mxu0 %v1299
    %1444 = vmatpush.msra.mxu0 %v1296
    %1445 = vmatpush.msra.mxu0 %v1293
    %1446 = vmatpush.msra.mxu0 %v1290
    %1447 = vmatpush.msra.mxu0 %v1287
    %1448 = vmatpush.msra.mxu0 %v1284
    %1449 = vmatpush.msra.mxu0 %v1281
    %1450 = vmatmul.f32.gmra.mxu0 %v1378
    %v1451 = vpop.f32.mrf.mxu0
    %v1452 = vadd.f32 %v1388, %v1451
    %1453 = vmatmul.f32.gmra.mxu0 %v1379
    %v1454 = vpop.f32.mrf.mxu0
    %v1455 = vadd.f32 %v1388, %v1454
    %1456 = vmatmul.f32.gmra.mxu0 %v1380
    %v1457 = vpop.f32.mrf.mxu0
    %v1458 = vadd.f32 %v1388, %v1457
    %1459 = vmatmul.f32.gmra.mxu0 %v1381
    %v1460 = vpop.f32.mrf.mxu0
    %v1461 = vadd.f32 %v1388, %v1460
    %1462 = vmatmul.f32.gmra.mxu0 %v1382
    %v1463 = vpop.f32.mrf.mxu0
    %v1464 = vadd.f32 %v1388, %v1463
    %1465 = vmatmul.f32.gmra.mxu0 %v1383
    %v1466 = vpop.f32.mrf.mxu0
    %v1467 = vadd.f32 %v1388, %v1466
    %1468 = vmatmul.f32.gmra.mxu0 %v1384
    %v1469 = vpop.f32.mrf.mxu0
    %v1470 = vadd.f32 %v1388, %v1469
    %1471 = vmatmul.f32.gmra.mxu0 %v1385
    %v1472 = vpop.f32.mrf.mxu0
    %v1473 = vadd.f32 %v1388, %v1472
    %1474 = vdwg.mxu0
    %1475 = vmatpush.msra.mxu0 %v1327
    %1476 = vmatpush.msra.mxu0 %v1324
    %1477 = vmatpush.msra.mxu0 %v1321
    %1478 = vmatpush.msra.mxu0 %v1318
    %1479 = vmatpush.msra.mxu0 %v1315
    %1480 = vmatpush.msra.mxu0 %v1312
    %1481 = vmatpush.msra.mxu0 %v1309
    %1482 = vmatpush.msra.mxu0 %v1306
    %1483 = vmatpush.msra.mxu0 %v1303
    %1484 = vmatpush.msra.mxu0 %v1300
    %1485 = vmatpush.msra.mxu0 %v1297
    %1486 = vmatpush.msra.mxu0 %v1294
    %1487 = vmatpush.msra.mxu0 %v1291
    %1488 = vmatpush.msra.mxu0 %v1288
    %1489 = vmatpush.msra.mxu0 %v1285
    %1490 = vmatpush.msra.mxu0 %v1282
    %1491 = vmatmul.f32.gmra.mxu0 %v1378
    %v1492 = vpop.f32.mrf.mxu0
    %v1493 = vadd.f32 %v1389, %v1492
    %1494 = vmatmul.f32.gmra.mxu0 %v1379
    %v1495 = vpop.f32.mrf.mxu0
    %v1496 = vadd.f32 %v1389, %v1495
    %1497 = vmatmul.f32.gmra.mxu0 %v1380
    %v1498 = vpop.f32.mrf.mxu0
    %v1499 = vadd.f32 %v1389, %v1498
    %1500 = vmatmul.f32.gmra.mxu0 %v1381
    %v1501 = vpop.f32.mrf.mxu0
    %v1502 = vadd.f32 %v1389, %v1501
    %1503 = vmatmul.f32.gmra.mxu0 %v1382
    %v1504 = vpop.f32.mrf.mxu0
    %v1505 = vadd.f32 %v1389, %v1504
    %1506 = vmatmul.f32.gmra.mxu0 %v1383
    %v1507 = vpop.f32.mrf.mxu0
    %v1508 = vadd.f32 %v1389, %v1507
    %1509 = vmatmul.f32.gmra.mxu0 %v1384
    %v1510 = vpop.f32.mrf.mxu0
    %v1511 = vadd.f32 %v1389, %v1510
    %1512 = vmatmul.f32.gmra.mxu0 %v1385
    %v1513 = vpop.f32.mrf.mxu0
    %v1514 = vadd.f32 %v1389, %v1513
    %1515 = vdwg.mxu0
    %1516 = vst [vmem:[#allocation2] sm:$0xff] %v1411
    %1517 = vst [vmem:[#allocation2 + $0x8] sm:$0xff] %v1452
    %1518 = vst [vmem:[#allocation2 + $0x10] sm:$0xff] %v1493
    %1519 = vst [vmem:[#allocation2 + $0x18] sm:$0xff] %v1414
    %1520 = vst [vmem:[#allocation2 + $0x20] sm:$0xff] %v1455
    %1521 = vst [vmem:[#allocation2 + $0x28] sm:$0xff] %v1496
    %1522 = vst [vmem:[#allocation2 + $0x30] sm:$0xff] %v1417
    %1523 = vst [vmem:[#allocation2 + $0x38] sm:$0xff] %v1458
    %1524 = vst [vmem:[#allocation2 + $0x40] sm:$0xff] %v1499
    %1525 = vst [vmem:[#allocation2 + $0x48] sm:$0xff] %v1420
    %1526 = vst [vmem:[#allocation2 + $0x50] sm:$0xff] %v1461
    %1527 = vst [vmem:[#allocation2 + $0x58] sm:$0xff] %v1502
    %1528 = vst [vmem:[#allocation2 + $0x60] sm:$0xff] %v1423
    %1529 = vst [vmem:[#allocation2 + $0x68] sm:$0xff] %v1464
    %1530 = vst [vmem:[#allocation2 + $0x70] sm:$0xff] %v1505
    %1531 = vst [vmem:[#allocation2 + $0x78] sm:$0xff] %v1426
    %1532 = vst [vmem:[#allocation2 + $0x80] sm:$0xff] %v1467
    %1533 = vst [vmem:[#allocation2 + $0x88] sm:$0xff] %v1508
    %1534 = vst [vmem:[#allocation2 + $0x90] sm:$0xff] %v1429
    %1535 = vst [vmem:[#allocation2 + $0x98] sm:$0xff] %v1470
    %1536 = vst [vmem:[#allocation2 + $0xa0] sm:$0xff] %v1511
    %1537 = vst [vmem:[#allocation2 + $0xa8] sm:$0xff] %v1432
    %1538 = vst [vmem:[#allocation2 + $0xb0] sm:$0xff] %v1473
    %1539 = vst [vmem:[#allocation2 + $0xb8] sm:$0xff] %v1514
    %v1541 = vperm.slane %v1377, 0
    %v1543 = vld [vmem:[#allocation2] sm:$0xff]
    %v1544 = vld [vmem:[#allocation2 + $0x8] sm:$0xff]
    %v1545 = vld [vmem:[#allocation2 + $0x10] sm:$0xff]
    %1546 = vmatpush.msra.mxu0 %v1373
    %1547 = vmatpush.msra.mxu0 %v1370
    %1548 = vmatpush.msra.mxu0 %v1367
    %1549 = vmatpush.msra.mxu0 %v1364
    %1550 = vmatpush.msra.mxu0 %v1361
    %1551 = vmatpush.msra.mxu0 %v1358
    %1552 = vmatpush.msra.mxu0 %v1355
    %1553 = vmatpush.msra.mxu0 %v1352
    %1554 = vmatpush.msra.mxu0 %v1349
    %1555 = vmatpush.msra.mxu0 %v1346
    %1556 = vmatpush.msra.mxu0 %v1343
    %1557 = vmatpush.msra.mxu0 %v1340
    %1558 = vmatpush.msra.mxu0 %v1337
    %1559 = vmatpush.msra.mxu0 %v1334
    %1560 = vmatpush.msra.mxu0 %v1331
    %1561 = vmatpush.msra.mxu0 %v1328
    %1562 = vmatmul.f32.gmra.mxu0 0.0
    %v1563 = vpop.f32.mrf.mxu0
    %v1564 = vadd.f32 0.0, %v1563
    %1565 = vdwg.mxu0
    %1566 = vmatpush.msra.mxu0 %v1374
    %1567 = vmatpush.msra.mxu0 %v1371
    %1568 = vmatpush.msra.mxu0 %v1368
    %1569 = vmatpush.msra.mxu0 %v1365
    %1570 = vmatpush.msra.mxu0 %v1362
    %1571 = vmatpush.msra.mxu0 %v1359
    %1572 = vmatpush.msra.mxu0 %v1356
    %1573 = vmatpush.msra.mxu0 %v1353
    %1574 = vmatpush.msra.mxu0 %v1350
    %1575 = vmatpush.msra.mxu0 %v1347
    %1576 = vmatpush.msra.mxu0 %v1344
    %1577 = vmatpush.msra.mxu0 %v1341
    %1578 = vmatpush.msra.mxu0 %v1338
    %1579 = vmatpush.msra.mxu0 %v1335
    %1580 = vmatpush.msra.mxu0 %v1332
    %1581 = vmatpush.msra.mxu0 %v1329
    %1582 = vmatmul.f32.gmra.mxu0 0.0
    %v1583 = vpop.f32.mrf.mxu0
    %v1584 = vadd.f32 0.0, %v1583
    %1585 = vdwg.mxu0
    %1586 = vmatpush.msra.mxu0 %v1375
    %1587 = vmatpush.msra.mxu0 %v1372
    %1588 = vmatpush.msra.mxu0 %v1369
    %1589 = vmatpush.msra.mxu0 %v1366
    %1590 = vmatpush.msra.mxu0 %v1363
    %1591 = vmatpush.msra.mxu0 %v1360
    %1592 = vmatpush.msra.mxu0 %v1357
    %1593 = vmatpush.msra.mxu0 %v1354
    %1594 = vmatpush.msra.mxu0 %v1351
    %1595 = vmatpush.msra.mxu0 %v1348
    %1596 = vmatpush.msra.mxu0 %v1345
    %1597 = vmatpush.msra.mxu0 %v1342
    %1598 = vmatpush.msra.mxu0 %v1339
    %1599 = vmatpush.msra.mxu0 %v1336
    %1600 = vmatpush.msra.mxu0 %v1333
    %1601 = vmatpush.msra.mxu0 %v1330
    %1602 = vmatmul.f32.gmra.mxu0 0.0
    %v1603 = vpop.f32.mrf.mxu0
    %v1604 = vadd.f32 0.0, %v1603
    %1605 = vdwg.mxu0
    %v1606 = vadd.f32 %v1543, %v1564
    %v1607 = vxor.u32 %v1606, 2147483648
    %v1608 = vmul.f32 %v1607, 1.442695
    %v1609 = vpow.pop %v1608
    %v1610 = vadd.f32 %v1609, 1.0
    %v1611 = vrcp.pop %v1610
    %v1612 = vmul.f32 %v1610, %v1611
    %v1613 = vsub.f32 1.0, %v1612
    %v1614 = vmul.f32 %v1611, %v1613
    %v1615 = vadd.f32 %v1611, %v1614
    %vm1616 = vweird.f32 %v1610
    %vm1617 = vweird.f32 %v1611
    %vm1618 = vmor %vm1616, %vm1617
    %v1619 = vsel %vm1618, %v1611, %v1615
    %v1620 = vand.u32 2147483647, %v1610
    %vm1621 = vcmp.eq.f32.partialorder %v1620, 8.507059e+37
    %v1622 = vand.u32 %v1610, 2147483648
    %v1623 = vor.u32 1.1754944e-38, %v1622
    %v1624 = vsel %vm1621, %v1623, %v1619
    %v1625 = vmul.f32 1.0, %v1624
    %v1626 = vadd.f32 %v1544, %v1584
    %v1627 = vxor.u32 %v1626, 2147483648
    %v1628 = vmul.f32 %v1627, 1.442695
    %v1629 = vpow.pop %v1628
    %v1630 = vadd.f32 %v1629, 1.0
    %v1631 = vrcp.pop %v1630
    %v1632 = vmul.f32 %v1630, %v1631
    %v1633 = vsub.f32 1.0, %v1632
    %v1634 = vmul.f32 %v1631, %v1633
    %v1635 = vadd.f32 %v1631, %v1634
    %vm1636 = vweird.f32 %v1630
    %vm1637 = vweird.f32 %v1631
    %vm1638 = vmor %vm1636, %vm1637
    %v1639 = vsel %vm1638, %v1631, %v1635
    %v1640 = vand.u32 2147483647, %v1630
    %vm1641 = vcmp.eq.f32.partialorder %v1640, 8.507059e+37
    %v1642 = vand.u32 %v1630, 2147483648
    %v1643 = vor.u32 1.1754944e-38, %v1642
    %v1644 = vsel %vm1641, %v1643, %v1639
    %v1645 = vmul.f32 1.0, %v1644
    %v1646 = vadd.f32 %v1604, %v1541
    %v1647 = vmul.f32 %v1625, %v1646
    %v1648 = vadd.f32 %v1545, %v1647
    %v1649 = vtanh.pop %v1648
    %v1650 = vsub.f32 1.0, %v1645
    %v1651 = vmul.f32 %v1650, %v1649
    %v1652 = vmul.f32 %v1645, 0.0
    %v1653 = vadd.f32 %v1651, %v1652
    %1654 = vst [vmem:[#allocation4] sm:$0xff] %v1653
    %v1655 = vld [vmem:[#allocation2 + $0x18] sm:$0xff]
    %v1656 = vld [vmem:[#allocation2 + $0x20] sm:$0xff]
    %v1657 = vld [vmem:[#allocation2 + $0x28] sm:$0xff]
    %1658 = vmatpush.msra.mxu0 %v1373
    %1659 = vmatpush.msra.mxu0 %v1370
    %1660 = vmatpush.msra.mxu0 %v1367
    %1661 = vmatpush.msra.mxu0 %v1364
    %1662 = vmatpush.msra.mxu0 %v1361
    %1663 = vmatpush.msra.mxu0 %v1358
    %1664 = vmatpush.msra.mxu0 %v1355
    %1665 = vmatpush.msra.mxu0 %v1352
    %1666 = vmatpush.msra.mxu0 %v1349
    %1667 = vmatpush.msra.mxu0 %v1346
    %1668 = vmatpush.msra.mxu0 %v1343
    %1669 = vmatpush.msra.mxu0 %v1340
    %1670 = vmatpush.msra.mxu0 %v1337
    %1671 = vmatpush.msra.mxu0 %v1334
    %1672 = vmatpush.msra.mxu0 %v1331
    %1673 = vmatpush.msra.mxu0 %v1328
    %1674 = vmatmul.f32.gmra.mxu0 %v1653
    %v1675 = vpop.f32.mrf.mxu0
    %v1676 = vadd.f32 0.0, %v1675
    %1677 = vdwg.mxu0
    %1678 = vmatpush.msra.mxu0 %v1374
    %1679 = vmatpush.msra.mxu0 %v1371
    %1680 = vmatpush.msra.mxu0 %v1368
    %1681 = vmatpush.msra.mxu0 %v1365
    %1682 = vmatpush.msra.mxu0 %v1362
    %1683 = vmatpush.msra.mxu0 %v1359
    %1684 = vmatpush.msra.mxu0 %v1356
    %1685 = vmatpush.msra.mxu0 %v1353
    %1686 = vmatpush.msra.mxu0 %v1350
    %1687 = vmatpush.msra.mxu0 %v1347
    %1688 = vmatpush.msra.mxu0 %v1344
    %1689 = vmatpush.msra.mxu0 %v1341
    %1690 = vmatpush.msra.mxu0 %v1338
    %1691 = vmatpush.msra.mxu0 %v1335
    %1692 = vmatpush.msra.mxu0 %v1332
    %1693 = vmatpush.msra.mxu0 %v1329
    %1694 = vmatmul.f32.gmra.mxu0 %v1653
    %v1695 = vpop.f32.mrf.mxu0
    %v1696 = vadd.f32 0.0, %v1695
    %1697 = vdwg.mxu0
    %1698 = vmatpush.msra.mxu0 %v1375
    %1699 = vmatpush.msra.mxu0 %v1372
    %1700 = vmatpush.msra.mxu0 %v1369
    %1701 = vmatpush.msra.mxu0 %v1366
    %1702 = vmatpush.msra.mxu0 %v1363
    %1703 = vmatpush.msra.mxu0 %v1360
    %1704 = vmatpush.msra.mxu0 %v1357
    %1705 = vmatpush.msra.mxu0 %v1354
    %1706 = vmatpush.msra.mxu0 %v1351
    %1707 = vmatpush.msra.mxu0 %v1348
    %1708 = vmatpush.msra.mxu0 %v1345
    %1709 = vmatpush.msra.mxu0 %v1342
    %1710 = vmatpush.msra.mxu0 %v1339
    %1711 = vmatpush.msra.mxu0 %v1336
    %1712 = vmatpush.msra.mxu0 %v1333
    %1713 = vmatpush.msra.mxu0 %v1330
    %1714 = vmatmul.f32.gmra.mxu0 %v1653
    %v1715 = vpop.f32.mrf.mxu0
    %v1716 = vadd.f32 0.0, %v1715
    %1717 = vdwg.mxu0
    %v1718 = vadd.f32 %v1655, %v1676
    %v1719 = vxor.u32 %v1718, 2147483648
    %v1720 = vmul.f32 %v1719, 1.442695
    %v1721 = vpow.pop %v1720
    %v1722 = vadd.f32 %v1721, 1.0
    %v1723 = vrcp.pop %v1722
    %v1724 = vmul.f32 %v1722, %v1723
    %v1725 = vsub.f32 1.0, %v1724
    %v1726 = vmul.f32 %v1723, %v1725
    %v1727 = vadd.f32 %v1723, %v1726
    %vm1728 = vweird.f32 %v1722
    %vm1729 = vweird.f32 %v1723
    %vm1730 = vmor %vm1728, %vm1729
    %v1731 = vsel %vm1730, %v1723, %v1727
    %v1732 = vand.u32 2147483647, %v1722
    %vm1733 = vcmp.eq.f32.partialorder %v1732, 8.507059e+37
    %v1734 = vand.u32 %v1722, 2147483648
    %v1735 = vor.u32 1.1754944e-38, %v1734
    %v1736 = vsel %vm1733, %v1735, %v1731
    %v1737 = vmul.f32 1.0, %v1736
    %v1738 = vadd.f32 %v1656, %v1696
    %v1739 = vxor.u32 %v1738, 2147483648
    %v1740 = vmul.f32 %v1739, 1.442695
    %v1741 = vpow.pop %v1740
    %v1742 = vadd.f32 %v1741, 1.0
    %v1743 = vrcp.pop %v1742
    %v1744 = vmul.f32 %v1742, %v1743
    %v1745 = vsub.f32 1.0, %v1744
    %v1746 = vmul.f32 %v1743, %v1745
    %v1747 = vadd.f32 %v1743, %v1746
    %vm1748 = vweird.f32 %v1742
    %vm1749 = vweird.f32 %v1743
    %vm1750 = vmor %vm1748, %vm1749
    %v1751 = vsel %vm1750, %v1743, %v1747
    %v1752 = vand.u32 2147483647, %v1742
    %vm1753 = vcmp.eq.f32.partialorder %v1752, 8.507059e+37
    %v1754 = vand.u32 %v1742, 2147483648
    %v1755 = vor.u32 1.1754944e-38, %v1754
    %v1756 = vsel %vm1753, %v1755, %v1751
    %v1757 = vmul.f32 1.0, %v1756
    %v1758 = vadd.f32 %v1716, %v1541
    %v1759 = vmul.f32 %v1737, %v1758
    %v1760 = vadd.f32 %v1657, %v1759
    %v1761 = vtanh.pop %v1760
    %v1762 = vsub.f32 1.0, %v1757
    %v1763 = vmul.f32 %v1762, %v1761
    %v1764 = vmul.f32 %v1757, %v1653
    %v1765 = vadd.f32 %v1763, %v1764
    %1766 = vst [vmem:[#allocation4 + $0x8] sm:$0xff] %v1765
    %v1767 = vld [vmem:[#allocation2 + $0x30] sm:$0xff]
    %v1768 = vld [vmem:[#allocation2 + $0x38] sm:$0xff]
    %v1769 = vld [vmem:[#allocation2 + $0x40] sm:$0xff]
    %1770 = vmatpush.msra.mxu0 %v1373
    %1771 = vmatpush.msra.mxu0 %v1370
    %1772 = vmatpush.msra.mxu0 %v1367
    %1773 = vmatpush.msra.mxu0 %v1364
    %1774 = vmatpush.msra.mxu0 %v1361
    %1775 = vmatpush.msra.mxu0 %v1358
    %1776 = vmatpush.msra.mxu0 %v1355
    %1777 = vmatpush.msra.mxu0 %v1352
    %1778 = vmatpush.msra.mxu0 %v1349
    %1779 = vmatpush.msra.mxu0 %v1346
    %1780 = vmatpush.msra.mxu0 %v1343
    %1781 = vmatpush.msra.mxu0 %v1340
    %1782 = vmatpush.msra.mxu0 %v1337
    %1783 = vmatpush.msra.mxu0 %v1334
    %1784 = vmatpush.msra.mxu0 %v1331
    %1785 = vmatpush.msra.mxu0 %v1328
    %1786 = vmatmul.f32.gmra.mxu0 %v1765
    %v1787 = vpop.f32.mrf.mxu0
    %v1788 = vadd.f32 0.0, %v1787
    %1789 = vdwg.mxu0
    %1790 = vmatpush.msra.mxu0 %v1374
    %1791 = vmatpush.msra.mxu0 %v1371
    %1792 = vmatpush.msra.mxu0 %v1368
    %1793 = vmatpush.msra.mxu0 %v1365
    %1794 = vmatpush.msra.mxu0 %v1362
    %1795 = vmatpush.msra.mxu0 %v1359
    %1796 = vmatpush.msra.mxu0 %v1356
    %1797 = vmatpush.msra.mxu0 %v1353
    %1798 = vmatpush.msra.mxu0 %v1350
    %1799 = vmatpush.msra.mxu0 %v1347
    %1800 = vmatpush.msra.mxu0 %v1344
    %1801 = vmatpush.msra.mxu0 %v1341
    %1802 = vmatpush.msra.mxu0 %v1338
    %1803 = vmatpush.msra.mxu0 %v1335
    %1804 = vmatpush.msra.mxu0 %v1332
    %1805 = vmatpush.msra.mxu0 %v1329
    %1806 = vmatmul.f32.gmra.mxu0 %v1765
    %v1807 = vpop.f32.mrf.mxu0
    %v1808 = vadd.f32 0.0, %v1807
    %1809 = vdwg.mxu0
    %1810 = vmatpush.msra.mxu0 %v1375
    %1811 = vmatpush.msra.mxu0 %v1372
    %1812 = vmatpush.msra.mxu0 %v1369
    %1813 = vmatpush.msra.mxu0 %v1366
    %1814 = vmatpush.msra.mxu0 %v1363
    %1815 = vmatpush.msra.mxu0 %v1360
    %1816 = vmatpush.msra.mxu0 %v1357
    %1817 = vmatpush.msra.mxu0 %v1354
    %1818 = vmatpush.msra.mxu0 %v1351
    %1819 = vmatpush.msra.mxu0 %v1348
    %1820 = vmatpush.msra.mxu0 %v1345
    %1821 = vmatpush.msra.mxu0 %v1342
    %1822 = vmatpush.msra.mxu0 %v1339
    %1823 = vmatpush.msra.mxu0 %v1336
    %1824 = vmatpush.msra.mxu0 %v1333
    %1825 = vmatpush.msra.mxu0 %v1330
    %1826 = vmatmul.f32.gmra.mxu0 %v1765
    %v1827 = vpop.f32.mrf.mxu0
    %v1828 = vadd.f32 0.0, %v1827
    %1829 = vdwg.mxu0
    %v1830 = vadd.f32 %v1767, %v1788
    %v1831 = vxor.u32 %v1830, 2147483648
    %v1832 = vmul.f32 %v1831, 1.442695
    %v1833 = vpow.pop %v1832
    %v1834 = vadd.f32 %v1833, 1.0
    %v1835 = vrcp.pop %v1834
    %v1836 = vmul.f32 %v1834, %v1835
    %v1837 = vsub.f32 1.0, %v1836
    %v1838 = vmul.f32 %v1835, %v1837
    %v1839 = vadd.f32 %v1835, %v1838
    %vm1840 = vweird.f32 %v1834
    %vm1841 = vweird.f32 %v1835
    %vm1842 = vmor %vm1840, %vm1841
    %v1843 = vsel %vm1842, %v1835, %v1839
    %v1844 = vand.u32 2147483647, %v1834
    %vm1845 = vcmp.eq.f32.partialorder %v1844, 8.507059e+37
    %v1846 = vand.u32 %v1834, 2147483648
    %v1847 = vor.u32 1.1754944e-38, %v1846
    %v1848 = vsel %vm1845, %v1847, %v1843
    %v1849 = vmul.f32 1.0, %v1848
    %v1850 = vadd.f32 %v1768, %v1808
    %v1851 = vxor.u32 %v1850, 2147483648
    %v1852 = vmul.f32 %v1851, 1.442695
    %v1853 = vpow.pop %v1852
    %v1854 = vadd.f32 %v1853, 1.0
    %v1855 = vrcp.pop %v1854
    %v1856 = vmul.f32 %v1854, %v1855
    %v1857 = vsub.f32 1.0, %v1856
    %v1858 = vmul.f32 %v1855, %v1857
    %v1859 = vadd.f32 %v1855, %v1858
    %vm1860 = vweird.f32 %v1854
    %vm1861 = vweird.f32 %v1855
    %vm1862 = vmor %vm1860, %vm1861
    %v1863 = vsel %vm1862, %v1855, %v1859
    %v1864 = vand.u32 2147483647, %v1854
    %vm1865 = vcmp.eq.f32.partialorder %v1864, 8.507059e+37
    %v1866 = vand.u32 %v1854, 2147483648
    %v1867 = vor.u32 1.1754944e-38, %v1866
    %v1868 = vsel %vm1865, %v1867, %v1863
    %v1869 = vmul.f32 1.0, %v1868
    %v1870 = vadd.f32 %v1828, %v1541
    %v1871 = vmul.f32 %v1849, %v1870
    %v1872 = vadd.f32 %v1769, %v1871
    %v1873 = vtanh.pop %v1872
    %v1874 = vsub.f32 1.0, %v1869
    %v1875 = vmul.f32 %v1874, %v1873
    %v1876 = vmul.f32 %v1869, %v1765
    %v1877 = vadd.f32 %v1875, %v1876
    %1878 = vst [vmem:[#allocation4 + $0x10] sm:$0xff] %v1877
    %v1879 = vld [vmem:[#allocation2 + $0x48] sm:$0xff]
    %v1880 = vld [vmem:[#allocation2 + $0x50] sm:$0xff]
    %v1881 = vld [vmem:[#allocation2 + $0x58] sm:$0xff]
    %1882 = vmatpush.msra.mxu0 %v1373
    %1883 = vmatpush.msra.mxu0 %v1370
    %1884 = vmatpush.msra.mxu0 %v1367
    %1885 = vmatpush.msra.mxu0 %v1364
    %1886 = vmatpush.msra.mxu0 %v1361
    %1887 = vmatpush.msra.mxu0 %v1358
    %1888 = vmatpush.msra.mxu0 %v1355
    %1889 = vmatpush.msra.mxu0 %v1352
    %1890 = vmatpush.msra.mxu0 %v1349
    %1891 = vmatpush.msra.mxu0 %v1346
    %1892 = vmatpush.msra.mxu0 %v1343
    %1893 = vmatpush.msra.mxu0 %v1340
    %1894 = vmatpush.msra.mxu0 %v1337
    %1895 = vmatpush.msra.mxu0 %v1334
    %1896 = vmatpush.msra.mxu0 %v1331
    %1897 = vmatpush.msra.mxu0 %v1328
    %1898 = vmatmul.f32.gmra.mxu0 %v1877
    %v1899 = vpop.f32.mrf.mxu0
    %v1900 = vadd.f32 0.0, %v1899
    %1901 = vdwg.mxu0
    %1902 = vmatpush.msra.mxu0 %v1374
    %1903 = vmatpush.msra.mxu0 %v1371
    %1904 = vmatpush.msra.mxu0 %v1368
    %1905 = vmatpush.msra.mxu0 %v1365
    %1906 = vmatpush.msra.mxu0 %v1362
    %1907 = vmatpush.msra.mxu0 %v1359
    %1908 = vmatpush.msra.mxu0 %v1356
    %1909 = vmatpush.msra.mxu0 %v1353
    %1910 = vmatpush.msra.mxu0 %v1350
    %1911 = vmatpush.msra.mxu0 %v1347
    %1912 = vmatpush.msra.mxu0 %v1344
    %1913 = vmatpush.msra.mxu0 %v1341
    %1914 = vmatpush.msra.mxu0 %v1338
    %1915 = vmatpush.msra.mxu0 %v1335
    %1916 = vmatpush.msra.mxu0 %v1332
    %1917 = vmatpush.msra.mxu0 %v1329
    %1918 = vmatmul.f32.gmra.mxu0 %v1877
    %v1919 = vpop.f32.mrf.mxu0
    %v1920 = vadd.f32 0.0, %v1919
    %1921 = vdwg.mxu0
    %1922 = vmatpush.msra.mxu0 %v1375
    %1923 = vmatpush.msra.mxu0 %v1372
    %1924 = vmatpush.msra.mxu0 %v1369
    %1925 = vmatpush.msra.mxu0 %v1366
    %1926 = vmatpush.msra.mxu0 %v1363
    %1927 = vmatpush.msra.mxu0 %v1360
    %1928 = vmatpush.msra.mxu0 %v1357
    %1929 = vmatpush.msra.mxu0 %v1354
    %1930 = vmatpush.msra.mxu0 %v1351
    %1931 = vmatpush.msra.mxu0 %v1348
    %1932 = vmatpush.msra.mxu0 %v1345
    %1933 = vmatpush.msra.mxu0 %v1342
    %1934 = vmatpush.msra.mxu0 %v1339
    %1935 = vmatpush.msra.mxu0 %v1336
    %1936 = vmatpush.msra.mxu0 %v1333
    %1937 = vmatpush.msra.mxu0 %v1330
    %1938 = vmatmul.f32.gmra.mxu0 %v1877
    %v1939 = vpop.f32.mrf.mxu0
    %v1940 = vadd.f32 0.0, %v1939
    %1941 = vdwg.mxu0
    %v1942 = vadd.f32 %v1879, %v1900
    %v1943 = vxor.u32 %v1942, 2147483648
    %v1944 = vmul.f32 %v1943, 1.442695
    %v1945 = vpow.pop %v1944
    %v1946 = vadd.f32 %v1945, 1.0
    %v1947 = vrcp.pop %v1946
    %v1948 = vmul.f32 %v1946, %v1947
    %v1949 = vsub.f32 1.0, %v1948
    %v1950 = vmul.f32 %v1947, %v1949
    %v1951 = vadd.f32 %v1947, %v1950
    %vm1952 = vweird.f32 %v1946
    %vm1953 = vweird.f32 %v1947
    %vm1954 = vmor %vm1952, %vm1953
    %v1955 = vsel %vm1954, %v1947, %v1951
    %v1956 = vand.u32 2147483647, %v1946
    %vm1957 = vcmp.eq.f32.partialorder %v1956, 8.507059e+37
    %v1958 = vand.u32 %v1946, 2147483648
    %v1959 = vor.u32 1.1754944e-38, %v1958
    %v1960 = vsel %vm1957, %v1959, %v1955
    %v1961 = vmul.f32 1.0, %v1960
    %v1962 = vadd.f32 %v1880, %v1920
    %v1963 = vxor.u32 %v1962, 2147483648
    %v1964 = vmul.f32 %v1963, 1.442695
    %v1965 = vpow.pop %v1964
    %v1966 = vadd.f32 %v1965, 1.0
    %v1967 = vrcp.pop %v1966
    %v1968 = vmul.f32 %v1966, %v1967
    %v1969 = vsub.f32 1.0, %v1968
    %v1970 = vmul.f32 %v1967, %v1969
    %v1971 = vadd.f32 %v1967, %v1970
    %vm1972 = vweird.f32 %v1966
    %vm1973 = vweird.f32 %v1967
    %vm1974 = vmor %vm1972, %vm1973
    %v1975 = vsel %vm1974, %v1967, %v1971
    %v1976 = vand.u32 2147483647, %v1966
    %vm1977 = vcmp.eq.f32.partialorder %v1976, 8.507059e+37
    %v1978 = vand.u32 %v1966, 2147483648
    %v1979 = vor.u32 1.1754944e-38, %v1978
    %v1980 = vsel %vm1977, %v1979, %v1975
    %v1981 = vmul.f32 1.0, %v1980
    %v1982 = vadd.f32 %v1940, %v1541
    %v1983 = vmul.f32 %v1961, %v1982
    %v1984 = vadd.f32 %v1881, %v1983
    %v1985 = vtanh.pop %v1984
    %v1986 = vsub.f32 1.0, %v1981
    %v1987 = vmul.f32 %v1986, %v1985
    %v1988 = vmul.f32 %v1981, %v1877
    %v1989 = vadd.f32 %v1987, %v1988
    %1990 = vst [vmem:[#allocation4 + $0x18] sm:$0xff] %v1989
    %v1991 = vld [vmem:[#allocation2 + $0x60] sm:$0xff]
    %v1992 = vld [vmem:[#allocation2 + $0x68] sm:$0xff]
    %v1993 = vld [vmem:[#allocation2 + $0x70] sm:$0xff]
    %1994 = vmatpush.msra.mxu0 %v1373
    %1995 = vmatpush.msra.mxu0 %v1370
    %1996 = vmatpush.msra.mxu0 %v1367
    %1997 = vmatpush.msra.mxu0 %v1364
    %1998 = vmatpush.msra.mxu0 %v1361
    %1999 = vmatpush.msra.mxu0 %v1358
    %2000 = vmatpush.msra.mxu0 %v1355
    %2001 = vmatpush.msra.mxu0 %v1352
    %2002 = vmatpush.msra.mxu0 %v1349
    %2003 = vmatpush.msra.mxu0 %v1346
    %2004 = vmatpush.msra.mxu0 %v1343
    %2005 = vmatpush.msra.mxu0 %v1340
    %2006 = vmatpush.msra.mxu0 %v1337
    %2007 = vmatpush.msra.mxu0 %v1334
    %2008 = vmatpush.msra.mxu0 %v1331
    %2009 = vmatpush.msra.mxu0 %v1328
    %2010 = vmatmul.f32.gmra.mxu0 %v1989
    %v2011 = vpop.f32.mrf.mxu0
    %v2012 = vadd.f32 0.0, %v2011
    %2013 = vdwg.mxu0
    %2014 = vmatpush.msra.mxu0 %v1374
    %2015 = vmatpush.msra.mxu0 %v1371
    %2016 = vmatpush.msra.mxu0 %v1368
    %2017 = vmatpush.msra.mxu0 %v1365
    %2018 = vmatpush.msra.mxu0 %v1362
    %2019 = vmatpush.msra.mxu0 %v1359
    %2020 = vmatpush.msra.mxu0 %v1356
    %2021 = vmatpush.msra.mxu0 %v1353
    %2022 = vmatpush.msra.mxu0 %v1350
    %2023 = vmatpush.msra.mxu0 %v1347
    %2024 = vmatpush.msra.mxu0 %v1344
    %2025 = vmatpush.msra.mxu0 %v1341
    %2026 = vmatpush.msra.mxu0 %v1338
    %2027 = vmatpush.msra.mxu0 %v1335
    %2028 = vmatpush.msra.mxu0 %v1332
    %2029 = vmatpush.msra.mxu0 %v1329
    %2030 = vmatmul.f32.gmra.mxu0 %v1989
    %v2031 = vpop.f32.mrf.mxu0
    %v2032 = vadd.f32 0.0, %v2031
    %2033 = vdwg.mxu0
    %2034 = vmatpush.msra.mxu0 %v1375
    %2035 = vmatpush.msra.mxu0 %v1372
    %2036 = vmatpush.msra.mxu0 %v1369
    %2037 = vmatpush.msra.mxu0 %v1366
    %2038 = vmatpush.msra.mxu0 %v1363
    %2039 = vmatpush.msra.mxu0 %v1360
    %2040 = vmatpush.msra.mxu0 %v1357
    %2041 = vmatpush.msra.mxu0 %v1354
    %2042 = vmatpush.msra.mxu0 %v1351
    %2043 = vmatpush.msra.mxu0 %v1348
    %2044 = vmatpush.msra.mxu0 %v1345
    %2045 = vmatpush.msra.mxu0 %v1342
    %2046 = vmatpush.msra.mxu0 %v1339
    %2047 = vmatpush.msra.mxu0 %v1336
    %2048 = vmatpush.msra.mxu0 %v1333
    %2049 = vmatpush.msra.mxu0 %v1330
    %2050 = vmatmul.f32.gmra.mxu0 %v1989
    %v2051 = vpop.f32.mrf.mxu0
    %v2052 = vadd.f32 0.0, %v2051
    %2053 = vdwg.mxu0
    %v2054 = vadd.f32 %v1991, %v2012
    %v2055 = vxor.u32 %v2054, 2147483648
    %v2056 = vmul.f32 %v2055, 1.442695
    %v2057 = vpow.pop %v2056
    %v2058 = vadd.f32 %v2057, 1.0
    %v2059 = vrcp.pop %v2058
    %v2060 = vmul.f32 %v2058, %v2059
    %v2061 = vsub.f32 1.0, %v2060
    %v2062 = vmul.f32 %v2059, %v2061
    %v2063 = vadd.f32 %v2059, %v2062
    %vm2064 = vweird.f32 %v2058
    %vm2065 = vweird.f32 %v2059
    %vm2066 = vmor %vm2064, %vm2065
    %v2067 = vsel %vm2066, %v2059, %v2063
    %v2068 = vand.u32 2147483647, %v2058
    %vm2069 = vcmp.eq.f32.partialorder %v2068, 8.507059e+37
    %v2070 = vand.u32 %v2058, 2147483648
    %v2071 = vor.u32 1.1754944e-38, %v2070
    %v2072 = vsel %vm2069, %v2071, %v2067
    %v2073 = vmul.f32 1.0, %v2072
    %v2074 = vadd.f32 %v1992, %v2032
    %v2075 = vxor.u32 %v2074, 2147483648
    %v2076 = vmul.f32 %v2075, 1.442695
    %v2077 = vpow.pop %v2076
    %v2078 = vadd.f32 %v2077, 1.0
    %v2079 = vrcp.pop %v2078
    %v2080 = vmul.f32 %v2078, %v2079
    %v2081 = vsub.f32 1.0, %v2080
    %v2082 = vmul.f32 %v2079, %v2081
    %v2083 = vadd.f32 %v2079, %v2082
    %vm2084 = vweird.f32 %v2078
    %vm2085 = vweird.f32 %v2079
    %vm2086 = vmor %vm2084, %vm2085
    %v2087 = vsel %vm2086, %v2079, %v2083
    %v2088 = vand.u32 2147483647, %v2078
    %vm2089 = vcmp.eq.f32.partialorder %v2088, 8.507059e+37
    %v2090 = vand.u32 %v2078, 2147483648
    %v2091 = vor.u32 1.1754944e-38, %v2090
    %v2092 = vsel %vm2089, %v2091, %v2087
    %v2093 = vmul.f32 1.0, %v2092
    %v2094 = vadd.f32 %v2052, %v1541
    %v2095 = vmul.f32 %v2073, %v2094
    %v2096 = vadd.f32 %v1993, %v2095
    %v2097 = vtanh.pop %v2096
    %v2098 = vsub.f32 1.0, %v2093
    %v2099 = vmul.f32 %v2098, %v2097
    %v2100 = vmul.f32 %v2093, %v1989
    %v2101 = vadd.f32 %v2099, %v2100
    %2102 = vst [vmem:[#allocation4 + $0x20] sm:$0xff] %v2101
    %v2103 = vld [vmem:[#allocation2 + $0x78] sm:$0xff]
    %v2104 = vld [vmem:[#allocation2 + $0x80] sm:$0xff]
    %v2105 = vld [vmem:[#allocation2 + $0x88] sm:$0xff]
    %2106 = vmatpush.msra.mxu0 %v1373
    %2107 = vmatpush.msra.mxu0 %v1370
    %2108 = vmatpush.msra.mxu0 %v1367
    %2109 = vmatpush.msra.mxu0 %v1364
    %2110 = vmatpush.msra.mxu0 %v1361
    %2111 = vmatpush.msra.mxu0 %v1358
    %2112 = vmatpush.msra.mxu0 %v1355
    %2113 = vmatpush.msra.mxu0 %v1352
    %2114 = vmatpush.msra.mxu0 %v1349
    %2115 = vmatpush.msra.mxu0 %v1346
    %2116 = vmatpush.msra.mxu0 %v1343
    %2117 = vmatpush.msra.mxu0 %v1340
    %2118 = vmatpush.msra.mxu0 %v1337
    %2119 = vmatpush.msra.mxu0 %v1334
    %2120 = vmatpush.msra.mxu0 %v1331
    %2121 = vmatpush.msra.mxu0 %v1328
    %2122 = vmatmul.f32.gmra.mxu0 %v2101
    %v2123 = vpop.f32.mrf.mxu0
    %v2124 = vadd.f32 0.0, %v2123
    %2125 = vdwg.mxu0
    %2126 = vmatpush.msra.mxu0 %v1374
    %2127 = vmatpush.msra.mxu0 %v1371
    %2128 = vmatpush.msra.mxu0 %v1368
    %2129 = vmatpush.msra.mxu0 %v1365
    %2130 = vmatpush.msra.mxu0 %v1362
    %2131 = vmatpush.msra.mxu0 %v1359
    %2132 = vmatpush.msra.mxu0 %v1356
    %2133 = vmatpush.msra.mxu0 %v1353
    %2134 = vmatpush.msra.mxu0 %v1350
    %2135 = vmatpush.msra.mxu0 %v1347
    %2136 = vmatpush.msra.mxu0 %v1344
    %2137 = vmatpush.msra.mxu0 %v1341
    %2138 = vmatpush.msra.mxu0 %v1338
    %2139 = vmatpush.msra.mxu0 %v1335
    %2140 = vmatpush.msra.mxu0 %v1332
    %2141 = vmatpush.msra.mxu0 %v1329
    %2142 = vmatmul.f32.gmra.mxu0 %v2101
    %v2143 = vpop.f32.mrf.mxu0
    %v2144 = vadd.f32 0.0, %v2143
    %2145 = vdwg.mxu0
    %2146 = vmatpush.msra.mxu0 %v1375
    %2147 = vmatpush.msra.mxu0 %v1372
    %2148 = vmatpush.msra.mxu0 %v1369
    %2149 = vmatpush.msra.mxu0 %v1366
    %2150 = vmatpush.msra.mxu0 %v1363
    %2151 = vmatpush.msra.mxu0 %v1360
    %2152 = vmatpush.msra.mxu0 %v1357
    %2153 = vmatpush.msra.mxu0 %v1354
    %2154 = vmatpush.msra.mxu0 %v1351
    %2155 = vmatpush.msra.mxu0 %v1348
    %2156 = vmatpush.msra.mxu0 %v1345
    %2157 = vmatpush.msra.mxu0 %v1342
    %2158 = vmatpush.msra.mxu0 %v1339
    %2159 = vmatpush.msra.mxu0 %v1336
    %2160 = vmatpush.msra.mxu0 %v1333
    %2161 = vmatpush.msra.mxu0 %v1330
    %2162 = vmatmul.f32.gmra.mxu0 %v2101
    %v2163 = vpop.f32.mrf.mxu0
    %v2164 = vadd.f32 0.0, %v2163
    %2165 = vdwg.mxu0
    %v2166 = vadd.f32 %v2103, %v2124
    %v2167 = vxor.u32 %v2166, 2147483648
    %v2168 = vmul.f32 %v2167, 1.442695
    %v2169 = vpow.pop %v2168
    %v2170 = vadd.f32 %v2169, 1.0
    %v2171 = vrcp.pop %v2170
    %v2172 = vmul.f32 %v2170, %v2171
    %v2173 = vsub.f32 1.0, %v2172
    %v2174 = vmul.f32 %v2171, %v2173
    %v2175 = vadd.f32 %v2171, %v2174
    %vm2176 = vweird.f32 %v2170
    %vm2177 = vweird.f32 %v2171
    %vm2178 = vmor %vm2176, %vm2177
    %v2179 = vsel %vm2178, %v2171, %v2175
    %v2180 = vand.u32 2147483647, %v2170
    %vm2181 = vcmp.eq.f32.partialorder %v2180, 8.507059e+37
    %v2182 = vand.u32 %v2170, 2147483648
    %v2183 = vor.u32 1.1754944e-38, %v2182
    %v2184 = vsel %vm2181, %v2183, %v2179
    %v2185 = vmul.f32 1.0, %v2184
    %v2186 = vadd.f32 %v2104, %v2144
    %v2187 = vxor.u32 %v2186, 2147483648
    %v2188 = vmul.f32 %v2187, 1.442695
    %v2189 = vpow.pop %v2188
    %v2190 = vadd.f32 %v2189, 1.0
    %v2191 = vrcp.pop %v2190
    %v2192 = vmul.f32 %v2190, %v2191
    %v2193 = vsub.f32 1.0, %v2192
    %v2194 = vmul.f32 %v2191, %v2193
    %v2195 = vadd.f32 %v2191, %v2194
    %vm2196 = vweird.f32 %v2190
    %vm2197 = vweird.f32 %v2191
    %vm2198 = vmor %vm2196, %vm2197
    %v2199 = vsel %vm2198, %v2191, %v2195
    %v2200 = vand.u32 2147483647, %v2190
    %vm2201 = vcmp.eq.f32.partialorder %v2200, 8.507059e+37
    %v2202 = vand.u32 %v2190, 2147483648
    %v2203 = vor.u32 1.1754944e-38, %v2202
    %v2204 = vsel %vm2201, %v2203, %v2199
    %v2205 = vmul.f32 1.0, %v2204
    %v2206 = vadd.f32 %v2164, %v1541
    %v2207 = vmul.f32 %v2185, %v2206
    %v2208 = vadd.f32 %v2105, %v2207
    %v2209 = vtanh.pop %v2208
    %v2210 = vsub.f32 1.0, %v2205
    %v2211 = vmul.f32 %v2210, %v2209
    %v2212 = vmul.f32 %v2205, %v2101
    %v2213 = vadd.f32 %v2211, %v2212
    %2214 = vst [vmem:[#allocation4 + $0x28] sm:$0xff] %v2213
    %v2215 = vld [vmem:[#allocation2 + $0x90] sm:$0xff]
    %v2216 = vld [vmem:[#allocation2 + $0x98] sm:$0xff]
    %v2217 = vld [vmem:[#allocation2 + $0xa0] sm:$0xff]
    %2218 = vmatpush.msra.mxu0 %v1373
    %2219 = vmatpush.msra.mxu0 %v1370
    %2220 = vmatpush.msra.mxu0 %v1367
    %2221 = vmatpush.msra.mxu0 %v1364
    %2222 = vmatpush.msra.mxu0 %v1361
    %2223 = vmatpush.msra.mxu0 %v1358
    %2224 = vmatpush.msra.mxu0 %v1355
    %2225 = vmatpush.msra.mxu0 %v1352
    %2226 = vmatpush.msra.mxu0 %v1349
    %2227 = vmatpush.msra.mxu0 %v1346
    %2228 = vmatpush.msra.mxu0 %v1343
    %2229 = vmatpush.msra.mxu0 %v1340
    %2230 = vmatpush.msra.mxu0 %v1337
    %2231 = vmatpush.msra.mxu0 %v1334
    %2232 = vmatpush.msra.mxu0 %v1331
    %2233 = vmatpush.msra.mxu0 %v1328
    %2234 = vmatmul.f32.gmra.mxu0 %v2213
    %v2235 = vpop.f32.mrf.mxu0
    %v2236 = vadd.f32 0.0, %v2235
    %2237 = vdwg.mxu0
    %2238 = vmatpush.msra.mxu0 %v1374
    %2239 = vmatpush.msra.mxu0 %v1371
    %2240 = vmatpush.msra.mxu0 %v1368
    %2241 = vmatpush.msra.mxu0 %v1365
    %2242 = vmatpush.msra.mxu0 %v1362
    %2243 = vmatpush.msra.mxu0 %v1359
    %2244 = vmatpush.msra.mxu0 %v1356
    %2245 = vmatpush.msra.mxu0 %v1353
    %2246 = vmatpush.msra.mxu0 %v1350
    %2247 = vmatpush.msra.mxu0 %v1347
    %2248 = vmatpush.msra.mxu0 %v1344
    %2249 = vmatpush.msra.mxu0 %v1341
    %2250 = vmatpush.msra.mxu0 %v1338
    %2251 = vmatpush.msra.mxu0 %v1335
    %2252 = vmatpush.msra.mxu0 %v1332
    %2253 = vmatpush.msra.mxu0 %v1329
    %2254 = vmatmul.f32.gmra.mxu0 %v2213
    %v2255 = vpop.f32.mrf.mxu0
    %v2256 = vadd.f32 0.0, %v2255
    %2257 = vdwg.mxu0
    %2258 = vmatpush.msra.mxu0 %v1375
    %2259 = vmatpush.msra.mxu0 %v1372
    %2260 = vmatpush.msra.mxu0 %v1369
    %2261 = vmatpush.msra.mxu0 %v1366
    %2262 = vmatpush.msra.mxu0 %v1363
    %2263 = vmatpush.msra.mxu0 %v1360
    %2264 = vmatpush.msra.mxu0 %v1357
    %2265 = vmatpush.msra.mxu0 %v1354
    %2266 = vmatpush.msra.mxu0 %v1351
    %2267 = vmatpush.msra.mxu0 %v1348
    %2268 = vmatpush.msra.mxu0 %v1345
    %2269 = vmatpush.msra.mxu0 %v1342
    %2270 = vmatpush.msra.mxu0 %v1339
    %2271 = vmatpush.msra.mxu0 %v1336
    %2272 = vmatpush.msra.mxu0 %v1333
    %2273 = vmatpush.msra.mxu0 %v1330
    %2274 = vmatmul.f32.gmra.mxu0 %v2213
    %v2275 = vpop.f32.mrf.mxu0
    %v2276 = vadd.f32 0.0, %v2275
    %2277 = vdwg.mxu0
    %v2278 = vadd.f32 %v2215, %v2236
    %v2279 = vxor.u32 %v2278, 2147483648
    %v2280 = vmul.f32 %v2279, 1.442695
    %v2281 = vpow.pop %v2280
    %v2282 = vadd.f32 %v2281, 1.0
    %v2283 = vrcp.pop %v2282
    %v2284 = vmul.f32 %v2282, %v2283
    %v2285 = vsub.f32 1.0, %v2284
    %v2286 = vmul.f32 %v2283, %v2285
    %v2287 = vadd.f32 %v2283, %v2286
    %vm2288 = vweird.f32 %v2282
    %vm2289 = vweird.f32 %v2283
    %vm2290 = vmor %vm2288, %vm2289
    %v2291 = vsel %vm2290, %v2283, %v2287
    %v2292 = vand.u32 2147483647, %v2282
    %vm2293 = vcmp.eq.f32.partialorder %v2292, 8.507059e+37
    %v2294 = vand.u32 %v2282, 2147483648
    %v2295 = vor.u32 1.1754944e-38, %v2294
    %v2296 = vsel %vm2293, %v2295, %v2291
    %v2297 = vmul.f32 1.0, %v2296
    %v2298 = vadd.f32 %v2216, %v2256
    %v2299 = vxor.u32 %v2298, 2147483648
    %v2300 = vmul.f32 %v2299, 1.442695
    %v2301 = vpow.pop %v2300
    %v2302 = vadd.f32 %v2301, 1.0
    %v2303 = vrcp.pop %v2302
    %v2304 = vmul.f32 %v2302, %v2303
    %v2305 = vsub.f32 1.0, %v2304
    %v2306 = vmul.f32 %v2303, %v2305
    %v2307 = vadd.f32 %v2303, %v2306
    %vm2308 = vweird.f32 %v2302
    %vm2309 = vweird.f32 %v2303
    %vm2310 = vmor %vm2308, %vm2309
    %v2311 = vsel %vm2310, %v2303, %v2307
    %v2312 = vand.u32 2147483647, %v2302
    %vm2313 = vcmp.eq.f32.partialorder %v2312, 8.507059e+37
    %v2314 = vand.u32 %v2302, 2147483648
    %v2315 = vor.u32 1.1754944e-38, %v2314
    %v2316 = vsel %vm2313, %v2315, %v2311
    %v2317 = vmul.f32 1.0, %v2316
    %v2318 = vadd.f32 %v2276, %v1541
    %v2319 = vmul.f32 %v2297, %v2318
    %v2320 = vadd.f32 %v2217, %v2319
    %v2321 = vtanh.pop %v2320
    %v2322 = vsub.f32 1.0, %v2317
    %v2323 = vmul.f32 %v2322, %v2321
    %v2324 = vmul.f32 %v2317, %v2213
    %v2325 = vadd.f32 %v2323, %v2324
    %2326 = vst [vmem:[#allocation4 + $0x30] sm:$0xff] %v2325
    %v2327 = vld [vmem:[#allocation2 + $0xa8] sm:$0xff]
    %v2328 = vld [vmem:[#allocation2 + $0xb0] sm:$0xff]
    %v2329 = vld [vmem:[#allocation2 + $0xb8] sm:$0xff]
    %2330 = vmatpush.msra.mxu0 %v1373
    %2331 = vmatpush.msra.mxu0 %v1370
    %2332 = vmatpush.msra.mxu0 %v1367
    %2333 = vmatpush.msra.mxu0 %v1364
    %2334 = vmatpush.msra.mxu0 %v1361
    %2335 = vmatpush.msra.mxu0 %v1358
    %2336 = vmatpush.msra.mxu0 %v1355
    %2337 = vmatpush.msra.mxu0 %v1352
    %2338 = vmatpush.msra.mxu0 %v1349
    %2339 = vmatpush.msra.mxu0 %v1346
    %2340 = vmatpush.msra.mxu0 %v1343
    %2341 = vmatpush.msra.mxu0 %v1340
    %2342 = vmatpush.msra.mxu0 %v1337
    %2343 = vmatpush.msra.mxu0 %v1334
    %2344 = vmatpush.msra.mxu0 %v1331
    %2345 = vmatpush.msra.mxu0 %v1328
    %2346 = vmatmul.f32.gmra.mxu0 %v2325
    %v2347 = vpop.f32.mrf.mxu0
    %v2348 = vadd.f32 0.0, %v2347
    %2349 = vdwg.mxu0
    %2350 = vmatpush.msra.mxu0 %v1374
    %2351 = vmatpush.msra.mxu0 %v1371
    %2352 = vmatpush.msra.mxu0 %v1368
    %2353 = vmatpush.msra.mxu0 %v1365
    %2354 = vmatpush.msra.mxu0 %v1362
    %2355 = vmatpush.msra.mxu0 %v1359
    %2356 = vmatpush.msra.mxu0 %v1356
    %2357 = vmatpush.msra.mxu0 %v1353
    %2358 = vmatpush.msra.mxu0 %v1350
    %2359 = vmatpush.msra.mxu0 %v1347
    %2360 = vmatpush.msra.mxu0 %v1344
    %2361 = vmatpush.msra.mxu0 %v1341
    %2362 = vmatpush.msra.mxu0 %v1338
    %2363 = vmatpush.msra.mxu0 %v1335
    %2364 = vmatpush.msra.mxu0 %v1332
    %2365 = vmatpush.msra.mxu0 %v1329
    %2366 = vmatmul.f32.gmra.mxu0 %v2325
    %v2367 = vpop.f32.mrf.mxu0
    %v2368 = vadd.f32 0.0, %v2367
    %2369 = vdwg.mxu0
    %2370 = vmatpush.msra.mxu0 %v1375
    %2371 = vmatpush.msra.mxu0 %v1372
    %2372 = vmatpush.msra.mxu0 %v1369
    %2373 = vmatpush.msra.mxu0 %v1366
    %2374 = vmatpush.msra.mxu0 %v1363
    %2375 = vmatpush.msra.mxu0 %v1360
    %2376 = vmatpush.msra.mxu0 %v1357
    %2377 = vmatpush.msra.mxu0 %v1354
    %2378 = vmatpush.msra.mxu0 %v1351
    %2379 = vmatpush.msra.mxu0 %v1348
    %2380 = vmatpush.msra.mxu0 %v1345
    %2381 = vmatpush.msra.mxu0 %v1342
    %2382 = vmatpush.msra.mxu0 %v1339
    %2383 = vmatpush.msra.mxu0 %v1336
    %2384 = vmatpush.msra.mxu0 %v1333
    %2385 = vmatpush.msra.mxu0 %v1330
    %2386 = vmatmul.f32.gmra.mxu0 %v2325
    %v2387 = vpop.f32.mrf.mxu0
    %v2388 = vadd.f32 0.0, %v2387
    %2389 = vdwg.mxu0
    %v2390 = vadd.f32 %v2327, %v2348
    %v2391 = vxor.u32 %v2390, 2147483648
    %v2392 = vmul.f32 %v2391, 1.442695
    %v2393 = vpow.pop %v2392
    %v2394 = vadd.f32 %v2393, 1.0
    %v2395 = vrcp.pop %v2394
    %v2396 = vmul.f32 %v2394, %v2395
    %v2397 = vsub.f32 1.0, %v2396
    %v2398 = vmul.f32 %v2395, %v2397
    %v2399 = vadd.f32 %v2395, %v2398
    %vm2400 = vweird.f32 %v2394
    %vm2401 = vweird.f32 %v2395
    %vm2402 = vmor %vm2400, %vm2401
    %v2403 = vsel %vm2402, %v2395, %v2399
    %v2404 = vand.u32 2147483647, %v2394
    %vm2405 = vcmp.eq.f32.partialorder %v2404, 8.507059e+37
    %v2406 = vand.u32 %v2394, 2147483648
    %v2407 = vor.u32 1.1754944e-38, %v2406
    %v2408 = vsel %vm2405, %v2407, %v2403
    %v2409 = vmul.f32 1.0, %v2408
    %v2410 = vadd.f32 %v2328, %v2368
    %v2411 = vxor.u32 %v2410, 2147483648
    %v2412 = vmul.f32 %v2411, 1.442695
    %v2413 = vpow.pop %v2412
    %v2414 = vadd.f32 %v2413, 1.0
    %v2415 = vrcp.pop %v2414
    %v2416 = vmul.f32 %v2414, %v2415
    %v2417 = vsub.f32 1.0, %v2416
    %v2418 = vmul.f32 %v2415, %v2417
    %v2419 = vadd.f32 %v2415, %v2418
    %vm2420 = vweird.f32 %v2414
    %vm2421 = vweird.f32 %v2415
    %vm2422 = vmor %vm2420, %vm2421
    %v2423 = vsel %vm2422, %v2415, %v2419
    %v2424 = vand.u32 2147483647, %v2414
    %vm2425 = vcmp.eq.f32.partialorder %v2424, 8.507059e+37
    %v2426 = vand.u32 %v2414, 2147483648
    %v2427 = vor.u32 1.1754944e-38, %v2426
    %v2428 = vsel %vm2425, %v2427, %v2423
    %v2429 = vmul.f32 1.0, %v2428
    %v2430 = vadd.f32 %v2388, %v1541
    %v2431 = vmul.f32 %v2409, %v2430
    %v2432 = vadd.f32 %v2329, %v2431
    %v2433 = vtanh.pop %v2432
    %v2434 = vsub.f32 1.0, %v2429
    %v2435 = vmul.f32 %v2434, %v2433
    %v2436 = vmul.f32 %v2429, %v2325
    %v2437 = vadd.f32 %v2435, %v2436
    %2438 = vst [vmem:[#allocation4 + $0x38] sm:$0xff] %v2437
    %s2439 = scalar_lea.vmem [#allocation15], 8
    %2440 = vst [vmem:[%s2439] sm:$0xff] %v2437
    %v2441 = vld [vmem:[#allocation4] sm:$0xff]
    %v2442 = vld [vmem:[#allocation4 + $0x8] sm:$0xff]
    %v2443 = vld [vmem:[#allocation4 + $0x10] sm:$0xff]
    %v2444 = vld [vmem:[#allocation4 + $0x18] sm:$0xff]
    %v2445 = vld [vmem:[#allocation4 + $0x20] sm:$0xff]
    %v2446 = vld [vmem:[#allocation4 + $0x28] sm:$0xff]
    %v2447 = vld [vmem:[#allocation4 + $0x30] sm:$0xff]
    %v2448 = vld [vmem:[#allocation4 + $0x38] sm:$0xff]
    %v2449 = vld [vmem:[#allocation11] sm:$0xff]
    %v2450 = vld [vmem:[#allocation11 + $0x8] sm:$0xff]
    %v2451 = vld [vmem:[#allocation11 + $0x10] sm:$0xff]
    %v2452 = vld [vmem:[#allocation11 + $0x18] sm:$0xff]
    %v2453 = vld [vmem:[#allocation11 + $0x20] sm:$0xff]
    %v2454 = vld [vmem:[#allocation11 + $0x28] sm:$0xff]
    %v2455 = vld [vmem:[#allocation11 + $0x30] sm:$0xff]
    %v2456 = vld [vmem:[#allocation11 + $0x38] sm:$0xff]
    %v2457 = vld [vmem:[#allocation11 + $0x40] sm:$0xff]
    %v2458 = vld [vmem:[#allocation11 + $0x48] sm:$0xff]
    %v2459 = vld [vmem:[#allocation11 + $0x50] sm:$0xff]
    %v2460 = vld [vmem:[#allocation11 + $0x58] sm:$0xff]
    %v2461 = vld [vmem:[#allocation11 + $0x60] sm:$0xff]
    %v2462 = vld [vmem:[#allocation11 + $0x68] sm:$0xff]
    %v2463 = vld [vmem:[#allocation11 + $0x70] sm:$0xff]
    %v2464 = vld [vmem:[#allocation11 + $0x78] sm:$0xff]
    %v2465 = vld [vmem:[%s10] sm:$0x1]
    %v2467 = vperm.slane %v2465, 0
    %2469 = vmatpush.msra.mxu0 %v2464
    %2470 = vmatpush.msra.mxu0 %v2463
    %2471 = vmatpush.msra.mxu0 %v2462
    %2472 = vmatpush.msra.mxu0 %v2461
    %2473 = vmatpush.msra.mxu0 %v2460
    %2474 = vmatpush.msra.mxu0 %v2459
    %2475 = vmatpush.msra.mxu0 %v2458
    %2476 = vmatpush.msra.mxu0 %v2457
    %2477 = vmatpush.msra.mxu0 %v2456
    %2478 = vmatpush.msra.mxu0 %v2455
    %2479 = vmatpush.msra.mxu0 %v2454
    %2480 = vmatpush.msra.mxu0 %v2453
    %2481 = vmatpush.msra.mxu0 %v2452
    %2482 = vmatpush.msra.mxu0 %v2451
    %2483 = vmatpush.msra.mxu0 %v2450
    %2484 = vmatpush.msra.mxu0 %v2449
    %2485 = vmatmul.f32.gmra.mxu0 %v2441
    %v2486 = vpop.f32.mrf.mxu0
    %v2487 = vadd.f32 %v2467, %v2486
    %2488 = vmatmul.f32.gmra.mxu0 %v2442
    %v2489 = vpop.f32.mrf.mxu0
    %v2490 = vadd.f32 %v2467, %v2489
    %2491 = vmatmul.f32.gmra.mxu0 %v2443
    %v2492 = vpop.f32.mrf.mxu0
    %v2493 = vadd.f32 %v2467, %v2492
    %2494 = vmatmul.f32.gmra.mxu0 %v2444
    %v2495 = vpop.f32.mrf.mxu0
    %v2496 = vadd.f32 %v2467, %v2495
    %2497 = vmatmul.f32.gmra.mxu0 %v2445
    %v2498 = vpop.f32.mrf.mxu0
    %v2499 = vadd.f32 %v2467, %v2498
    %2500 = vmatmul.f32.gmra.mxu0 %v2446
    %v2501 = vpop.f32.mrf.mxu0
    %v2502 = vadd.f32 %v2467, %v2501
    %2503 = vmatmul.f32.gmra.mxu0 %v2447
    %v2504 = vpop.f32.mrf.mxu0
    %v2505 = vadd.f32 %v2467, %v2504
    %2506 = vmatmul.f32.gmra.mxu0 %v2448
    %v2507 = vpop.f32.mrf.mxu0
    %v2508 = vadd.f32 %v2467, %v2507
    %2509 = vdwg.mxu0
    %v2510 = vmax.f32 %v2487, 0.0
    %v2511 = vmax.f32 %v2490, 0.0
    %v2512 = vmax.f32 %v2493, 0.0
    %v2513 = vmax.f32 %v2496, 0.0
    %v2514 = vmax.f32 %v2499, 0.0
    %v2515 = vmax.f32 %v2502, 0.0
    %v2516 = vmax.f32 %v2505, 0.0
    %v2517 = vmax.f32 %v2508, 0.0
    %v2518 = vld [vmem:[#allocation13] sm:$0xff]
    %v2519 = vld [vmem:[#allocation13 + $0x8] sm:$0xff]
    %v2520 = vld [vmem:[#allocation13 + $0x10] sm:$0xff]
    %v2521 = vld [vmem:[#allocation13 + $0x18] sm:$0xff]
    %v2522 = vld [vmem:[#allocation13 + $0x20] sm:$0xff]
    %v2523 = vld [vmem:[#allocation13 + $0x28] sm:$0xff]
    %v2524 = vld [vmem:[#allocation13 + $0x30] sm:$0xff]
    %v2525 = vld [vmem:[#allocation13 + $0x38] sm:$0xff]
    %v2526 = vld [vmem:[#allocation13 + $0x40] sm:$0xff]
    %v2527 = vld [vmem:[#allocation13 + $0x48] sm:$0xff]
    %v2528 = vld [vmem:[#allocation13 + $0x50] sm:$0xff]
    %v2529 = vld [vmem:[#allocation13 + $0x58] sm:$0xff]
    %v2530 = vld [vmem:[#allocation13 + $0x60] sm:$0xff]
    %v2531 = vld [vmem:[#allocation13 + $0x68] sm:$0xff]
    %v2532 = vld [vmem:[#allocation13 + $0x70] sm:$0xff]
    %v2533 = vld [vmem:[#allocation13 + $0x78] sm:$0xff]
    %v2534 = vld [vmem:[%s12] sm:$0x1]
    %v2536 = vperm.slane %v2534, 0
    %2538 = vmatpush.msra.mxu0 %v2533
    %2539 = vmatpush.msra.mxu0 %v2532
    %2540 = vmatpush.msra.mxu0 %v2531
    %2541 = vmatpush.msra.mxu0 %v2530
    %2542 = vmatpush.msra.mxu0 %v2529
    %2543 = vmatpush.msra.mxu0 %v2528
    %2544 = vmatpush.msra.mxu0 %v2527
    %2545 = vmatpush.msra.mxu0 %v2526
    %2546 = vmatpush.msra.mxu0 %v2525
    %2547 = vmatpush.msra.mxu0 %v2524
    %2548 = vmatpush.msra.mxu0 %v2523
    %2549 = vmatpush.msra.mxu0 %v2522
    %2550 = vmatpush.msra.mxu0 %v2521
    %2551 = vmatpush.msra.mxu0 %v2520
    %2552 = vmatpush.msra.mxu0 %v2519
    %2553 = vmatpush.msra.mxu0 %v2518
    %2554 = vmatmul.f32.gmra.mxu0 %v2510
    %v2555 = vpop.f32.mrf.mxu0
    %v2556 = vadd.f32 %v2536, %v2555
    %2557 = vmatmul.f32.gmra.mxu0 %v2511
    %v2558 = vpop.f32.mrf.mxu0
    %v2559 = vadd.f32 %v2536, %v2558
    %2560 = vmatmul.f32.gmra.mxu0 %v2512
    %v2561 = vpop.f32.mrf.mxu0
    %v2562 = vadd.f32 %v2536, %v2561
    %2563 = vmatmul.f32.gmra.mxu0 %v2513
    %v2564 = vpop.f32.mrf.mxu0
    %v2565 = vadd.f32 %v2536, %v2564
    %2566 = vmatmul.f32.gmra.mxu0 %v2514
    %v2567 = vpop.f32.mrf.mxu0
    %v2568 = vadd.f32 %v2536, %v2567
    %2569 = vmatmul.f32.gmra.mxu0 %v2515
    %v2570 = vpop.f32.mrf.mxu0
    %v2571 = vadd.f32 %v2536, %v2570
    %2572 = vmatmul.f32.gmra.mxu0 %v2516
    %v2573 = vpop.f32.mrf.mxu0
    %v2574 = vadd.f32 %v2536, %v2573
    %2575 = vmatmul.f32.gmra.mxu0 %v2517
    %v2576 = vpop.f32.mrf.mxu0
    %v2577 = vadd.f32 %v2536, %v2576
    %2578 = vdwg.mxu0
    %v2579 = vlaneseq
    %v2580 = vand.u32 %v2579, 127
    %vm2581 = vcmp.ge.s32.totalorder %v2580, 15
    %vm2582 = vcmp.lt.s32.totalorder %v2580, 21
    %vm2583 = vmand %vm2581, %vm2582
    %v2584 = vmax.f32 %v2556, 0.1
    %v2585 = vmax.f32 %v2559, 0.1
    %v2586 = vmax.f32 %v2562, 0.1
    %v2587 = vmax.f32 %v2565, 0.1
    %v2588 = vmax.f32 %v2568, 0.1
    %v2589 = vmax.f32 %v2571, 0.1
    %v2590 = vmax.f32 %v2574, 0.1
    %v2591 = vmax.f32 %v2577, 0.1
    %v2592 = vmin.f32 %v2584, 10.0
    %v2593 = vmin.f32 %v2585, 10.0
    %v2594 = vmin.f32 %v2586, 10.0
    %v2595 = vmin.f32 %v2587, 10.0
    %v2596 = vmin.f32 %v2588, 10.0
    %v2597 = vmin.f32 %v2589, 10.0
    %v2598 = vmin.f32 %v2590, 10.0
    %v2599 = vmin.f32 %v2591, 10.0
    %v2600 = vsel %vm2583, %v2592, %v2556
    %v2601 = vsel %vm2583, %v2593, %v2559
    %v2602 = vsel %vm2583, %v2594, %v2562
    %v2603 = vsel %vm2583, %v2595, %v2565
    %v2604 = vsel %vm2583, %v2596, %v2568
    %v2605 = vsel %vm2583, %v2597, %v2571
    %v2606 = vsel %vm2583, %v2598, %v2574
    %v2607 = vsel %vm2583, %v2599, %v2577
    %2608 = vst [vmem:[#allocation14] sm:$0xff] %v2600
    %2609 = vst [vmem:[#allocation14 + $0x8] sm:$0xff] %v2601
    %2610 = vst [vmem:[#allocation14 + $0x10] sm:$0xff] %v2602
    %2611 = vst [vmem:[#allocation14 + $0x18] sm:$0xff] %v2603
    %2612 = vst [vmem:[#allocation14 + $0x20] sm:$0xff] %v2604
    %2613 = vst [vmem:[#allocation14 + $0x28] sm:$0xff] %v2605
    %2614 = vst [vmem:[#allocation14 + $0x30] sm:$0xff] %v2606
    %2615 = vst [vmem:[#allocation14 + $0x38] sm:$0xff] %v2607
    // Predicated region
    $region74: #{tpu_custom_call.1} parent=1 // pred_check
      _
    $region75: #{tpu_custom_call.1} parent=1 // pred_check_branch
      %2617 = sbr.rel (0) target = $region77
    $region76: #{tpu_custom_call.1} parent=1 // pred_region
      %2619 = vsyncadd [#allocation7], 0
      %s2620 = sshll.u32 [#allocation14], 4
      %s2621 = int_to_ptr.vmem [resolvable:$true] %s2620
      %s2622 = sshll.u32 %s13, 4
      %s2623 = int_to_ptr.hbm [resolvable:$true] %s2622
      %2628 = dma.vmem_to_hbm [thread:$0]  %s2621, 1024, %s2623, [#allocation7], 128, 128, 8
    $region77: #{tpu_custom_call.1} parent=1 // pred_fallthru
      _
    // Predicated region
    $region78: #{tpu_custom_call.1} parent=1 // pred_check
      _
    $region79: #{tpu_custom_call.1} parent=1 // pred_check_branch
      %2630 = sbr.rel (0) target = $region81
    $region80: #{tpu_custom_call.1} parent=1 // pred_region
      %2632 = vsyncadd [#allocation16], 0
      %s2633 = sshll.u32 [#allocation15], 4
      %s2634 = int_to_ptr.vmem [resolvable:$true] %s2633
      %s2635 = sshll.u32 %s14, 4
      %s2636 = int_to_ptr.hbm [resolvable:$true] %s2635
      %2641 = dma.vmem_to_hbm [thread:$0]  %s2634, 256, %s2636, [#allocation16], 128, 128, 8
    $region81: #{tpu_custom_call.1} parent=1 // pred_fallthru
      _
    // Predicated region
    $region82: #{tpu_custom_call.1} parent=1 // pred_check
      _
    $region83: #{tpu_custom_call.1} parent=1 // pred_check_branch
      %2643 = sbr.rel (0) target = $region85
    $region84: #{tpu_custom_call.1} parent=1 // pred_region
      %2645 = dma.done [#allocation7], 1024
    $region85: #{tpu_custom_call.1} parent=1 // pred_fallthru
      _
    // Predicated region
    $region86: #{tpu_custom_call.1} parent=1 // pred_check
      _
    $region87: #{tpu_custom_call.1} parent=1 // pred_check_branch
      %2647 = sbr.rel (0) target = $region89
    $region88: #{tpu_custom_call.1} parent=1 // pred_region
      %2649 = dma.done [#allocation16], 256
    $region89: #{tpu_custom_call.1} parent=1 // pred_fallthru
      _
    %2650 = vsyncpa [#allocation6], 1
    %2651 = vsyncpa [#allocation9], 1
    %2652 = vsyncpa [#allocation12], 1
    %2653 = vsyncpa [#allocation7], 1
    %2654 = vsyncpa [#allocation16], 1

</llo_original>
